<compile_context>
chip_gen: v5e
topology: v5e:2x2
jax: 0.10.0
libtpu: 0.0.40
codegen_flags: <defaults>
</compile_context>

<pallas_src>
from functools import partial

import numpy as np
import jax
import jax.numpy as jnp
from jax.experimental import pallas as pl
from jax.experimental.pallas import tpu as pltpu

EPS = 1e-5
QV_PAD = 128            # lane-padded width for the (.., 3) Qv / Qo outputs
VMEM_LIMIT = 32 * 1024 * 1024


# ----------------------------- tiling heuristics ----------------------------

def pick_batch_block(B, nprior, target_rows=512):
    """Largest divisor bB of B with bB*nprior <= target_rows (MXU M fill)."""
    best = 1
    for cand in range(1, B + 1):
        if B % cand != 0:
            continue
        if cand == 1 or cand * nprior <= target_rows:
            best = cand
    return best


def pick_point_tile(npoint, max_tile=256):
    """npoint tile (multiple of 8, divisor of npoint) bounding kernel B's working set."""
    if npoint <= max_tile:
        return npoint
    for cand in range(max_tile, 7, -1):
        if cand % 8 == 0 and npoint % cand == 0:
            return cand
    return npoint


# ----------------------------- Pallas kernels ------------------------------

def deform_prior_kernel(prior_ref, g1_ref,
                        w1p_ref, w2_ref, b2_ref, w3_ref, b3_ref,
                        newprior_ref):
    """deform_mlp1 + residual ReLU, batch-packed.
    prior_ref : (bB*nprior, 128) bf16 (channels-last, flattened batches)
    g1_ref    : (bB, 1, 384) f32 hoisted row = [pts_g|rgb_g]@W1g + b1 (per batch)."""
    bB = g1_ref.shape[0]
    M = prior_ref.shape[0]
    nprior = M // bB

    x = prior_ref[...]                                                # bf16 (M,128)
    g1 = g1_ref[...]                                                  # f32 (bB,1,384)
    h = jnp.dot(x, w1p_ref[...], preferred_element_type=jnp.float32)  # (M,384)
    # per-sub-batch hoisted global row added via static (8-aligned) slices
    if bB == 1:
        h = jnp.maximum(h + g1[0], 0.0)
    else:
        parts = [jnp.maximum(h[b * nprior:(b + 1) * nprior, :] + g1[b], 0.0)
                 for b in range(bB)]
        h = jnp.concatenate(parts, axis=0)                            # (M,384)
    h = jnp.maximum(jnp.dot(h.astype(jnp.bfloat16), w2_ref[...],
                            preferred_element_type=jnp.float32) + b2_ref[...], 0.0)
    h = jnp.dot(h.astype(jnp.bfloat16), w3_ref[...],
                preferred_element_type=jnp.float32) + b3_ref[...]     # (M,128)
    newprior_ref[...] = jnp.maximum(x.astype(jnp.float32) + h,
                                    0.0).astype(newprior_ref.dtype)   # bf16 out


def atten_deform_kernel(bidx_ref, cidx_ref,
                        ptsrgb_ref, npj_ref, npi_ref, a1_ref,
                        aw1g_ref, aw2_ref, ab2_ref, aw3_ref, ab3_ref,
                        dw1_ref, db1_ref, dw2_ref, db2_ref, dw3_ref, db3_ref,
                        att_ref, res_ref, qv_ref, rhs_ref):
    """Fused atten_mlp (class-sliced) + deform_mlp2 (class-sliced) + softmax + bmm's.
    Grid = (index entry i, npoint tile t).  Index selection is in the index_maps.
      ptsrgb_ref : (TP, 256) bf16   pts|rgb tile of batch j = index[i]//nclass
      npj_ref    : (nprior, 128) bf16 updated prior of batch j (Qv path)
      npi_ref    : (nprior, 128) bf16 updated prior of batch i (new_prior bmm)
      a1_ref     : (1, 384) f32 hoisted row = prior_global_j @ W1p + b1
      rhs_ref    : (nprior, 256) bf16 VMEM scratch = [new_prior_i | Qv_pad]."""
    del bidx_ref, cidx_ref                      # consumed by the index_maps only
    t = pl.program_id(1)

    # ---- once per output batch (first npoint tile): deform_mlp2 + bmm RHS ----
    @pl.when(t == 0)
    def _():
        npj = npj_ref[...]                                            # bf16
        gq = jnp.maximum(jnp.dot(npj, dw1_ref[...],
                                 preferred_element_type=jnp.float32) + db1_ref[...], 0.0)
        gq = jnp.maximum(jnp.dot(gq.astype(jnp.bfloat16), dw2_ref[...],
                                 preferred_element_type=jnp.float32) + db2_ref[...], 0.0)
        qv_pad = jnp.dot(gq.astype(jnp.bfloat16), dw3_ref[...],
                         preferred_element_type=jnp.float32) + db3_ref[...]  # (nprior,QV_PAD)
        qv_ref[...] = qv_pad
        rhs_ref[:, :128] = npi_ref[...]                               # bf16 new_prior_i
        rhs_ref[:, 128:] = qv_pad.astype(jnp.bfloat16)                # bf16 Qv_pad

    # ---- atten_mlp on this npoint tile (class-sliced last layer) ----
    x = ptsrgb_ref[...]                                               # bf16 (TP,256)
    h = jnp.dot(x, aw1g_ref[...], preferred_element_type=jnp.float32) + a1_ref[...]
    h = jnp.maximum(h, 0.0)
    h = jnp.maximum(jnp.dot(h.astype(jnp.bfloat16), aw2_ref[...],
                            preferred_element_type=jnp.float32) + ab2_ref[...], 0.0)
    att = jnp.dot(h.astype(jnp.bfloat16), aw3_ref[...],
                  preferred_element_type=jnp.float32) + ab3_ref[...]  # (TP,nprior) f32
    att_ref[...] = att.astype(att_ref.dtype)                          # bf16 logits out

    # ---- softmax over nprior + fused bmm against [new_prior_i | Qv_pad] ----
    m = jnp.max(att, axis=-1, keepdims=True)
    e = jnp.exp(att - m)
    a = e * pl.reciprocal(jnp.sum(e, axis=-1, keepdims=True), approx=True)
    res_ref[...] = jnp.dot(a.astype(jnp.bfloat16), rhs_ref[...],
                           preferred_element_type=jnp.float32)        # (TP,256) f32


# ------------------------------ pallas_call glue ----------------------------

def run_deform_mlp1(prior_flat, g1row, p, B, nprior):
    bB = pick_batch_block(B, nprior)
    consts = [p['d1_w1p'], p['d1_w2'], p['d1_b2'], p['d1_w3'], p['d1_b3']]

    def const_spec(c):
        nd = c.ndim
        return pl.BlockSpec(c.shape, lambda i, nd=nd: (0,) * nd)

    return pl.pallas_call(
        deform_prior_kernel,
        grid=(B // bB,),
        in_specs=[pl.BlockSpec((bB * nprior, 128), lambda i: (i, 0)),
                  pl.BlockSpec((bB, 1, 384), lambda i: (i, 0, 0))]
                 + [const_spec(c) for c in consts],
        out_specs=pl.BlockSpec((bB * nprior, 128), lambda i: (i, 0)),
        out_shape=jax.ShapeDtypeStruct((B * nprior, 128), jnp.bfloat16),
        compiler_params=pltpu.CompilerParams(
            dimension_semantics=("parallel",), vmem_limit_bytes=VMEM_LIMIT),
    )(prior_flat, g1row, *consts)


def run_atten_deform(b_idx, c_idx, ptsrgb_flat, new_prior_flat, a1row,
                     p, B, npoint, nprior):
    TP = pick_point_tile(npoint)
    NT = npoint // TP
    a_consts = [p['a_w1g'], p['a_w2'], p['a_b2']]
    d_consts = [p['d2_w1'], p['d2_b1'], p['d2_w2'], p['d2_b2']]

    def const_spec(c):
        nd = c.ndim
        return pl.BlockSpec(c.shape, lambda i, t, bi, ci, nd=nd: (0,) * nd)

    in_specs = (
        [pl.BlockSpec((TP, 256), lambda i, t, bi, ci: (bi[i] * NT + t, 0)),   # pts|rgb tile of batch j
         pl.BlockSpec((nprior, 128), lambda i, t, bi, ci: (bi[i], 0)),        # new_prior of batch j
         pl.BlockSpec((nprior, 128), lambda i, t, bi, ci: (i, 0)),            # new_prior of batch i
         pl.BlockSpec((None, 1, 384), lambda i, t, bi, ci: (bi[i], 0, 0))]    # hoisted prior_g row
        + [const_spec(c) for c in a_consts]
        + [pl.BlockSpec((None, 256, nprior), lambda i, t, bi, ci: (ci[i], 0, 0)),   # class-sliced a_w3
           pl.BlockSpec((None, 1, nprior), lambda i, t, bi, ci: (ci[i], 0, 0))]     # class-sliced a_b3
        + [const_spec(c) for c in d_consts]
        + [pl.BlockSpec((None, 64, QV_PAD), lambda i, t, bi, ci: (ci[i], 0, 0)),    # class-sliced d2_w3
           pl.BlockSpec((None, 1, QV_PAD), lambda i, t, bi, ci: (ci[i], 0, 0))]     # class-sliced d2_b3
    )
    out_specs = [pl.BlockSpec((TP, nprior), lambda i, t, bi, ci: (i * NT + t, 0)),
                 pl.BlockSpec((TP, 256), lambda i, t, bi, ci: (i * NT + t, 0)),
                 pl.BlockSpec((nprior, QV_PAD), lambda i, t, bi, ci: (i, 0))]
    out_shape = [jax.ShapeDtypeStruct((B * npoint, nprior), jnp.bfloat16),  # logits (bf16)
                 jax.ShapeDtypeStruct((B * npoint, 256), jnp.float32),      # [new_prior | QoT_pad]
                 jax.ShapeDtypeStruct((B * nprior, QV_PAD), jnp.float32)]   # Qv padded

    gs = pltpu.PrefetchScalarGridSpec(
        num_scalar_prefetch=2, grid=(B, NT),
        in_specs=in_specs, out_specs=out_specs,
        scratch_shapes=[pltpu.VMEM((nprior, 256), jnp.bfloat16)])

    return pl.pallas_call(
        atten_deform_kernel,
        grid_spec=gs,
        out_shape=out_shape,
        compiler_params=pltpu.CompilerParams(
            dimension_semantics=("parallel", "arbitrary"),
            vmem_limit_bytes=VMEM_LIMIT),
    )(b_idx, c_idx, ptsrgb_flat, new_prior_flat, new_prior_flat, a1row,
      *a_consts, p['a_w3c'], p['a_b3c'],
      *d_consts, p['d2_w3c'], p['d2_b3c'])


# ------------------------------ parameters ---------------------------------

def conv_params(key, cin, cout):
    k1, k2 = jax.random.split(key)
    bound = 1.0 / np.sqrt(cin)
    w = jax.random.uniform(k1, (cout, cin), jnp.float32, -bound, bound)
    b = jax.random.uniform(k2, (cout,), jnp.float32, -bound, bound)
    return w, b


def bn_params(cout):
    i = jnp.arange(cout, dtype=jnp.float32)
    gamma = 1.0 + 0.1 * jnp.cos(i)
    beta = 0.05 * jnp.sin(i)
    mean = 0.02 * jnp.cos(0.5 * i)
    var = 1.0 + 0.1 * jnp.sin(0.3 * i) ** 2
    return gamma, beta, mean, var


def fold_bn(w, b, cout):
    gamma, beta, mean, var = bn_params(cout)
    s = gamma / jnp.sqrt(var + EPS)
    return w * s[:, None], (b - mean) * s + beta


def make_params(key, nclass, nprior):
    ks = jax.random.split(key, 9)
    # deform_mlp1: Conv(384,384)+BN, Conv(384,256)+BN, Conv(256,128)+BN
    d1w1, d1b1 = conv_params(ks[0], 384, 384); d1w1, d1b1 = fold_bn(d1w1, d1b1, 384)
    d1w2, d1b2 = conv_params(ks[1], 384, 256); d1w2, d1b2 = fold_bn(d1w2, d1b2, 256)
    d1w3, d1b3 = conv_params(ks[2], 256, 128); d1w3, d1b3 = fold_bn(d1w3, d1b3, 128)
    # atten_mlp: Conv(384,384), Conv(384,256), Conv(256, nclass*nprior)
    aw1, ab1 = conv_params(ks[3], 384, 384)
    aw2, ab2 = conv_params(ks[4], 384, 256)
    aw3, ab3 = conv_params(ks[5], 256, nclass * nprior)
    # deform_mlp2: Conv(128,64), Conv(64,64), Conv(64, nclass*3)
    d2w1, d2b1 = conv_params(ks[6], 128, 64)
    d2w2, d2b2 = conv_params(ks[7], 64, 64)
    d2w3, d2b3 = conv_params(ks[8], 64, nclass * 3)

    def T(w):   # (Cout, Cin) -> (Cin, Cout), bf16 for the MXU
        return jnp.asarray(w.T, dtype=jnp.bfloat16)

    def Bv(b):  # f32 bias row vector (epilogue stays f32)
        return jnp.asarray(b, dtype=jnp.float32).reshape(1, -1)

    # atten_mlp last layer per class: (nclass, 256, nprior) / (nclass, 1, nprior)
    a_w3c = jnp.transpose(jnp.asarray(aw3.T).reshape(256, nclass, nprior),
                          (1, 0, 2)).astype(jnp.bfloat16)
    a_b3c = jnp.asarray(ab3, jnp.float32).reshape(nclass, 1, nprior)

    # deform_mlp2 last layer per class, padded from 3 -> QV_PAD lanes (zero pad)
    d2w3_c = jnp.transpose(jnp.asarray(d2w3.T).reshape(64, nclass, 3), (1, 0, 2))
    d2w3_c = jnp.pad(d2w3_c, ((0, 0), (0, 0), (0, QV_PAD - 3))).astype(jnp.bfloat16)
    d2b3_c = jnp.pad(jnp.asarray(d2b3, jnp.float32).reshape(nclass, 1, 3),
                     ((0, 0), (0, 0), (0, QV_PAD - 3)))

    return dict(
        # deform_mlp1 first layer input split: [0:128]=prior, [128:384]=[pts_g|rgb_g]
        d1_w1p=T(d1w1[:, 0:128]), d1_w1g=T(d1w1[:, 128:384]), d1_b1=Bv(d1b1),
        d1_w2=T(d1w2), d1_b2=Bv(d1b2), d1_w3=T(d1w3), d1_b3=Bv(d1b3),
        # atten_mlp first layer input split: [0:256]=[pts|rgb], [256:384]=prior_global
        a_w1g=T(aw1[:, 0:256]), a_w1p=T(aw1[:, 256:384]), a_b1=Bv(ab1),
        a_w2=T(aw2), a_b2=Bv(ab2), a_w3c=a_w3c, a_b3c=a_b3c,
        d2_w1=T(d2w1), d2_b1=Bv(d2b1), d2_w2=T(d2w2), d2_b2=Bv(d2b2),
        d2_w3c=d2w3_c, d2_b3c=d2b3_c,
    )


# ------------------------------ forward wrapper -----------------------------

@partial(jax.jit, static_argnames=("nclass",))
def deep_prior_deformer(rgb_local, pts_local, prior_local, index, params, nclass):
    """Inputs follow PyTorch NCL convention:
       rgb_local (B,128,npoint), pts_local (B,128,npoint), prior_local (B,128,nprior),
       index (B,) int32 into B*nclass. Returns (attention, new_prior_local, Qv, Qo^T)."""
    p = params
    B, _, npoint = pts_local.shape
    nprior = prior_local.shape[2]

    # --- hoisted global pooling + the two M=1 matmuls, batched over B (XLA) ---
    g = jnp.concatenate([jnp.mean(pts_local, axis=2),
                         jnp.mean(rgb_local, axis=2)], axis=1)          # (B, 256) f32
    g1row = (jnp.dot(g.astype(jnp.bfloat16), p['d1_w1g'],
                     preferred_element_type=jnp.float32) + p['d1_b1'])[:, None, :]  # (B,1,384)

    # --- bf16 channels-last activations, row-flattened (cast fused into transpose) ---
    prior_flat = jnp.transpose(prior_local, (0, 2, 1)).astype(jnp.bfloat16) \
                    .reshape(B * nprior, 128)
    ptsrgb_flat = jnp.concatenate([jnp.transpose(pts_local, (0, 2, 1)),
                                   jnp.transpose(rgb_local, (0, 2, 1))], axis=-1) \
                     .astype(jnp.bfloat16).reshape(B * npoint, 256)

    # kernel A: deform_mlp1 + residual ReLU -> updated prior (bf16, only HBM intermediate)
    new_prior_flat = run_deform_mlp1(prior_flat, g1row, p, B, nprior)   # (B*nprior,128) bf16

    # hoisted prior_global row for atten_mlp (batched over B in XLA)
    prior_g = jnp.mean(new_prior_flat.reshape(B, nprior, 128).astype(jnp.float32), axis=1)
    a1row = (jnp.dot(prior_g.astype(jnp.bfloat16), p['a_w1p'],
                     preferred_element_type=jnp.float32) + p['a_b1'])[:, None, :]   # (B,1,384)

    # kernel B: atten_mlp + deform_mlp2 (class-sliced via scalar prefetch) + softmax + bmm's
    b_idx = (index // nclass).astype(jnp.int32)
    c_idx = (index % nclass).astype(jnp.int32)
    att_flat, res_flat, qv_flat = run_atten_deform(
        b_idx, c_idx, ptsrgb_flat, new_prior_flat, a1row, p, B, npoint, nprior)

    attention = att_flat.reshape(B, npoint, nprior)                 # bf16 pre-softmax logits
    res = res_flat.reshape(B, npoint, 256)
    new_prior_local = jnp.transpose(res[:, :, :128], (0, 2, 1))     # (B, 128, npoint) f32
    QoT = res[:, :, 128:131]                                        # (B, npoint, 3) f32
    Qv = qv_flat.reshape(B, nprior, QV_PAD)[:, :, :3]               # (B, nprior, 3) f32
    return attention, new_prior_local, Qv, QoT


# ---------------------------------- main ------------------------------------

if __name__ == "__main__":
    B, npoint, nprior, nclass = 2, 16, 32, 6
    key = jax.random.PRNGKey(0)
    kp, kr, kt, kpr = jax.random.split(key, 4)

    params = make_params(kp, nclass, nprior)
    rgb_local = jax.random.normal(kr, (B, 128, npoint), jnp.float32)
    pts_local = jax.random.normal(kt, (B, 128, npoint), jnp.float32)
    prior_local = jax.random.normal(kpr, (B, 128, nprior), jnp.float32)
    index = jnp.array([0 * nclass + 2, 1 * nclass + 4], dtype=jnp.int32)

    outs = deep_prior_deformer(rgb_local, pts_local, prior_local, index, params, nclass)
    outs = jax.tree_util.tree_map(jax.block_until_ready, outs)

    attention, new_prior_local, Qv, QoT = outs
    assert attention.shape == (B, npoint, nprior)
    assert new_prior_local.shape == (B, 128, npoint)
    assert Qv.shape == (B, nprior, 3)
    assert QoT.shape == (B, npoint, 3)
    assert all(bool(jnp.all(jnp.isfinite(o.astype(jnp.float32))))
               for o in (attention, new_prior_local, Qv, QoT))
    print("KERNEL_OK")
</pallas_src>

<mosaic_0001>
module attributes {stable_mosaic.version = 11 : i64} {
  func.func @deform_prior_kernel(%arg0: i32, %arg1: memref<64x128xbf16, #tpu.memory_space<vmem>>, %arg2: memref<2x1x384xf32, #tpu.memory_space<vmem>>, %arg3: memref<128x384xbf16, #tpu.memory_space<vmem>>, %arg4: memref<384x256xbf16, #tpu.memory_space<vmem>>, %arg5: memref<1x256xf32, #tpu.memory_space<vmem>>, %arg6: memref<256x128xbf16, #tpu.memory_space<vmem>>, %arg7: memref<1x128xf32, #tpu.memory_space<vmem>>, %arg8: memref<64x128xbf16, #tpu.memory_space<vmem>>) attributes {dimension_semantics = [#tpu.dimension_semantics<parallel>], iteration_bounds = array<i64: 1>, scalar_prefetch = 0 : i64, scratch_operands = 0 : i64, tpu.core_type = #tpu.core_type<tc>, window_params = [{transform_indices = @transform_0, window_bounds = array<i64: 64, 128>}, {transform_indices = @transform_1, window_bounds = array<i64: 2, 1, 384>}, {pipeline_mode = #tpu.pipeline_mode<synchronous>, transform_indices = @transform_2, window_bounds = array<i64: 128, 384>}, {pipeline_mode = #tpu.pipeline_mode<synchronous>, transform_indices = @transform_3, window_bounds = array<i64: 384, 256>}, {pipeline_mode = #tpu.pipeline_mode<synchronous>, transform_indices = @transform_4, window_bounds = array<i64: 1, 256>}, {pipeline_mode = #tpu.pipeline_mode<synchronous>, transform_indices = @transform_5, window_bounds = array<i64: 256, 128>}, {pipeline_mode = #tpu.pipeline_mode<synchronous>, transform_indices = @transform_6, window_bounds = array<i64: 1, 128>}, {transform_indices = @transform_7, window_bounds = array<i64: 64, 128>}]} {
    %c0 = arith.constant 0 : index
    %c0_0 = arith.constant 0 : index
    %0 = vector.load %arg1[%c0, %c0_0] : memref<64x128xbf16, #tpu.memory_space<vmem>>, vector<64x128xbf16>
    %c0_1 = arith.constant 0 : index
    %c0_2 = arith.constant 0 : index
    %c0_3 = arith.constant 0 : index
    %1 = vector.load %arg2[%c0_1, %c0_2, %c0_3] : memref<2x1x384xf32, #tpu.memory_space<vmem>>, vector<2x1x384xf32>
    %c0_4 = arith.constant 0 : index
    %c0_5 = arith.constant 0 : index
    %2 = vector.load %arg3[%c0_4, %c0_5] : memref<128x384xbf16, #tpu.memory_space<vmem>>, vector<128x384xbf16>
    %cst = arith.constant dense<0.000000e+00> : vector<64x384xf32>
    %3 = tpu.matmul %0, %2, %cst {dimension_numbers = #tpu.dot_dimension_numbers<[1], [0], [0], [1], [0, 0, 1, 1], [], []>} : vector<64x128xbf16>, vector<128x384xbf16>, vector<64x384xf32> -> vector<64x384xf32>
    %4 = vector.extract_strided_slice %3 {offsets = [0, 0], sizes = [32, 384], strides = [1, 1]} : vector<64x384xf32> to vector<32x384xf32>
    %5 = vector.extract_strided_slice %1 {offsets = [0, 0, 0], sizes = [1, 1, 384], strides = [1, 1, 1]} : vector<2x1x384xf32> to vector<1x1x384xf32>
    %6 = vector.shape_cast %5 : vector<1x1x384xf32> to vector<1x384xf32>
    %7 = vector.broadcast %6 : vector<1x384xf32> to vector<32x384xf32>
    %8 = arith.addf %4, %7 : vector<32x384xf32>
    %cst_6 = arith.constant 0.000000e+00 : f32
    %9 = vector.broadcast %cst_6 : f32 to vector<32x384xf32>
    %10 = arith.maximumf %8, %9 : vector<32x384xf32>
    %11 = vector.extract_strided_slice %3 {offsets = [32, 0], sizes = [32, 384], strides = [1, 1]} : vector<64x384xf32> to vector<32x384xf32>
    %12 = vector.extract_strided_slice %1 {offsets = [1, 0, 0], sizes = [1, 1, 384], strides = [1, 1, 1]} : vector<2x1x384xf32> to vector<1x1x384xf32>
    %13 = vector.shape_cast %12 : vector<1x1x384xf32> to vector<1x384xf32>
    %14 = vector.broadcast %13 : vector<1x384xf32> to vector<32x384xf32>
    %15 = arith.addf %11, %14 : vector<32x384xf32>
    %cst_7 = arith.constant 0.000000e+00 : f32
    %16 = vector.broadcast %cst_7 : f32 to vector<32x384xf32>
    %17 = arith.maximumf %15, %16 : vector<32x384xf32>
    %18 = tpu.concatenate %10, %17 in 0 : vector<32x384xf32>, vector<32x384xf32> -> vector<64x384xf32>
    %19 = arith.truncf %18 : vector<64x384xf32> to vector<64x384xbf16>
    %c0_8 = arith.constant 0 : index
    %c0_9 = arith.constant 0 : index
    %20 = vector.load %arg4[%c0_8, %c0_9] : memref<384x256xbf16, #tpu.memory_space<vmem>>, vector<384x256xbf16>
    %cst_10 = arith.constant dense<0.000000e+00> : vector<64x256xf32>
    %21 = tpu.matmul %19, %20, %cst_10 {dimension_numbers = #tpu.dot_dimension_numbers<[1], [0], [0], [1], [0, 0, 1, 1], [], []>} : vector<64x384xbf16>, vector<384x256xbf16>, vector<64x256xf32> -> vector<64x256xf32>
    %c0_11 = arith.constant 0 : index
    %c0_12 = arith.constant 0 : index
    %22 = vector.load %arg5[%c0_11, %c0_12] : memref<1x256xf32, #tpu.memory_space<vmem>>, vector<1x256xf32>
    %23 = vector.broadcast %22 : vector<1x256xf32> to vector<64x256xf32>
    %24 = arith.addf %21, %23 : vector<64x256xf32>
    %cst_13 = arith.constant 0.000000e+00 : f32
    %25 = vector.broadcast %cst_13 : f32 to vector<64x256xf32>
    %26 = arith.maximumf %24, %25 : vector<64x256xf32>
    %27 = arith.truncf %26 : vector<64x256xf32> to vector<64x256xbf16>
    %c0_14 = arith.constant 0 : index
    %c0_15 = arith.constant 0 : index
    %28 = vector.load %arg6[%c0_14, %c0_15] : memref<256x128xbf16, #tpu.memory_space<vmem>>, vector<256x128xbf16>
    %cst_16 = arith.constant dense<0.000000e+00> : vector<64x128xf32>
    %29 = tpu.matmul %27, %28, %cst_16 {dimension_numbers = #tpu.dot_dimension_numbers<[1], [0], [0], [1], [0, 0, 1, 1], [], []>} : vector<64x256xbf16>, vector<256x128xbf16>, vector<64x128xf32> -> vector<64x128xf32>
    %c0_17 = arith.constant 0 : index
    %c0_18 = arith.constant 0 : index
    %30 = vector.load %arg7[%c0_17, %c0_18] : memref<1x128xf32, #tpu.memory_space<vmem>>, vector<1x128xf32>
    %31 = vector.broadcast %30 : vector<1x128xf32> to vector<64x128xf32>
    %32 = arith.addf %29, %31 : vector<64x128xf32>
    %33 = arith.extf %0 : vector<64x128xbf16> to vector<64x128xf32>
    %34 = arith.addf %33, %32 : vector<64x128xf32>
    %cst_19 = arith.constant 0.000000e+00 : f32
    %35 = vector.broadcast %cst_19 : f32 to vector<64x128xf32>
    %36 = arith.maximumf %34, %35 : vector<64x128xf32>
    %37 = arith.truncf %36 : vector<64x128xf32> to vector<64x128xbf16>
    %c0_20 = arith.constant 0 : index
    %c0_21 = arith.constant 0 : index
    %38 = vector.load %arg8[%c0_20, %c0_21] : memref<64x128xbf16, #tpu.memory_space<vmem>>, vector<64x128xbf16>
    tpu.vector_store %arg8[%c0_20, %c0_21], %37 {strides = array<i32>} : memref<64x128xbf16, #tpu.memory_space<vmem>>, vector<64x128xbf16>,
    return
  }
  func.func @transform_0(%arg0: i32) -> (i32, i32) {
    %c0_i32 = arith.constant 0 : i32
    %c0_i32_0 = arith.constant 0 : i32
    return %arg0, %c0_i32 : i32, i32
  }
  func.func @transform_1(%arg0: i32) -> (i32, i32, i32) {
    %c0_i32 = arith.constant 0 : i32
    %c0_i32_0 = arith.constant 0 : i32
    %c0_i32_1 = arith.constant 0 : i32
    return %arg0, %c0_i32, %c0_i32_0 : i32, i32, i32
  }
  func.func @transform_2(%arg0: i32) -> (i32, i32) {
    %c0_i32 = arith.constant 0 : i32
    %c0_i32_0 = arith.constant 0 : i32
    %c0_i32_1 = arith.constant 0 : i32
    return %c0_i32, %c0_i32_0 : i32, i32
  }
  func.func @transform_3(%arg0: i32) -> (i32, i32) {
    %c0_i32 = arith.constant 0 : i32
    %c0_i32_0 = arith.constant 0 : i32
    %c0_i32_1 = arith.constant 0 : i32
    return %c0_i32, %c0_i32_0 : i32, i32
  }
  func.func @transform_4(%arg0: i32) -> (i32, i32) {
    %c0_i32 = arith.constant 0 : i32
    %c0_i32_0 = arith.constant 0 : i32
    %c0_i32_1 = arith.constant 0 : i32
    return %c0_i32, %c0_i32_0 : i32, i32
  }
  func.func @transform_5(%arg0: i32) -> (i32, i32) {
    %c0_i32 = arith.constant 0 : i32
    %c0_i32_0 = arith.constant 0 : i32
    %c0_i32_1 = arith.constant 0 : i32
    return %c0_i32, %c0_i32_0 : i32, i32
  }
  func.func @transform_6(%arg0: i32) -> (i32, i32) {
    %c0_i32 = arith.constant 0 : i32
    %c0_i32_0 = arith.constant 0 : i32
    %c0_i32_1 = arith.constant 0 : i32
    return %c0_i32, %c0_i32_0 : i32, i32
  }
  func.func @transform_7(%arg0: i32) -> (i32, i32) {
    %c0_i32 = arith.constant 0 : i32
    %c0_i32_0 = arith.constant 0 : i32
    return %arg0, %c0_i32 : i32, i32
  }
}

module attributes {stable_mosaic.version = 11 : i64} {
  func.func @atten_deform_kernel(%arg0: i32, %arg1: i32, %arg2: memref<2xi32, #tpu.memory_space<smem>>, %arg3: memref<2xi32, #tpu.memory_space<smem>>, %arg4: memref<16x256xbf16, #tpu.memory_space<vmem>>, %arg5: memref<32x128xbf16, #tpu.memory_space<vmem>>, %arg6: memref<32x128xbf16, #tpu.memory_space<vmem>>, %arg7: memref<1x1x384xf32, #tpu.memory_space<vmem>>, %arg8: memref<256x384xbf16, #tpu.memory_space<vmem>>, %arg9: memref<384x256xbf16, #tpu.memory_space<vmem>>, %arg10: memref<1x256xf32, #tpu.memory_space<vmem>>, %arg11: memref<1x256x32xbf16, #tpu.memory_space<vmem>>, %arg12: memref<1x1x32xf32, #tpu.memory_space<vmem>>, %arg13: memref<128x64xbf16, #tpu.memory_space<vmem>>, %arg14: memref<1x64xf32, #tpu.memory_space<vmem>>, %arg15: memref<64x64xbf16, #tpu.memory_space<vmem>>, %arg16: memref<1x64xf32, #tpu.memory_space<vmem>>, %arg17: memref<1x64x128xbf16, #tpu.memory_space<vmem>>, %arg18: memref<1x1x128xf32, #tpu.memory_space<vmem>>, %arg19: memref<16x32xbf16, #tpu.memory_space<vmem>>, %arg20: memref<16x256xf32, #tpu.memory_space<vmem>>, %arg21: memref<32x128xf32, #tpu.memory_space<vmem>>, %arg22: memref<32x256xbf16, #tpu.memory_space<vmem>>) attributes {dimension_semantics = [#tpu.dimension_semantics<parallel>, #tpu.dimension_semantics<arbitrary>], iteration_bounds = array<i64: 2, 1>, scalar_prefetch = 2 : i64, scratch_operands = 1 : i64, tpu.core_type = #tpu.core_type<tc>, window_params = [{transform_indices = @transform_0, window_bounds = array<i64: 16, 256>}, {transform_indices = @transform_1, window_bounds = array<i64: 32, 128>}, {transform_indices = @transform_2, window_bounds = array<i64: 32, 128>}, {transform_indices = @transform_3, window_bounds = array<i64: 1, 1, 384>}, {pipeline_mode = #tpu.pipeline_mode<synchronous>, transform_indices = @transform_4, window_bounds = array<i64: 256, 384>}, {pipeline_mode = #tpu.pipeline_mode<synchronous>, transform_indices = @transform_5, window_bounds = array<i64: 384, 256>}, {pipeline_mode = #tpu.pipeline_mode<synchronous>, transform_indices = @transform_6, window_bounds = array<i64: 1, 256>}, {transform_indices = @transform_7, window_bounds = array<i64: 1, 256, 32>}, {transform_indices = @transform_8, window_bounds = array<i64: 1, 1, 32>}, {pipeline_mode = #tpu.pipeline_mode<synchronous>, transform_indices = @transform_9, window_bounds = array<i64: 128, 64>}, {pipeline_mode = #tpu.pipeline_mode<synchronous>, transform_indices = @transform_10, window_bounds = array<i64: 1, 64>}, {pipeline_mode = #tpu.pipeline_mode<synchronous>, transform_indices = @transform_11, window_bounds = array<i64: 64, 64>}, {pipeline_mode = #tpu.pipeline_mode<synchronous>, transform_indices = @transform_12, window_bounds = array<i64: 1, 64>}, {transform_indices = @transform_13, window_bounds = array<i64: 1, 64, 128>}, {transform_indices = @transform_14, window_bounds = array<i64: 1, 1, 128>}, {transform_indices = @transform_15, window_bounds = array<i64: 16, 32>}, {transform_indices = @transform_16, window_bounds = array<i64: 16, 256>}, {transform_indices = @transform_17, window_bounds = array<i64: 32, 128>}]} {
    %c0_i32 = arith.constant 0 : i32
    %0 = arith.cmpi eq, %arg1, %c0_i32 : i32
    %1 = arith.extui %0 : i1 to i32
    %c0_i32_0 = arith.constant 0 : i32
    %2 = arith.cmpi ne, %1, %c0_i32_0 : i32
    scf.if %2 {
      %c0_30 = arith.constant 0 : index
      %c0_31 = arith.constant 0 : index
      %44 = vector.load %arg5[%c0_30, %c0_31] : memref<32x128xbf16, #tpu.memory_space<vmem>>, vector<32x128xbf16>
      %c0_32 = arith.constant 0 : index
      %c0_33 = arith.constant 0 : index
      %45 = vector.load %arg13[%c0_32, %c0_33] : memref<128x64xbf16, #tpu.memory_space<vmem>>, vector<128x64xbf16>
      %cst_34 = arith.constant dense<0.000000e+00> : vector<32x64xf32>
      %46 = tpu.matmul %44, %45, %cst_34 {dimension_numbers = #tpu.dot_dimension_numbers<[1], [0], [0], [1], [0, 0, 1, 1], [], []>} : vector<32x128xbf16>, vector<128x64xbf16>, vector<32x64xf32> -> vector<32x64xf32>
      %c0_35 = arith.constant 0 : index
      %c0_36 = arith.constant 0 : index
      %47 = vector.load %arg14[%c0_35, %c0_36] : memref<1x64xf32, #tpu.memory_space<vmem>>, vector<1x64xf32>
      %48 = vector.broadcast %47 : vector<1x64xf32> to vector<32x64xf32>
      %49 = arith.addf %46, %48 : vector<32x64xf32>
      %cst_37 = arith.constant 0.000000e+00 : f32
      %50 = vector.broadcast %cst_37 : f32 to vector<32x64xf32>
      %51 = arith.maximumf %49, %50 : vector<32x64xf32>
      %52 = arith.truncf %51 : vector<32x64xf32> to vector<32x64xbf16>
      %c0_38 = arith.constant 0 : index
      %c0_39 = arith.constant 0 : index
      %53 = vector.load %arg15[%c0_38, %c0_39] : memref<64x64xbf16, #tpu.memory_space<vmem>>, vector<64x64xbf16>
      %cst_40 = arith.constant dense<0.000000e+00> : vector<32x64xf32>
      %54 = tpu.matmul %52, %53, %cst_40 {dimension_numbers = #tpu.dot_dimension_numbers<[1], [0], [0], [1], [0, 0, 1, 1], [], []>} : vector<32x64xbf16>, vector<64x64xbf16>, vector<32x64xf32> -> vector<32x64xf32>
      %c0_41 = arith.constant 0 : index
      %c0_42 = arith.constant 0 : index
      %55 = vector.load %arg16[%c0_41, %c0_42] : memref<1x64xf32, #tpu.memory_space<vmem>>, vector<1x64xf32>
      %56 = vector.broadcast %55 : vector<1x64xf32> to vector<32x64xf32>
      %57 = arith.addf %54, %56 : vector<32x64xf32>
      %cst_43 = arith.constant 0.000000e+00 : f32
      %58 = vector.broadcast %cst_43 : f32 to vector<32x64xf32>
      %59 = arith.maximumf %57, %58 : vector<32x64xf32>
      %60 = arith.truncf %59 : vector<32x64xf32> to vector<32x64xbf16>
      %c0_44 = arith.constant 0 : index
      %c0_45 = arith.constant 0 : index
      %c0_46 = arith.constant 0 : index
      %61 = vector.load %arg17[%c0_44, %c0_45, %c0_46] : memref<1x64x128xbf16, #tpu.memory_space<vmem>>, vector<1x64x128xbf16>
      %62 = vector.shape_cast %61 : vector<1x64x128xbf16> to vector<64x128xbf16>
      %cst_47 = arith.constant dense<0.000000e+00> : vector<32x128xf32>
      %63 = tpu.matmul %60, %62, %cst_47 {dimension_numbers = #tpu.dot_dimension_numbers<[1], [0], [0], [1], [0, 0, 1, 1], [], []>} : vector<32x64xbf16>, vector<64x128xbf16>, vector<32x128xf32> -> vector<32x128xf32>
      %c0_48 = arith.constant 0 : index
      %c0_49 = arith.constant 0 : index
      %c0_50 = arith.constant 0 : index
      %64 = vector.load %arg18[%c0_48, %c0_49, %c0_50] : memref<1x1x128xf32, #tpu.memory_space<vmem>>, vector<1x1x128xf32>
      %65 = vector.shape_cast %64 : vector<1x1x128xf32> to vector<1x128xf32>
      %66 = vector.broadcast %65 : vector<1x128xf32> to vector<32x128xf32>
      %67 = arith.addf %63, %66 : vector<32x128xf32>
      %c0_51 = arith.constant 0 : index
      %c0_52 = arith.constant 0 : index
      %68 = vector.load %arg21[%c0_51, %c0_52] : memref<32x128xf32, #tpu.memory_space<vmem>>, vector<32x128xf32>
      tpu.vector_store %arg21[%c0_51, %c0_52], %67 {strides = array<i32>} : memref<32x128xf32, #tpu.memory_space<vmem>>, vector<32x128xf32>,
      %c0_53 = arith.constant 0 : index
      %c0_54 = arith.constant 0 : index
      %69 = vector.load %arg6[%c0_53, %c0_54] : memref<32x128xbf16, #tpu.memory_space<vmem>>, vector<32x128xbf16>
      %c0_55 = arith.constant 0 : index
      %c0_56 = arith.constant 0 : index
      %70 = vector.load %arg22[%c0_55, %c0_56] : memref<32x256xbf16, #tpu.memory_space<vmem>>, vector<32x128xbf16>
      tpu.vector_store %arg22[%c0_55, %c0_56], %69 {strides = array<i32>} : memref<32x256xbf16, #tpu.memory_space<vmem>>, vector<32x128xbf16>,
      %71 = arith.truncf %67 : vector<32x128xf32> to vector<32x128xbf16>
      %c0_57 = arith.constant 0 : index
      %c128 = arith.constant 128 : index
      %72 = vector.load %arg22[%c0_57, %c128] : memref<32x256xbf16, #tpu.memory_space<vmem>>, vector<32x128xbf16>
      tpu.vector_store %arg22[%c0_57, %c128], %71 {strides = array<i32>} : memref<32x256xbf16, #tpu.memory_space<vmem>>, vector<32x128xbf16>,
    } else {
    }
    %c0 = arith.constant 0 : index
    %c0_1 = arith.constant 0 : index
    %3 = vector.load %arg4[%c0, %c0_1] : memref<16x256xbf16, #tpu.memory_space<vmem>>, vector<16x256xbf16>
    %c0_2 = arith.constant 0 : index
    %c0_3 = arith.constant 0 : index
    %4 = vector.load %arg8[%c0_2, %c0_3] : memref<256x384xbf16, #tpu.memory_space<vmem>>, vector<256x384xbf16>
    %cst = arith.constant dense<0.000000e+00> : vector<16x384xf32>
    %5 = tpu.matmul %3, %4, %cst {dimension_numbers = #tpu.dot_dimension_numbers<[1], [0], [0], [1], [0, 0, 1, 1], [], []>} : vector<16x256xbf16>, vector<256x384xbf16>, vector<16x384xf32> -> vector<16x384xf32>
    %c0_4 = arith.constant 0 : index
    %c0_5 = arith.constant 0 : index
    %c0_6 = arith.constant 0 : index
    %6 = vector.load %arg7[%c0_4, %c0_5, %c0_6] : memref<1x1x384xf32, #tpu.memory_space<vmem>>, vector<1x1x384xf32>
    %7 = vector.shape_cast %6 : vector<1x1x384xf32> to vector<1x384xf32>
    %8 = vector.broadcast %7 : vector<1x384xf32> to vector<16x384xf32>
    %9 = arith.addf %5, %8 : vector<16x384xf32>
    %cst_7 = arith.constant 0.000000e+00 : f32
    %10 = vector.broadcast %cst_7 : f32 to vector<16x384xf32>
    %11 = arith.maximumf %9, %10 : vector<16x384xf32>
    %12 = arith.truncf %11 : vector<16x384xf32> to vector<16x384xbf16>
    %c0_8 = arith.constant 0 : index
    %c0_9 = arith.constant 0 : index
    %13 = vector.load %arg9[%c0_8, %c0_9] : memref<384x256xbf16, #tpu.memory_space<vmem>>, vector<384x256xbf16>
    %cst_10 = arith.constant dense<0.000000e+00> : vector<16x256xf32>
    %14 = tpu.matmul %12, %13, %cst_10 {dimension_numbers = #tpu.dot_dimension_numbers<[1], [0], [0], [1], [0, 0, 1, 1], [], []>} : vector<16x384xbf16>, vector<384x256xbf16>, vector<16x256xf32> -> vector<16x256xf32>
    %c0_11 = arith.constant 0 : index
    %c0_12 = arith.constant 0 : index
    %15 = vector.load %arg10[%c0_11, %c0_12] : memref<1x256xf32, #tpu.memory_space<vmem>>, vector<1x256xf32>
    %16 = vector.broadcast %15 : vector<1x256xf32> to vector<16x256xf32>
    %17 = arith.addf %14, %16 : vector<16x256xf32>
    %cst_13 = arith.constant 0.000000e+00 : f32
    %18 = vector.broadcast %cst_13 : f32 to vector<16x256xf32>
    %19 = arith.maximumf %17, %18 : vector<16x256xf32>
    %20 = arith.truncf %19 : vector<16x256xf32> to vector<16x256xbf16>
    %c0_14 = arith.constant 0 : index
    %c0_15 = arith.constant 0 : index
    %c0_16 = arith.constant 0 : index
    %21 = vector.load %arg11[%c0_14, %c0_15, %c0_16] : memref<1x256x32xbf16, #tpu.memory_space<vmem>>, vector<1x256x32xbf16>
    %22 = vector.shape_cast %21 : vector<1x256x32xbf16> to vector<256x32xbf16>
    %cst_17 = arith.constant dense<0.000000e+00> : vector<16x32xf32>
    %23 = tpu.matmul %20, %22, %cst_17 {dimension_numbers = #tpu.dot_dimension_numbers<[1], [0], [0], [1], [0, 0, 1, 1], [], []>} : vector<16x256xbf16>, vector<256x32xbf16>, vector<16x32xf32> -> vector<16x32xf32>
    %c0_18 = arith.constant 0 : index
    %c0_19 = arith.constant 0 : index
    %c0_20 = arith.constant 0 : index
    %24 = vector.load %arg12[%c0_18, %c0_19, %c0_20] : memref<1x1x32xf32, #tpu.memory_space<vmem>>, vector<1x1x32xf32>
    %25 = vector.shape_cast %24 : vector<1x1x32xf32> to vector<1x32xf32>
    %26 = vector.broadcast %25 : vector<1x32xf32> to vector<16x32xf32>
    %27 = arith.addf %23, %26 : vector<16x32xf32>
    %28 = arith.truncf %27 : vector<16x32xf32> to vector<16x32xbf16>
    %c0_21 = arith.constant 0 : index
    %c0_22 = arith.constant 0 : index
    %29 = vector.load %arg19[%c0_21, %c0_22] : memref<16x32xbf16, #tpu.memory_space<vmem>>, vector<16x32xbf16>
    tpu.vector_store %arg19[%c0_21, %c0_22], %28 {strides = array<i32>} : memref<16x32xbf16, #tpu.memory_space<vmem>>, vector<16x32xbf16>,
    %cst_23 = arith.constant dense<0xFF800000> : vector<16xf32>
    %30 = vector.multi_reduction <maximumf>, %27, %cst_23 [1] : vector<16x32xf32> to vector<16xf32>
    %31 = vector.shape_cast %30 : vector<16xf32> to vector<16x1xf32>
    %32 = vector.broadcast %31 : vector<16x1xf32> to vector<16x32xf32>
    %33 = arith.subf %27, %32 : vector<16x32xf32>
    %34 = math.exp %33 : vector<16x32xf32>
    %cst_24 = arith.constant dense<0.000000e+00> : vector<16xf32>
    %35 = vector.multi_reduction <add>, %34, %cst_24 [1] : vector<16x32xf32> to vector<16xf32>
    %36 = vector.shape_cast %35 : vector<16xf32> to vector<16x1xf32>
    %37 = tpu.reciprocal %36 {approx = true} : vector<16x1xf32> -> vector<16x1xf32>
    %38 = vector.broadcast %37 : vector<16x1xf32> to vector<16x32xf32>
    %39 = arith.mulf %34, %38 : vector<16x32xf32>
    %40 = arith.truncf %39 : vector<16x32xf32> to vector<16x32xbf16>
    %c0_25 = arith.constant 0 : index
    %c0_26 = arith.constant 0 : index
    %41 = vector.load %arg22[%c0_25, %c0_26] : memref<32x256xbf16, #tpu.memory_space<vmem>>, vector<32x256xbf16>
    %cst_27 = arith.constant dense<0.000000e+00> : vector<16x256xf32>
    %42 = tpu.matmul %40, %41, %cst_27 {dimension_numbers = #tpu.dot_dimension_numbers<[1], [0], [0], [1], [0, 0, 1, 1], [], []>} : vector<16x32xbf16>, vector<32x256xbf16>, vector<16x256xf32> -> vector<16x256xf32>
    %c0_28 = arith.constant 0 : index
    %c0_29 = arith.constant 0 : index
    %43 = vector.load %arg20[%c0_28, %c0_29] : memref<16x256xf32, #tpu.memory_space<vmem>>, vector<16x256xf32>
    tpu.vector_store %arg20[%c0_28, %c0_29], %42 {strides = array<i32>} : memref<16x256xf32, #tpu.memory_space<vmem>>, vector<16x256xf32>,
    return
  }
  func.func @transform_0(%arg0: i32, %arg1: i32, %arg2: memref<2xi32, #tpu.memory_space<smem>>, %arg3: memref<2xi32, #tpu.memory_space<smem>>) -> (i32, i32) {
    %0 = arith.index_cast %arg0 : i32 to index
    %1 = memref.load %arg2[%0] : memref<2xi32, #tpu.memory_space<smem>>
    %c1_i32 = arith.constant 1 : i32
    %2 = arith.muli %1, %c1_i32 : i32
    %3 = arith.addi %2, %arg1 : i32
    %c0_i32 = arith.constant 0 : i32
    %c0_i32_0 = arith.constant 0 : i32
    return %3, %c0_i32 : i32, i32
  }
  func.func @transform_1(%arg0: i32, %arg1: i32, %arg2: memref<2xi32, #tpu.memory_space<smem>>, %arg3: memref<2xi32, #tpu.memory_space<smem>>) -> (i32, i32) {
    %0 = arith.index_cast %arg0 : i32 to index
    %1 = memref.load %arg2[%0] : memref<2xi32, #tpu.memory_space<smem>>
    %c0_i32 = arith.constant 0 : i32
    %c0_i32_0 = arith.constant 0 : i32
    return %1, %c0_i32 : i32, i32
  }
  func.func @transform_2(%arg0: i32, %arg1: i32, %arg2: memref<2xi32, #tpu.memory_space<smem>>, %arg3: memref<2xi32, #tpu.memory_space<smem>>) -> (i32, i32) {
    %c0_i32 = arith.constant 0 : i32
    %c0_i32_0 = arith.constant 0 : i32
    return %arg0, %c0_i32 : i32, i32
  }
  func.func @transform_3(%arg0: i32, %arg1: i32, %arg2: memref<2xi32, #tpu.memory_space<smem>>, %arg3: memref<2xi32, #tpu.memory_space<smem>>) -> (i32, i32, i32) {
    %0 = arith.index_cast %arg0 : i32 to index
    %1 = memref.load %arg2[%0] : memref<2xi32, #tpu.memory_space<smem>>
    %c0_i32 = arith.constant 0 : i32
    %c0_i32_0 = arith.constant 0 : i32
    %c0_i32_1 = arith.constant 0 : i32
    return %1, %c0_i32, %c0_i32_0 : i32, i32, i32
  }
  func.func @transform_4(%arg0: i32, %arg1: i32, %arg2: memref<2xi32, #tpu.memory_space<smem>>, %arg3: memref<2xi32, #tpu.memory_space<smem>>) -> (i32, i32) {
    %c0_i32 = arith.constant 0 : i32
    %c0_i32_0 = arith.constant 0 : i32
    %c0_i32_1 = arith.constant 0 : i32
    return %c0_i32, %c0_i32_0 : i32, i32
  }
  func.func @transform_5(%arg0: i32, %arg1: i32, %arg2: memref<2xi32, #tpu.memory_space<smem>>, %arg3: memref<2xi32, #tpu.memory_space<smem>>) -> (i32, i32) {
    %c0_i32 = arith.constant 0 : i32
    %c0_i32_0 = arith.constant 0 : i32
    %c0_i32_1 = arith.constant 0 : i32
    return %c0_i32, %c0_i32_0 : i32, i32
  }
  func.func @transform_6(%arg0: i32, %arg1: i32, %arg2: memref<2xi32, #tpu.memory_space<smem>>, %arg3: memref<2xi32, #tpu.memory_space<smem>>) -> (i32, i32) {
    %c0_i32 = arith.constant 0 : i32
    %c0_i32_0 = arith.constant 0 : i32
    %c0_i32_1 = arith.constant 0 : i32
    return %c0_i32, %c0_i32_0 : i32, i32
  }
  func.func @transform_7(%arg0: i32, %arg1: i32, %arg2: memref<2xi32, #tpu.memory_space<smem>>, %arg3: memref<2xi32, #tpu.memory_space<smem>>) -> (i32, i32, i32) {
    %0 = arith.index_cast %arg0 : i32 to index
    %1 = memref.load %arg3[%0] : memref<2xi32, #tpu.memory_space<smem>>
    %c0_i32 = arith.constant 0 : i32
    %c0_i32_0 = arith.constant 0 : i32
    %c0_i32_1 = arith.constant 0 : i32
    return %1, %c0_i32, %c0_i32_0 : i32, i32, i32
  }
  func.func @transform_8(%arg0: i32, %arg1: i32, %arg2: memref<2xi32, #tpu.memory_space<smem>>, %arg3: memref<2xi32, #tpu.memory_space<smem>>) -> (i32, i32, i32) {
    %0 = arith.index_cast %arg0 : i32 to index
    %1 = memref.load %arg3[%0] : memref<2xi32, #tpu.memory_space<smem>>
    %c0_i32 = arith.constant 0 : i32
    %c0_i32_0 = arith.constant 0 : i32
    %c0_i32_1 = arith.constant 0 : i32
    return %1, %c0_i32, %c0_i32_0 : i32, i32, i32
  }
  func.func @transform_9(%arg0: i32, %arg1: i32, %arg2: memref<2xi32, #tpu.memory_space<smem>>, %arg3: memref<2xi32, #tpu.memory_space<smem>>) -> (i32, i32) {
    %c0_i32 = arith.constant 0 : i32
    %c0_i32_0 = arith.constant 0 : i32
    %c0_i32_1 = arith.constant 0 : i32
    return %c0_i32, %c0_i32_0 : i32, i32
  }
  func.func @transform_10(%arg0: i32, %arg1: i32, %arg2: memref<2xi32, #tpu.memory_space<smem>>, %arg3: memref<2xi32, #tpu.memory_space<smem>>) -> (i32, i32) {
    %c0_i32 = arith.constant 0 : i32
    %c0_i32_0 = arith.constant 0 : i32
    %c0_i32_1 = arith.constant 0 : i32
    return %c0_i32, %c0_i32_0 : i32, i32
  }
  func.func @transform_11(%arg0: i32, %arg1: i32, %arg2: memref<2xi32, #tpu.memory_space<smem>>, %arg3: memref<2xi32, #tpu.memory_space<smem>>) -> (i32, i32) {
    %c0_i32 = arith.constant 0 : i32
    %c0_i32_0 = arith.constant 0 : i32
    %c0_i32_1 = arith.constant 0 : i32
    return %c0_i32, %c0_i32_0 : i32, i32
  }
  func.func @transform_12(%arg0: i32, %arg1: i32, %arg2: memref<2xi32, #tpu.memory_space<smem>>, %arg3: memref<2xi32, #tpu.memory_space<smem>>) -> (i32, i32) {
    %c0_i32 = arith.constant 0 : i32
    %c0_i32_0 = arith.constant 0 : i32
    %c0_i32_1 = arith.constant 0 : i32
    return %c0_i32, %c0_i32_0 : i32, i32
  }
  func.func @transform_13(%arg0: i32, %arg1: i32, %arg2: memref<2xi32, #tpu.memory_space<smem>>, %arg3: memref<2xi32, #tpu.memory_space<smem>>) -> (i32, i32, i32) {
    %0 = arith.index_cast %arg0 : i32 to index
    %1 = memref.load %arg3[%0] : memref<2xi32, #tpu.memory_space<smem>>
    %c0_i32 = arith.constant 0 : i32
    %c0_i32_0 = arith.constant 0 : i32
    %c0_i32_1 = arith.constant 0 : i32
    return %1, %c0_i32, %c0_i32_0 : i32, i32, i32
  }
  func.func @transform_14(%arg0: i32, %arg1: i32, %arg2: memref<2xi32, #tpu.memory_space<smem>>, %arg3: memref<2xi32, #tpu.memory_space<smem>>) -> (i32, i32, i32) {
    %0 = arith.index_cast %arg0 : i32 to index
    %1 = memref.load %arg3[%0] : memref<2xi32, #tpu.memory_space<smem>>
    %c0_i32 = arith.constant 0 : i32
    %c0_i32_0 = arith.constant 0 : i32
    %c0_i32_1 = arith.constant 0 : i32
    return %1, %c0_i32, %c0_i32_0 : i32, i32, i32
  }
  func.func @transform_15(%arg0: i32, %arg1: i32, %arg2: memref<2xi32, #tpu.memory_space<smem>>, %arg3: memref<2xi32, #tpu.memory_space<smem>>) -> (i32, i32) {
    %c1_i32 = arith.constant 1 : i32
    %0 = arith.muli %arg0, %c1_i32 : i32
    %1 = arith.addi %0, %arg1 : i32
    %c0_i32 = arith.constant 0 : i32
    %c0_i32_0 = arith.constant 0 : i32
    return %1, %c0_i32 : i32, i32
  }
  func.func @transform_16(%arg0: i32, %arg1: i32, %arg2: memref<2xi32, #tpu.memory_space<smem>>, %arg3: memref<2xi32, #tpu.memory_space<smem>>) -> (i32, i32) {
    %c1_i32 = arith.constant 1 : i32
    %0 = arith.muli %arg0, %c1_i32 : i32
    %1 = arith.addi %0, %arg1 : i32
    %c0_i32 = arith.constant 0 : i32
    %c0_i32_0 = arith.constant 0 : i32
    return %1, %c0_i32 : i32, i32
  }
  func.func @transform_17(%arg0: i32, %arg1: i32, %arg2: memref<2xi32, #tpu.memory_space<smem>>, %arg3: memref<2xi32, #tpu.memory_space<smem>>) -> (i32, i32) {
    %c0_i32 = arith.constant 0 : i32
    %c0_i32_0 = arith.constant 0 : i32
    return %arg0, %c0_i32 : i32, i32
  }
}

</mosaic_0001>

<llo_original>
// kernel: deep_prior_deformer.2
$region0: #{deep_prior_deformer.2}
  #allocation0 [shape = 'u32[]', space=smem, size = 0x4, offset = 0x4, fixed_abs, tag = 'smem constant byte address 0x4 - core index']
  #allocation1 [shape = 'u32[72,128]{1,0:T(1,128)}', space=vmem, size = 0x9000, scoped, tag = 'internal scratch']
  %s0 = inlined_call_operand.vmem [shape: bf16[64,128], index: 0, kind: input, shape index: {}]
  %s1 = inlined_call_operand.vmem [shape: f32[2,1,384], index: 1, kind: input, shape index: {}]
  %s2 = inlined_call_operand.hbm [shape: bf16[128,384], index: 2, kind: input, shape index: {}]
  %s3 = inlined_call_operand.vmem [shape: bf16[384,256], index: 3, kind: input, shape index: {}]
  %s4 = inlined_call_operand.vmem [shape: f32[1,256], index: 4, kind: input, shape index: {}]
  %s5 = inlined_call_operand.vmem [shape: bf16[256,128], index: 5, kind: input, shape index: {}]
  %s6 = inlined_call_operand.vmem [shape: f32[1,128], index: 6, kind: input, shape index: {}]
  %s7 = inlined_call_operand.vmem [shape: bf16[64,128], index: 7, kind: output, shape index: {}]
  %s8 = sld [smem:[#allocation0]]
  $region42: #{deep_prior_deformer.2} parent=0
    _
  %s10 = ssub.s32 1, %s8
  %s11 = scalar_select 0, %s10, %s8
  $region1: #{deep_prior_deformer.2} parent=0
    #allocation2 [shape = 'u8[98304]{0}', space=vmem, size = 0x18000, scoped, tag = 'input window, operand 2, single buffered']
    #allocation3 [shape = 's32[1]{0}', space=sflag, size = 0x4, scoped, tag = 'scoped memory for deep_prior_deformer.2']
    %12 = vsyncpa [#allocation3], 0
    // Predicated region
    $region2: #{deep_prior_deformer.2} parent=1 // pred_check
      _
    $region3: #{deep_prior_deformer.2} parent=1 // pred_check_branch
      %14 = sbr.rel (0) target = $region5
    $region4: #{deep_prior_deformer.2} parent=1 // pred_region
      _
    $region5: #{deep_prior_deformer.2} parent=1 // pred_fallthru
      _
    // Predicated region
    $region6: #{deep_prior_deformer.2} parent=1 // pred_check
      _
    $region7: #{deep_prior_deformer.2} parent=1 // pred_check_branch
      %16 = sbr.rel (0) target = $region9
    $region8: #{deep_prior_deformer.2} parent=1 // pred_region
      _
    $region9: #{deep_prior_deformer.2} parent=1 // pred_fallthru
      _
    // Predicated region
    $region10: #{deep_prior_deformer.2} parent=1 // pred_check
      _
    $region11: #{deep_prior_deformer.2} parent=1 // pred_check_branch
      %18 = sbr.rel (0) target = $region13
    $region12: #{deep_prior_deformer.2} parent=1 // pred_region
      %20 = vsyncadd [#allocation3], 0
      %s21 = sshll.u32 %s2, 4
      %s22 = int_to_ptr.hbm [resolvable:$true] %s21
      %s23 = sshll.u32 [#allocation2], 4
      %s24 = int_to_ptr.vmem [resolvable:$true] %s23
      %29 = dma.hbm_to_vmem [thread:$0]  %s22, 3072, %s24, [#allocation3], 192, 192, 12
    $region13: #{deep_prior_deformer.2} parent=1 // pred_fallthru
      _
    // Predicated region
    $region14: #{deep_prior_deformer.2} parent=1 // pred_check
      _
    $region15: #{deep_prior_deformer.2} parent=1 // pred_check_branch
      %31 = sbr.rel (0) target = $region17
    $region16: #{deep_prior_deformer.2} parent=1 // pred_region
      _
    $region17: #{deep_prior_deformer.2} parent=1 // pred_fallthru
      _
    // Predicated region
    $region18: #{deep_prior_deformer.2} parent=1 // pred_check
      _
    $region19: #{deep_prior_deformer.2} parent=1 // pred_check_branch
      %33 = sbr.rel (0) target = $region21
    $region20: #{deep_prior_deformer.2} parent=1 // pred_region
      _
    $region21: #{deep_prior_deformer.2} parent=1 // pred_fallthru
      _
    // Predicated region
    $region22: #{deep_prior_deformer.2} parent=1 // pred_check
      _
    $region23: #{deep_prior_deformer.2} parent=1 // pred_check_branch
      %35 = sbr.rel (0) target = $region25
    $region24: #{deep_prior_deformer.2} parent=1 // pred_region
      _
    $region25: #{deep_prior_deformer.2} parent=1 // pred_fallthru
      _
    // Predicated region
    $region26: #{deep_prior_deformer.2} parent=1 // pred_check
      _
    $region27: #{deep_prior_deformer.2} parent=1 // pred_check_branch
      %37 = sbr.rel (0) target = $region29
    $region28: #{deep_prior_deformer.2} parent=1 // pred_region
      _
    $region29: #{deep_prior_deformer.2} parent=1 // pred_fallthru
      _
    // Predicated region
    $region30: #{deep_prior_deformer.2} parent=1 // pred_check
      _
    $region31: #{deep_prior_deformer.2} parent=1 // pred_check_branch
      %39 = sbr.rel (0) target = $region33
    $region32: #{deep_prior_deformer.2} parent=1 // pred_region
      %41 = dma.done [#allocation3], 3072
    $region33: #{deep_prior_deformer.2} parent=1 // pred_fallthru
      _
    %v42 = vld [vmem:[%s0] sm:$0xf]
    %v43 = vld [vmem:[%s0 + $0x4] sm:$0xf]
    %v44 = vld [vmem:[%s0 + $0x8] sm:$0xf]
    %v45 = vld [vmem:[%s0 + $0xc] sm:$0xf]
    %v46 = vld [vmem:[%s0 + $0x10] sm:$0xf]
    %v47 = vld [vmem:[%s0 + $0x14] sm:$0xf]
    %v48 = vld [vmem:[%s0 + $0x18] sm:$0xf]
    %v49 = vld [vmem:[%s0 + $0x1c] sm:$0xf]
    %v50 = vld [vmem:[%s1] sm:$0x7]
    %v51 = vld [vmem:[%s1 + $0x3] sm:$0x7]
    %v52 = vld [vmem:[#allocation2] sm:$0xff]
    %v53 = vld [vmem:[#allocation2 + $0x8] sm:$0xf]
    %v54 = vld [vmem:[#allocation2 + $0xc] sm:$0xff]
    %v55 = vld [vmem:[#allocation2 + $0x14] sm:$0xf]
    %v56 = vld [vmem:[#allocation2 + $0x18] sm:$0xff]
    %v57 = vld [vmem:[#allocation2 + $0x20] sm:$0xf]
    %v58 = vld [vmem:[#allocation2 + $0x24] sm:$0xff]
    %v59 = vld [vmem:[#allocation2 + $0x2c] sm:$0xf]
    %v60 = vld [vmem:[#allocation2 + $0x30] sm:$0xff]
    %v61 = vld [vmem:[#allocation2 + $0x38] sm:$0xf]
    %v62 = vld [vmem:[#allocation2 + $0x3c] sm:$0xff]
    %v63 = vld [vmem:[#allocation2 + $0x44] sm:$0xf]
    %v64 = vld [vmem:[#allocation2 + $0x48] sm:$0xff]
    %v65 = vld [vmem:[#allocation2 + $0x50] sm:$0xf]
    %v66 = vld [vmem:[#allocation2 + $0x54] sm:$0xff]
    %v67 = vld [vmem:[#allocation2 + $0x5c] sm:$0xf]
    %v68 = vld [vmem:[#allocation2 + $0x60] sm:$0xff]
    %v69 = vld [vmem:[#allocation2 + $0x68] sm:$0xf]
    %v70 = vld [vmem:[#allocation2 + $0x6c] sm:$0xff]
    %v71 = vld [vmem:[#allocation2 + $0x74] sm:$0xf]
    %v72 = vld [vmem:[#allocation2 + $0x78] sm:$0xff]
    %v73 = vld [vmem:[#allocation2 + $0x80] sm:$0xf]
    %v74 = vld [vmem:[#allocation2 + $0x84] sm:$0xff]
    %v75 = vld [vmem:[#allocation2 + $0x8c] sm:$0xf]
    %v76 = vld [vmem:[#allocation2 + $0x90] sm:$0xff]
    %v77 = vld [vmem:[#allocation2 + $0x98] sm:$0xf]
    %v78 = vld [vmem:[#allocation2 + $0x9c] sm:$0xff]
    %v79 = vld [vmem:[#allocation2 + $0xa4] sm:$0xf]
    %v80 = vld [vmem:[#allocation2 + $0xa8] sm:$0xff]
    %v81 = vld [vmem:[#allocation2 + $0xb0] sm:$0xf]
    %v82 = vld [vmem:[#allocation2 + $0xb4] sm:$0xff]
    %v83 = vld [vmem:[#allocation2 + $0xbc] sm:$0xf]
    %v92 = vunpack.c.l.b16 %v42
    %v93 = vunpack.c.l.b16 %v43
    %v94 = vunpack.c.l.b16 %v44
    %v95 = vunpack.c.l.b16 %v45
    %v96 = vunpack.c.l.b16 %v46
    %v97 = vunpack.c.l.b16 %v47
    %v98 = vunpack.c.l.b16 %v48
    %v99 = vunpack.c.l.b16 %v49
    %v100 = vpack.c.b16 %v93, %v92
    %v101 = vpack.c.b16 %v95, %v94
    %v102 = vpack.c.b16 %v97, %v96
    %v103 = vpack.c.b16 %v99, %v98
    %v140 = vunpack.c.l.b16 %v52
    %v141 = vunpack.c.h.b16 %v52
    %v142 = vunpack.c.l.b16 %v53
    %v143 = vunpack.c.l.b16 %v54
    %v144 = vunpack.c.h.b16 %v54
    %v145 = vunpack.c.l.b16 %v55
    %v146 = vunpack.c.l.b16 %v56
    %v147 = vunpack.c.h.b16 %v56
    %v148 = vunpack.c.l.b16 %v57
    %v149 = vunpack.c.l.b16 %v58
    %v150 = vunpack.c.h.b16 %v58
    %v151 = vunpack.c.l.b16 %v59
    %v152 = vunpack.c.l.b16 %v60
    %v153 = vunpack.c.h.b16 %v60
    %v154 = vunpack.c.l.b16 %v61
    %v155 = vunpack.c.l.b16 %v62
    %v156 = vunpack.c.h.b16 %v62
    %v157 = vunpack.c.l.b16 %v63
    %v158 = vunpack.c.l.b16 %v64
    %v159 = vunpack.c.h.b16 %v64
    %v160 = vunpack.c.l.b16 %v65
    %v161 = vunpack.c.l.b16 %v66
    %v162 = vunpack.c.h.b16 %v66
    %v163 = vunpack.c.l.b16 %v67
    %v164 = vunpack.c.l.b16 %v68
    %v165 = vunpack.c.h.b16 %v68
    %v166 = vunpack.c.l.b16 %v69
    %v167 = vunpack.c.l.b16 %v70
    %v168 = vunpack.c.h.b16 %v70
    %v169 = vunpack.c.l.b16 %v71
    %v170 = vunpack.c.l.b16 %v72
    %v171 = vunpack.c.h.b16 %v72
    %v172 = vunpack.c.l.b16 %v73
    %v173 = vunpack.c.l.b16 %v74
    %v174 = vunpack.c.h.b16 %v74
    %v175 = vunpack.c.l.b16 %v75
    %v176 = vunpack.c.l.b16 %v76
    %v177 = vunpack.c.h.b16 %v76
    %v178 = vunpack.c.l.b16 %v77
    %v179 = vunpack.c.l.b16 %v78
    %v180 = vunpack.c.h.b16 %v78
    %v181 = vunpack.c.l.b16 %v79
    %v182 = vunpack.c.l.b16 %v80
    %v183 = vunpack.c.h.b16 %v80
    %v184 = vunpack.c.l.b16 %v81
    %v185 = vunpack.c.l.b16 %v82
    %v186 = vunpack.c.h.b16 %v82
    %v187 = vunpack.c.l.b16 %v83
    %v188 = vpack.c.b16 %v143, %v140
    %v189 = vpack.c.b16 %v144, %v141
    %v190 = vpack.c.b16 %v145, %v142
    %v191 = vpack.c.b16 %v149, %v146
    %v192 = vpack.c.b16 %v150, %v147
    %v193 = vpack.c.b16 %v151, %v148
    %v194 = vpack.c.b16 %v155, %v152
    %v195 = vpack.c.b16 %v156, %v153
    %v196 = vpack.c.b16 %v157, %v154
    %v197 = vpack.c.b16 %v161, %v158
    %v198 = vpack.c.b16 %v162, %v159
    %v199 = vpack.c.b16 %v163, %v160
    %v200 = vpack.c.b16 %v167, %v164
    %v201 = vpack.c.b16 %v168, %v165
    %v202 = vpack.c.b16 %v169, %v166
    %v203 = vpack.c.b16 %v173, %v170
    %v204 = vpack.c.b16 %v174, %v171
    %v205 = vpack.c.b16 %v175, %v172
    %v206 = vpack.c.b16 %v179, %v176
    %v207 = vpack.c.b16 %v180, %v177
    %v208 = vpack.c.b16 %v181, %v178
    %v209 = vpack.c.b16 %v185, %v182
    %v210 = vpack.c.b16 %v186, %v183
    %v211 = vpack.c.b16 %v187, %v184
    %236 = vmatpush.bf16.msra.mxu0 %v209
    %237 = vmatpush.bf16.msra.mxu0 %v206
    %238 = vmatpush.bf16.msra.mxu0 %v203
    %239 = vmatpush.bf16.msra.mxu0 %v200
    %240 = vmatpush.bf16.msra.mxu0 %v197
    %241 = vmatpush.bf16.msra.mxu0 %v194
    %242 = vmatpush.bf16.msra.mxu0 %v191
    %243 = vmatpush.bf16.msra.mxu0 %v188
    %244 = vmatmul.bf16.gmra.mxu0 %v100
    %v245 = vpop.f32.mrf.mxu0
    %v246 = vadd.f32 0.0, %v245
    %v247 = vpop.f32.mrf.mxu0
    %v248 = vadd.f32 0.0, %v247
    %249 = vmatmul.bf16.gmra.mxu0 %v101
    %v250 = vpop.f32.mrf.mxu0
    %v251 = vadd.f32 0.0, %v250
    %v252 = vpop.f32.mrf.mxu0
    %v253 = vadd.f32 0.0, %v252
    %254 = vmatmul.bf16.gmra.mxu0 %v102
    %v255 = vpop.f32.mrf.mxu0
    %v256 = vadd.f32 0.0, %v255
    %v257 = vpop.f32.mrf.mxu0
    %v258 = vadd.f32 0.0, %v257
    %259 = vmatmul.bf16.gmra.mxu0 %v103
    %v260 = vpop.f32.mrf.mxu0
    %v261 = vadd.f32 0.0, %v260
    %v262 = vpop.f32.mrf.mxu0
    %v263 = vadd.f32 0.0, %v262
    %264 = vdwg.mxu0
    %265 = vmatpush.bf16.msra.mxu0 %v210
    %266 = vmatpush.bf16.msra.mxu0 %v207
    %267 = vmatpush.bf16.msra.mxu0 %v204
    %268 = vmatpush.bf16.msra.mxu0 %v201
    %269 = vmatpush.bf16.msra.mxu0 %v198
    %270 = vmatpush.bf16.msra.mxu0 %v195
    %271 = vmatpush.bf16.msra.mxu0 %v192
    %272 = vmatpush.bf16.msra.mxu0 %v189
    %273 = vmatmul.bf16.gmra.mxu0 %v100
    %v274 = vpop.f32.mrf.mxu0
    %v275 = vadd.f32 0.0, %v274
    %v276 = vpop.f32.mrf.mxu0
    %v277 = vadd.f32 0.0, %v276
    %278 = vmatmul.bf16.gmra.mxu0 %v101
    %v279 = vpop.f32.mrf.mxu0
    %v280 = vadd.f32 0.0, %v279
    %v281 = vpop.f32.mrf.mxu0
    %v282 = vadd.f32 0.0, %v281
    %283 = vmatmul.bf16.gmra.mxu0 %v102
    %v284 = vpop.f32.mrf.mxu0
    %v285 = vadd.f32 0.0, %v284
    %v286 = vpop.f32.mrf.mxu0
    %v287 = vadd.f32 0.0, %v286
    %288 = vmatmul.bf16.gmra.mxu0 %v103
    %v289 = vpop.f32.mrf.mxu0
    %v290 = vadd.f32 0.0, %v289
    %v291 = vpop.f32.mrf.mxu0
    %v292 = vadd.f32 0.0, %v291
    %293 = vdwg.mxu0
    %294 = vmatpush.bf16.msra.mxu0 %v211
    %295 = vmatpush.bf16.msra.mxu0 %v208
    %296 = vmatpush.bf16.msra.mxu0 %v205
    %297 = vmatpush.bf16.msra.mxu0 %v202
    %298 = vmatpush.bf16.msra.mxu0 %v199
    %299 = vmatpush.bf16.msra.mxu0 %v196
    %300 = vmatpush.bf16.msra.mxu0 %v193
    %301 = vmatpush.bf16.msra.mxu0 %v190
    %302 = vmatmul.bf16.gmra.mxu0 %v100
    %v303 = vpop.f32.mrf.mxu0
    %v304 = vadd.f32 0.0, %v303
    %v305 = vpop.f32.mrf.mxu0
    %v306 = vadd.f32 0.0, %v305
    %307 = vmatmul.bf16.gmra.mxu0 %v101
    %v308 = vpop.f32.mrf.mxu0
    %v309 = vadd.f32 0.0, %v308
    %v310 = vpop.f32.mrf.mxu0
    %v311 = vadd.f32 0.0, %v310
    %312 = vmatmul.bf16.gmra.mxu0 %v102
    %v313 = vpop.f32.mrf.mxu0
    %v314 = vadd.f32 0.0, %v313
    %v315 = vpop.f32.mrf.mxu0
    %v316 = vadd.f32 0.0, %v315
    %317 = vmatmul.bf16.gmra.mxu0 %v103
    %v318 = vpop.f32.mrf.mxu0
    %v319 = vadd.f32 0.0, %v318
    %v320 = vpop.f32.mrf.mxu0
    %v321 = vadd.f32 0.0, %v320
    %322 = vdwg.mxu0
    %v324 = vperm.slane %v50, 0
    %v325 = vperm.slane %v50, 1
    %v326 = vperm.slane %v50, 2
    %v330 = vadd.f32 %v246, %v324
    %v331 = vadd.f32 %v275, %v325
    %v332 = vadd.f32 %v304, %v326
    %v333 = vadd.f32 %v248, %v324
    %v334 = vadd.f32 %v277, %v325
    %v335 = vadd.f32 %v306, %v326
    %v336 = vadd.f32 %v251, %v324
    %v337 = vadd.f32 %v280, %v325
    %v338 = vadd.f32 %v309, %v326
    %v339 = vadd.f32 %v253, %v324
    %v340 = vadd.f32 %v282, %v325
    %v341 = vadd.f32 %v311, %v326
    %v342 = vmax.f32 %v330, 0.0
    %v343 = vmax.f32 %v331, 0.0
    %v344 = vmax.f32 %v332, 0.0
    %v345 = vmax.f32 %v333, 0.0
    %v346 = vmax.f32 %v334, 0.0
    %v347 = vmax.f32 %v335, 0.0
    %v348 = vmax.f32 %v336, 0.0
    %v349 = vmax.f32 %v337, 0.0
    %v350 = vmax.f32 %v338, 0.0
    %v351 = vmax.f32 %v339, 0.0
    %v352 = vmax.f32 %v340, 0.0
    %v353 = vmax.f32 %v341, 0.0
    %v355 = vperm.slane %v51, 0
    %v356 = vperm.slane %v51, 1
    %v357 = vperm.slane %v51, 2
    %v361 = vadd.f32 %v256, %v355
    %v362 = vadd.f32 %v285, %v356
    %v363 = vadd.f32 %v314, %v357
    %v364 = vadd.f32 %v258, %v355
    %v365 = vadd.f32 %v287, %v356
    %v366 = vadd.f32 %v316, %v357
    %v367 = vadd.f32 %v261, %v355
    %v368 = vadd.f32 %v290, %v356
    %v369 = vadd.f32 %v319, %v357
    %v370 = vadd.f32 %v263, %v355
    %v371 = vadd.f32 %v292, %v356
    %v372 = vadd.f32 %v321, %v357
    %v373 = vmax.f32 %v361, 0.0
    %v374 = vmax.f32 %v362, 0.0
    %v375 = vmax.f32 %v363, 0.0
    %v376 = vmax.f32 %v364, 0.0
    %v377 = vmax.f32 %v365, 0.0
    %v378 = vmax.f32 %v366, 0.0
    %v379 = vmax.f32 %v367, 0.0
    %v380 = vmax.f32 %v368, 0.0
    %v381 = vmax.f32 %v369, 0.0
    %v382 = vmax.f32 %v370, 0.0
    %v383 = vmax.f32 %v371, 0.0
    %v384 = vmax.f32 %v372, 0.0
    %v385 = vpack.c.bf16 %v345, %v342
    %v386 = vpack.c.bf16 %v346, %v343
    %v387 = vpack.c.bf16 %v347, %v344
    %v388 = vpack.c.bf16 %v351, %v348
    %v389 = vpack.c.bf16 %v352, %v349
    %v390 = vpack.c.bf16 %v353, %v350
    %v391 = vpack.c.bf16 %v376, %v373
    %v392 = vpack.c.bf16 %v377, %v374
    %v393 = vpack.c.bf16 %v378, %v375
    %v394 = vpack.c.bf16 %v382, %v379
    %v395 = vpack.c.bf16 %v383, %v380
    %v396 = vpack.c.bf16 %v384, %v381
    %v397 = vld [vmem:[%s3] sm:$0xff]
    %v398 = vld [vmem:[%s3 + $0x8] sm:$0xff]
    %v399 = vld [vmem:[%s3 + $0x10] sm:$0xff]
    %v400 = vld [vmem:[%s3 + $0x18] sm:$0xff]
    %v401 = vld [vmem:[%s3 + $0x20] sm:$0xff]
    %v402 = vld [vmem:[%s3 + $0x28] sm:$0xff]
    %v403 = vld [vmem:[%s3 + $0x30] sm:$0xff]
    %v404 = vld [vmem:[%s3 + $0x38] sm:$0xff]
    %v405 = vld [vmem:[%s3 + $0x40] sm:$0xff]
    %v406 = vld [vmem:[%s3 + $0x48] sm:$0xff]
    %v407 = vld [vmem:[%s3 + $0x50] sm:$0xff]
    %v408 = vld [vmem:[%s3 + $0x58] sm:$0xff]
    %v409 = vld [vmem:[%s3 + $0x60] sm:$0xff]
    %v410 = vld [vmem:[%s3 + $0x68] sm:$0xff]
    %v411 = vld [vmem:[%s3 + $0x70] sm:$0xff]
    %v412 = vld [vmem:[%s3 + $0x78] sm:$0xff]
    %v413 = vld [vmem:[%s3 + $0x80] sm:$0xff]
    %v414 = vld [vmem:[%s3 + $0x88] sm:$0xff]
    %v415 = vld [vmem:[%s3 + $0x90] sm:$0xff]
    %v416 = vld [vmem:[%s3 + $0x98] sm:$0xff]
    %v417 = vld [vmem:[%s3 + $0xa0] sm:$0xff]
    %v418 = vld [vmem:[%s3 + $0xa8] sm:$0xff]
    %v419 = vld [vmem:[%s3 + $0xb0] sm:$0xff]
    %v420 = vld [vmem:[%s3 + $0xb8] sm:$0xff]
    %v421 = vld [vmem:[%s3 + $0xc0] sm:$0xff]
    %v422 = vld [vmem:[%s3 + $0xc8] sm:$0xff]
    %v423 = vld [vmem:[%s3 + $0xd0] sm:$0xff]
    %v424 = vld [vmem:[%s3 + $0xd8] sm:$0xff]
    %v425 = vld [vmem:[%s3 + $0xe0] sm:$0xff]
    %v426 = vld [vmem:[%s3 + $0xe8] sm:$0xff]
    %v427 = vld [vmem:[%s3 + $0xf0] sm:$0xff]
    %v428 = vld [vmem:[%s3 + $0xf8] sm:$0xff]
    %v429 = vld [vmem:[%s3 + $0x100] sm:$0xff]
    %v430 = vld [vmem:[%s3 + $0x108] sm:$0xff]
    %v431 = vld [vmem:[%s3 + $0x110] sm:$0xff]
    %v432 = vld [vmem:[%s3 + $0x118] sm:$0xff]
    %v433 = vld [vmem:[%s3 + $0x120] sm:$0xff]
    %v434 = vld [vmem:[%s3 + $0x128] sm:$0xff]
    %v435 = vld [vmem:[%s3 + $0x130] sm:$0xff]
    %v436 = vld [vmem:[%s3 + $0x138] sm:$0xff]
    %v437 = vld [vmem:[%s3 + $0x140] sm:$0xff]
    %v438 = vld [vmem:[%s3 + $0x148] sm:$0xff]
    %v439 = vld [vmem:[%s3 + $0x150] sm:$0xff]
    %v440 = vld [vmem:[%s3 + $0x158] sm:$0xff]
    %v441 = vld [vmem:[%s3 + $0x160] sm:$0xff]
    %v442 = vld [vmem:[%s3 + $0x168] sm:$0xff]
    %v443 = vld [vmem:[%s3 + $0x170] sm:$0xff]
    %v444 = vld [vmem:[%s3 + $0x178] sm:$0xff]
    %v445 = vld [vmem:[%s4] sm:$0x3]
    %v447 = vperm.slane %v445, 0
    %v448 = vperm.slane %v445, 1
    %v499 = vunpack.c.l.b16 %v397
    %v500 = vunpack.c.h.b16 %v397
    %v501 = vunpack.c.l.b16 %v398
    %v502 = vunpack.c.h.b16 %v398
    %v503 = vunpack.c.l.b16 %v399
    %v504 = vunpack.c.h.b16 %v399
    %v505 = vunpack.c.l.b16 %v400
    %v506 = vunpack.c.h.b16 %v400
    %v507 = vunpack.c.l.b16 %v401
    %v508 = vunpack.c.h.b16 %v401
    %v509 = vunpack.c.l.b16 %v402
    %v510 = vunpack.c.h.b16 %v402
    %v511 = vunpack.c.l.b16 %v403
    %v512 = vunpack.c.h.b16 %v403
    %v513 = vunpack.c.l.b16 %v404
    %v514 = vunpack.c.h.b16 %v404
    %v515 = vunpack.c.l.b16 %v405
    %v516 = vunpack.c.h.b16 %v405
    %v517 = vunpack.c.l.b16 %v406
    %v518 = vunpack.c.h.b16 %v406
    %v519 = vunpack.c.l.b16 %v407
    %v520 = vunpack.c.h.b16 %v407
    %v521 = vunpack.c.l.b16 %v408
    %v522 = vunpack.c.h.b16 %v408
    %v523 = vunpack.c.l.b16 %v409
    %v524 = vunpack.c.h.b16 %v409
    %v525 = vunpack.c.l.b16 %v410
    %v526 = vunpack.c.h.b16 %v410
    %v527 = vunpack.c.l.b16 %v411
    %v528 = vunpack.c.h.b16 %v411
    %v529 = vunpack.c.l.b16 %v412
    %v530 = vunpack.c.h.b16 %v412
    %v531 = vunpack.c.l.b16 %v413
    %v532 = vunpack.c.h.b16 %v413
    %v533 = vunpack.c.l.b16 %v414
    %v534 = vunpack.c.h.b16 %v414
    %v535 = vunpack.c.l.b16 %v415
    %v536 = vunpack.c.h.b16 %v415
    %v537 = vunpack.c.l.b16 %v416
    %v538 = vunpack.c.h.b16 %v416
    %v539 = vunpack.c.l.b16 %v417
    %v540 = vunpack.c.h.b16 %v417
    %v541 = vunpack.c.l.b16 %v418
    %v542 = vunpack.c.h.b16 %v418
    %v543 = vunpack.c.l.b16 %v419
    %v544 = vunpack.c.h.b16 %v419
    %v545 = vunpack.c.l.b16 %v420
    %v546 = vunpack.c.h.b16 %v420
    %v547 = vunpack.c.l.b16 %v421
    %v548 = vunpack.c.h.b16 %v421
    %v549 = vunpack.c.l.b16 %v422
    %v550 = vunpack.c.h.b16 %v422
    %v551 = vunpack.c.l.b16 %v423
    %v552 = vunpack.c.h.b16 %v423
    %v553 = vunpack.c.l.b16 %v424
    %v554 = vunpack.c.h.b16 %v424
    %v555 = vunpack.c.l.b16 %v425
    %v556 = vunpack.c.h.b16 %v425
    %v557 = vunpack.c.l.b16 %v426
    %v558 = vunpack.c.h.b16 %v426
    %v559 = vunpack.c.l.b16 %v427
    %v560 = vunpack.c.h.b16 %v427
    %v561 = vunpack.c.l.b16 %v428
    %v562 = vunpack.c.h.b16 %v428
    %v563 = vunpack.c.l.b16 %v429
    %v564 = vunpack.c.h.b16 %v429
    %v565 = vunpack.c.l.b16 %v430
    %v566 = vunpack.c.h.b16 %v430
    %v567 = vunpack.c.l.b16 %v431
    %v568 = vunpack.c.h.b16 %v431
    %v569 = vunpack.c.l.b16 %v432
    %v570 = vunpack.c.h.b16 %v432
    %v571 = vunpack.c.l.b16 %v433
    %v572 = vunpack.c.h.b16 %v433
    %v573 = vunpack.c.l.b16 %v434
    %v574 = vunpack.c.h.b16 %v434
    %v575 = vunpack.c.l.b16 %v435
    %v576 = vunpack.c.h.b16 %v435
    %v577 = vunpack.c.l.b16 %v436
    %v578 = vunpack.c.h.b16 %v436
    %v579 = vunpack.c.l.b16 %v437
    %v580 = vunpack.c.h.b16 %v437
    %v581 = vunpack.c.l.b16 %v438
    %v582 = vunpack.c.h.b16 %v438
    %v583 = vunpack.c.l.b16 %v439
    %v584 = vunpack.c.h.b16 %v439
    %v585 = vunpack.c.l.b16 %v440
    %v586 = vunpack.c.h.b16 %v440
    %v587 = vunpack.c.l.b16 %v441
    %v588 = vunpack.c.h.b16 %v441
    %v589 = vunpack.c.l.b16 %v442
    %v590 = vunpack.c.h.b16 %v442
    %v591 = vunpack.c.l.b16 %v443
    %v592 = vunpack.c.h.b16 %v443
    %v593 = vunpack.c.l.b16 %v444
    %v594 = vunpack.c.h.b16 %v444
    %v595 = vpack.c.b16 %v501, %v499
    %v596 = vpack.c.b16 %v502, %v500
    %v597 = vpack.c.b16 %v505, %v503
    %v598 = vpack.c.b16 %v506, %v504
    %v599 = vpack.c.b16 %v509, %v507
    %v600 = vpack.c.b16 %v510, %v508
    %v601 = vpack.c.b16 %v513, %v511
    %v602 = vpack.c.b16 %v514, %v512
    %v603 = vpack.c.b16 %v517, %v515
    %v604 = vpack.c.b16 %v518, %v516
    %v605 = vpack.c.b16 %v521, %v519
    %v606 = vpack.c.b16 %v522, %v520
    %v607 = vpack.c.b16 %v525, %v523
    %v608 = vpack.c.b16 %v526, %v524
    %v609 = vpack.c.b16 %v529, %v527
    %v610 = vpack.c.b16 %v530, %v528
    %v611 = vpack.c.b16 %v533, %v531
    %v612 = vpack.c.b16 %v534, %v532
    %v613 = vpack.c.b16 %v537, %v535
    %v614 = vpack.c.b16 %v538, %v536
    %v615 = vpack.c.b16 %v541, %v539
    %v616 = vpack.c.b16 %v542, %v540
    %v617 = vpack.c.b16 %v545, %v543
    %v618 = vpack.c.b16 %v546, %v544
    %v619 = vpack.c.b16 %v549, %v547
    %v620 = vpack.c.b16 %v550, %v548
    %v621 = vpack.c.b16 %v553, %v551
    %v622 = vpack.c.b16 %v554, %v552
    %v623 = vpack.c.b16 %v557, %v555
    %v624 = vpack.c.b16 %v558, %v556
    %v625 = vpack.c.b16 %v561, %v559
    %v626 = vpack.c.b16 %v562, %v560
    %v627 = vpack.c.b16 %v565, %v563
    %v628 = vpack.c.b16 %v566, %v564
    %v629 = vpack.c.b16 %v569, %v567
    %v630 = vpack.c.b16 %v570, %v568
    %v631 = vpack.c.b16 %v573, %v571
    %v632 = vpack.c.b16 %v574, %v572
    %v633 = vpack.c.b16 %v577, %v575
    %v634 = vpack.c.b16 %v578, %v576
    %v635 = vpack.c.b16 %v581, %v579
    %v636 = vpack.c.b16 %v582, %v580
    %v637 = vpack.c.b16 %v585, %v583
    %v638 = vpack.c.b16 %v586, %v584
    %v639 = vpack.c.b16 %v589, %v587
    %v640 = vpack.c.b16 %v590, %v588
    %v641 = vpack.c.b16 %v593, %v591
    %v642 = vpack.c.b16 %v594, %v592
    %691 = vmatpush.bf16.msra.mxu0 %v609
    %692 = vmatpush.bf16.msra.mxu0 %v607
    %693 = vmatpush.bf16.msra.mxu0 %v605
    %694 = vmatpush.bf16.msra.mxu0 %v603
    %695 = vmatpush.bf16.msra.mxu0 %v601
    %696 = vmatpush.bf16.msra.mxu0 %v599
    %697 = vmatpush.bf16.msra.mxu0 %v597
    %698 = vmatpush.bf16.msra.mxu0 %v595
    %699 = vmatmul.bf16.gmra.mxu0 %v385
    %v700 = vpop.f32.mrf.mxu0
    %v701 = vadd.f32 %v447, %v700
    %v702 = vpop.f32.mrf.mxu0
    %v703 = vadd.f32 %v447, %v702
    %704 = vmatmul.bf16.gmra.mxu0 %v388
    %v705 = vpop.f32.mrf.mxu0
    %v706 = vadd.f32 %v447, %v705
    %v707 = vpop.f32.mrf.mxu0
    %v708 = vadd.f32 %v447, %v707
    %709 = vmatmul.bf16.gmra.mxu0 %v391
    %v710 = vpop.f32.mrf.mxu0
    %v711 = vadd.f32 %v447, %v710
    %v712 = vpop.f32.mrf.mxu0
    %v713 = vadd.f32 %v447, %v712
    %714 = vmatmul.bf16.gmra.mxu0 %v394
    %v715 = vpop.f32.mrf.mxu0
    %v716 = vadd.f32 %v447, %v715
    %v717 = vpop.f32.mrf.mxu0
    %v718 = vadd.f32 %v447, %v717
    %719 = vdwg.mxu0
    %720 = vmatpush.bf16.msra.mxu0 %v625
    %721 = vmatpush.bf16.msra.mxu0 %v623
    %722 = vmatpush.bf16.msra.mxu0 %v621
    %723 = vmatpush.bf16.msra.mxu0 %v619
    %724 = vmatpush.bf16.msra.mxu0 %v617
    %725 = vmatpush.bf16.msra.mxu0 %v615
    %726 = vmatpush.bf16.msra.mxu0 %v613
    %727 = vmatpush.bf16.msra.mxu0 %v611
    %728 = vmatmul.bf16.gmra.mxu0 %v386
    %v729 = vpop.f32.mrf.mxu0
    %v730 = vadd.f32 %v701, %v729
    %v731 = vpop.f32.mrf.mxu0
    %v732 = vadd.f32 %v703, %v731
    %733 = vmatmul.bf16.gmra.mxu0 %v389
    %v734 = vpop.f32.mrf.mxu0
    %v735 = vadd.f32 %v706, %v734
    %v736 = vpop.f32.mrf.mxu0
    %v737 = vadd.f32 %v708, %v736
    %738 = vmatmul.bf16.gmra.mxu0 %v392
    %v739 = vpop.f32.mrf.mxu0
    %v740 = vadd.f32 %v711, %v739
    %v741 = vpop.f32.mrf.mxu0
    %v742 = vadd.f32 %v713, %v741
    %743 = vmatmul.bf16.gmra.mxu0 %v395
    %v744 = vpop.f32.mrf.mxu0
    %v745 = vadd.f32 %v716, %v744
    %v746 = vpop.f32.mrf.mxu0
    %v747 = vadd.f32 %v718, %v746
    %748 = vdwg.mxu0
    %749 = vmatpush.bf16.msra.mxu0 %v641
    %750 = vmatpush.bf16.msra.mxu0 %v639
    %751 = vmatpush.bf16.msra.mxu0 %v637
    %752 = vmatpush.bf16.msra.mxu0 %v635
    %753 = vmatpush.bf16.msra.mxu0 %v633
    %754 = vmatpush.bf16.msra.mxu0 %v631
    %755 = vmatpush.bf16.msra.mxu0 %v629
    %756 = vmatpush.bf16.msra.mxu0 %v627
    %757 = vmatmul.bf16.gmra.mxu0 %v387
    %v758 = vpop.f32.mrf.mxu0
    %v759 = vadd.f32 %v730, %v758
    %v760 = vpop.f32.mrf.mxu0
    %v761 = vadd.f32 %v732, %v760
    %762 = vmatmul.bf16.gmra.mxu0 %v390
    %v763 = vpop.f32.mrf.mxu0
    %v764 = vadd.f32 %v735, %v763
    %v765 = vpop.f32.mrf.mxu0
    %v766 = vadd.f32 %v737, %v765
    %767 = vmatmul.bf16.gmra.mxu0 %v393
    %v768 = vpop.f32.mrf.mxu0
    %v769 = vadd.f32 %v740, %v768
    %v770 = vpop.f32.mrf.mxu0
    %v771 = vadd.f32 %v742, %v770
    %772 = vmatmul.bf16.gmra.mxu0 %v396
    %v773 = vpop.f32.mrf.mxu0
    %v774 = vadd.f32 %v745, %v773
    %v775 = vpop.f32.mrf.mxu0
    %v776 = vadd.f32 %v747, %v775
    %777 = vdwg.mxu0
    %778 = vmatpush.bf16.msra.mxu0 %v610
    %779 = vmatpush.bf16.msra.mxu0 %v608
    %780 = vmatpush.bf16.msra.mxu0 %v606
    %781 = vmatpush.bf16.msra.mxu0 %v604
    %782 = vmatpush.bf16.msra.mxu0 %v602
    %783 = vmatpush.bf16.msra.mxu0 %v600
    %784 = vmatpush.bf16.msra.mxu0 %v598
    %785 = vmatpush.bf16.msra.mxu0 %v596
    %786 = vmatmul.bf16.gmra.mxu0 %v385
    %v787 = vpop.f32.mrf.mxu0
    %v788 = vadd.f32 %v448, %v787
    %v789 = vpop.f32.mrf.mxu0
    %v790 = vadd.f32 %v448, %v789
    %791 = vmatmul.bf16.gmra.mxu0 %v388
    %v792 = vpop.f32.mrf.mxu0
    %v793 = vadd.f32 %v448, %v792
    %v794 = vpop.f32.mrf.mxu0
    %v795 = vadd.f32 %v448, %v794
    %796 = vmatmul.bf16.gmra.mxu0 %v391
    %v797 = vpop.f32.mrf.mxu0
    %v798 = vadd.f32 %v448, %v797
    %v799 = vpop.f32.mrf.mxu0
    %v800 = vadd.f32 %v448, %v799
    %801 = vmatmul.bf16.gmra.mxu0 %v394
    %v802 = vpop.f32.mrf.mxu0
    %v803 = vadd.f32 %v448, %v802
    %v804 = vpop.f32.mrf.mxu0
    %v805 = vadd.f32 %v448, %v804
    %806 = vdwg.mxu0
    %807 = vmatpush.bf16.msra.mxu0 %v626
    %808 = vmatpush.bf16.msra.mxu0 %v624
    %809 = vmatpush.bf16.msra.mxu0 %v622
    %810 = vmatpush.bf16.msra.mxu0 %v620
    %811 = vmatpush.bf16.msra.mxu0 %v618
    %812 = vmatpush.bf16.msra.mxu0 %v616
    %813 = vmatpush.bf16.msra.mxu0 %v614
    %814 = vmatpush.bf16.msra.mxu0 %v612
    %815 = vmatmul.bf16.gmra.mxu0 %v386
    %v816 = vpop.f32.mrf.mxu0
    %v817 = vadd.f32 %v788, %v816
    %v818 = vpop.f32.mrf.mxu0
    %v819 = vadd.f32 %v790, %v818
    %820 = vmatmul.bf16.gmra.mxu0 %v389
    %v821 = vpop.f32.mrf.mxu0
    %v822 = vadd.f32 %v793, %v821
    %v823 = vpop.f32.mrf.mxu0
    %v824 = vadd.f32 %v795, %v823
    %825 = vmatmul.bf16.gmra.mxu0 %v392
    %v826 = vpop.f32.mrf.mxu0
    %v827 = vadd.f32 %v798, %v826
    %v828 = vpop.f32.mrf.mxu0
    %v829 = vadd.f32 %v800, %v828
    %830 = vmatmul.bf16.gmra.mxu0 %v395
    %v831 = vpop.f32.mrf.mxu0
    %v832 = vadd.f32 %v803, %v831
    %v833 = vpop.f32.mrf.mxu0
    %v834 = vadd.f32 %v805, %v833
    %835 = vdwg.mxu0
    %836 = vmatpush.bf16.msra.mxu0 %v642
    %837 = vmatpush.bf16.msra.mxu0 %v640
    %838 = vmatpush.bf16.msra.mxu0 %v638
    %839 = vmatpush.bf16.msra.mxu0 %v636
    %840 = vmatpush.bf16.msra.mxu0 %v634
    %841 = vmatpush.bf16.msra.mxu0 %v632
    %842 = vmatpush.bf16.msra.mxu0 %v630
    %843 = vmatpush.bf16.msra.mxu0 %v628
    %844 = vmatmul.bf16.gmra.mxu0 %v387
    %v845 = vpop.f32.mrf.mxu0
    %v846 = vadd.f32 %v817, %v845
    %v847 = vpop.f32.mrf.mxu0
    %v848 = vadd.f32 %v819, %v847
    %849 = vmatmul.bf16.gmra.mxu0 %v390
    %v850 = vpop.f32.mrf.mxu0
    %v851 = vadd.f32 %v822, %v850
    %v852 = vpop.f32.mrf.mxu0
    %v853 = vadd.f32 %v824, %v852
    %854 = vmatmul.bf16.gmra.mxu0 %v393
    %v855 = vpop.f32.mrf.mxu0
    %v856 = vadd.f32 %v827, %v855
    %v857 = vpop.f32.mrf.mxu0
    %v858 = vadd.f32 %v829, %v857
    %859 = vmatmul.bf16.gmra.mxu0 %v396
    %v860 = vpop.f32.mrf.mxu0
    %v861 = vadd.f32 %v832, %v860
    %v862 = vpop.f32.mrf.mxu0
    %v863 = vadd.f32 %v834, %v862
    %864 = vdwg.mxu0
    %v865 = vmax.f32 %v759, 0.0
    %v866 = vmax.f32 %v846, 0.0
    %v867 = vmax.f32 %v761, 0.0
    %v868 = vmax.f32 %v848, 0.0
    %v869 = vmax.f32 %v764, 0.0
    %v870 = vmax.f32 %v851, 0.0
    %v871 = vmax.f32 %v766, 0.0
    %v872 = vmax.f32 %v853, 0.0
    %v873 = vmax.f32 %v769, 0.0
    %v874 = vmax.f32 %v856, 0.0
    %v875 = vmax.f32 %v771, 0.0
    %v876 = vmax.f32 %v858, 0.0
    %v877 = vmax.f32 %v774, 0.0
    %v878 = vmax.f32 %v861, 0.0
    %v879 = vmax.f32 %v776, 0.0
    %v880 = vmax.f32 %v863, 0.0
    %v881 = vpack.c.bf16 %v867, %v865
    %v882 = vpack.c.bf16 %v868, %v866
    %v883 = vpack.c.bf16 %v871, %v869
    %v884 = vpack.c.bf16 %v872, %v870
    %v885 = vpack.c.bf16 %v875, %v873
    %v886 = vpack.c.bf16 %v876, %v874
    %v887 = vpack.c.bf16 %v879, %v877
    %v888 = vpack.c.bf16 %v880, %v878
    %v889 = vld [vmem:[%s5] sm:$0xf]
    %v890 = vld [vmem:[%s5 + $0x4] sm:$0xf]
    %v891 = vld [vmem:[%s5 + $0x8] sm:$0xf]
    %v892 = vld [vmem:[%s5 + $0xc] sm:$0xf]
    %v893 = vld [vmem:[%s5 + $0x10] sm:$0xf]
    %v894 = vld [vmem:[%s5 + $0x14] sm:$0xf]
    %v895 = vld [vmem:[%s5 + $0x18] sm:$0xf]
    %v896 = vld [vmem:[%s5 + $0x1c] sm:$0xf]
    %v897 = vld [vmem:[%s5 + $0x20] sm:$0xf]
    %v898 = vld [vmem:[%s5 + $0x24] sm:$0xf]
    %v899 = vld [vmem:[%s5 + $0x28] sm:$0xf]
    %v900 = vld [vmem:[%s5 + $0x2c] sm:$0xf]
    %v901 = vld [vmem:[%s5 + $0x30] sm:$0xf]
    %v902 = vld [vmem:[%s5 + $0x34] sm:$0xf]
    %v903 = vld [vmem:[%s5 + $0x38] sm:$0xf]
    %v904 = vld [vmem:[%s5 + $0x3c] sm:$0xf]
    %v905 = vld [vmem:[%s5 + $0x40] sm:$0xf]
    %v906 = vld [vmem:[%s5 + $0x44] sm:$0xf]
    %v907 = vld [vmem:[%s5 + $0x48] sm:$0xf]
    %v908 = vld [vmem:[%s5 + $0x4c] sm:$0xf]
    %v909 = vld [vmem:[%s5 + $0x50] sm:$0xf]
    %v910 = vld [vmem:[%s5 + $0x54] sm:$0xf]
    %v911 = vld [vmem:[%s5 + $0x58] sm:$0xf]
    %v912 = vld [vmem:[%s5 + $0x5c] sm:$0xf]
    %v913 = vld [vmem:[%s5 + $0x60] sm:$0xf]
    %v914 = vld [vmem:[%s5 + $0x64] sm:$0xf]
    %v915 = vld [vmem:[%s5 + $0x68] sm:$0xf]
    %v916 = vld [vmem:[%s5 + $0x6c] sm:$0xf]
    %v917 = vld [vmem:[%s5 + $0x70] sm:$0xf]
    %v918 = vld [vmem:[%s5 + $0x74] sm:$0xf]
    %v919 = vld [vmem:[%s5 + $0x78] sm:$0xf]
    %v920 = vld [vmem:[%s5 + $0x7c] sm:$0xf]
    %v921 = vld [vmem:[%s6] sm:$0x1]
    %v923 = vperm.slane %v921, 0
    %v957 = vunpack.c.l.b16 %v889
    %v958 = vunpack.c.l.b16 %v890
    %v959 = vunpack.c.l.b16 %v891
    %v960 = vunpack.c.l.b16 %v892
    %v961 = vunpack.c.l.b16 %v893
    %v962 = vunpack.c.l.b16 %v894
    %v963 = vunpack.c.l.b16 %v895
    %v964 = vunpack.c.l.b16 %v896
    %v965 = vunpack.c.l.b16 %v897
    %v966 = vunpack.c.l.b16 %v898
    %v967 = vunpack.c.l.b16 %v899
    %v968 = vunpack.c.l.b16 %v900
    %v969 = vunpack.c.l.b16 %v901
    %v970 = vunpack.c.l.b16 %v902
    %v971 = vunpack.c.l.b16 %v903
    %v972 = vunpack.c.l.b16 %v904
    %v973 = vunpack.c.l.b16 %v905
    %v974 = vunpack.c.l.b16 %v906
    %v975 = vunpack.c.l.b16 %v907
    %v976 = vunpack.c.l.b16 %v908
    %v977 = vunpack.c.l.b16 %v909
    %v978 = vunpack.c.l.b16 %v910
    %v979 = vunpack.c.l.b16 %v911
    %v980 = vunpack.c.l.b16 %v912
    %v981 = vunpack.c.l.b16 %v913
    %v982 = vunpack.c.l.b16 %v914
    %v983 = vunpack.c.l.b16 %v915
    %v984 = vunpack.c.l.b16 %v916
    %v985 = vunpack.c.l.b16 %v917
    %v986 = vunpack.c.l.b16 %v918
    %v987 = vunpack.c.l.b16 %v919
    %v988 = vunpack.c.l.b16 %v920
    %v989 = vpack.c.b16 %v958, %v957
    %v990 = vpack.c.b16 %v960, %v959
    %v991 = vpack.c.b16 %v962, %v961
    %v992 = vpack.c.b16 %v964, %v963
    %v993 = vpack.c.b16 %v966, %v965
    %v994 = vpack.c.b16 %v968, %v967
    %v995 = vpack.c.b16 %v970, %v969
    %v996 = vpack.c.b16 %v972, %v971
    %v997 = vpack.c.b16 %v974, %v973
    %v998 = vpack.c.b16 %v976, %v975
    %v999 = vpack.c.b16 %v978, %v977
    %v1000 = vpack.c.b16 %v980, %v979
    %v1001 = vpack.c.b16 %v982, %v981
    %v1002 = vpack.c.b16 %v984, %v983
    %v1003 = vpack.c.b16 %v986, %v985
    %v1004 = vpack.c.b16 %v988, %v987
    %1021 = vmatpush.bf16.msra.mxu0 %v996
    %1022 = vmatpush.bf16.msra.mxu0 %v995
    %1023 = vmatpush.bf16.msra.mxu0 %v994
    %1024 = vmatpush.bf16.msra.mxu0 %v993
    %1025 = vmatpush.bf16.msra.mxu0 %v992
    %1026 = vmatpush.bf16.msra.mxu0 %v991
    %1027 = vmatpush.bf16.msra.mxu0 %v990
    %1028 = vmatpush.bf16.msra.mxu0 %v989
    %1029 = vmatmul.bf16.gmra.mxu0 %v881
    %v1030 = vpop.f32.mrf.mxu0
    %v1031 = vadd.f32 %v923, %v1030
    %v1032 = vpop.f32.mrf.mxu0
    %v1033 = vadd.f32 %v923, %v1032
    %1034 = vmatmul.bf16.gmra.mxu0 %v883
    %v1035 = vpop.f32.mrf.mxu0
    %v1036 = vadd.f32 %v923, %v1035
    %v1037 = vpop.f32.mrf.mxu0
    %v1038 = vadd.f32 %v923, %v1037
    %1039 = vmatmul.bf16.gmra.mxu0 %v885
    %v1040 = vpop.f32.mrf.mxu0
    %v1041 = vadd.f32 %v923, %v1040
    %v1042 = vpop.f32.mrf.mxu0
    %v1043 = vadd.f32 %v923, %v1042
    %1044 = vmatmul.bf16.gmra.mxu0 %v887
    %v1045 = vpop.f32.mrf.mxu0
    %v1046 = vadd.f32 %v923, %v1045
    %v1047 = vpop.f32.mrf.mxu0
    %v1048 = vadd.f32 %v923, %v1047
    %1049 = vdwg.mxu0
    %1050 = vmatpush.bf16.msra.mxu0 %v1004
    %1051 = vmatpush.bf16.msra.mxu0 %v1003
    %1052 = vmatpush.bf16.msra.mxu0 %v1002
    %1053 = vmatpush.bf16.msra.mxu0 %v1001
    %1054 = vmatpush.bf16.msra.mxu0 %v1000
    %1055 = vmatpush.bf16.msra.mxu0 %v999
    %1056 = vmatpush.bf16.msra.mxu0 %v998
    %1057 = vmatpush.bf16.msra.mxu0 %v997
    %1058 = vmatmul.bf16.gmra.mxu0 %v882
    %v1059 = vpop.f32.mrf.mxu0
    %v1060 = vadd.f32 %v1031, %v1059
    %v1061 = vpop.f32.mrf.mxu0
    %v1062 = vadd.f32 %v1033, %v1061
    %1063 = vmatmul.bf16.gmra.mxu0 %v884
    %v1064 = vpop.f32.mrf.mxu0
    %v1065 = vadd.f32 %v1036, %v1064
    %v1066 = vpop.f32.mrf.mxu0
    %v1067 = vadd.f32 %v1038, %v1066
    %1068 = vmatmul.bf16.gmra.mxu0 %v886
    %v1069 = vpop.f32.mrf.mxu0
    %v1070 = vadd.f32 %v1041, %v1069
    %v1071 = vpop.f32.mrf.mxu0
    %v1072 = vadd.f32 %v1043, %v1071
    %1073 = vmatmul.bf16.gmra.mxu0 %v888
    %v1074 = vpop.f32.mrf.mxu0
    %v1075 = vadd.f32 %v1046, %v1074
    %v1076 = vpop.f32.mrf.mxu0
    %v1077 = vadd.f32 %v1048, %v1076
    %1078 = vdwg.mxu0
    %v1079 = vunpack.c.l.bf16 %v42
    %v1080 = vunpack.c.l.bf16 %v43
    %v1081 = vunpack.c.l.bf16 %v44
    %v1082 = vunpack.c.l.bf16 %v45
    %v1083 = vunpack.c.l.bf16 %v46
    %v1084 = vunpack.c.l.bf16 %v47
    %v1085 = vunpack.c.l.bf16 %v48
    %v1086 = vunpack.c.l.bf16 %v49
    %v1087 = vadd.f32 %v1079, %v1060
    %v1088 = vadd.f32 %v1080, %v1062
    %v1089 = vadd.f32 %v1081, %v1065
    %v1090 = vadd.f32 %v1082, %v1067
    %v1091 = vadd.f32 %v1083, %v1070
    %v1092 = vadd.f32 %v1084, %v1072
    %v1093 = vadd.f32 %v1085, %v1075
    %v1094 = vadd.f32 %v1086, %v1077
    %v1095 = vmax.f32 %v1087, 0.0
    %v1096 = vmax.f32 %v1088, 0.0
    %v1097 = vmax.f32 %v1089, 0.0
    %v1098 = vmax.f32 %v1090, 0.0
    %v1099 = vmax.f32 %v1091, 0.0
    %v1100 = vmax.f32 %v1092, 0.0
    %v1101 = vmax.f32 %v1093, 0.0
    %v1102 = vmax.f32 %v1094, 0.0
    %v1103 = vpack.c.bf16 %v1095, %v1095
    %v1104 = vpack.c.bf16 %v1096, %v1096
    %v1105 = vpack.c.bf16 %v1097, %v1097
    %v1106 = vpack.c.bf16 %v1098, %v1098
    %v1107 = vpack.c.bf16 %v1099, %v1099
    %v1108 = vpack.c.bf16 %v1100, %v1100
    %v1109 = vpack.c.bf16 %v1101, %v1101
    %v1110 = vpack.c.bf16 %v1102, %v1102
    %1111 = vst [vmem:[%s7] sm:$0xf] %v1103
    %1112 = vst [vmem:[%s7 + $0x4] sm:$0xf] %v1104
    %1113 = vst [vmem:[%s7 + $0x8] sm:$0xf] %v1105
    %1114 = vst [vmem:[%s7 + $0xc] sm:$0xf] %v1106
    %1115 = vst [vmem:[%s7 + $0x10] sm:$0xf] %v1107
    %1116 = vst [vmem:[%s7 + $0x14] sm:$0xf] %v1108
    %1117 = vst [vmem:[%s7 + $0x18] sm:$0xf] %v1109
    %1118 = vst [vmem:[%s7 + $0x1c] sm:$0xf] %v1110
    // Predicated region
    $region34: #{deep_prior_deformer.2} parent=1 // pred_check
      _
    $region35: #{deep_prior_deformer.2} parent=1 // pred_check_branch
      %1120 = sbr.rel (0) target = $region37
    $region36: #{deep_prior_deformer.2} parent=1 // pred_region
      _
    $region37: #{deep_prior_deformer.2} parent=1 // pred_fallthru
      _
    // Predicated region
    $region38: #{deep_prior_deformer.2} parent=1 // pred_check
      _
    $region39: #{deep_prior_deformer.2} parent=1 // pred_check_branch
      %1122 = sbr.rel (0) target = $region41
    $region40: #{deep_prior_deformer.2} parent=1 // pred_region
      _
    $region41: #{deep_prior_deformer.2} parent=1 // pred_fallthru
      _
    %1123 = vsyncpa [#allocation3], 1

// kernel: deep_prior_deformer.3
$region0: #{deep_prior_deformer.3}
  #allocation0 [shape = 'u32[]', space=smem, size = 0x4, offset = 0x4, fixed_abs, tag = 'smem constant byte address 0x4 - core index']
  #allocation1 [shape = 'u32[72,128]{1,0:T(1,128)}', space=vmem, size = 0x9000, scoped, tag = 'internal scratch']
  #allocation2 [shape = 'bf16[32,256]{1,0:T(8,128)(2,1)}', space=vmem, size = 0x4000, scoped, tag = 'scratch operand']
  #allocation3 [shape = 's32[1]{0}', space=sflag, size = 0x4, scoped, tag = 'scoped memory for deep_prior_deformer.3']
  #allocation4 [shape = 'u8[512]{0}', space=smem, size = 0x200, scoped, tag = 'prefetched SMEM operand 0']
  #allocation5 [shape = 'u8[512]{0}', space=smem, size = 0x200, scoped, tag = 'prefetched SMEM operand 1']
  %s0 = inlined_call_operand.vmem [shape: s32[2], index: 0, kind: input, shape index: {}]
  %s1 = inlined_call_operand.vmem [shape: s32[2], index: 1, kind: input, shape index: {}]
  %s2 = inlined_call_operand.vmem [shape: bf16[32,256], index: 2, kind: input, shape index: {}]
  %s3 = inlined_call_operand.vmem [shape: bf16[64,128], index: 3, kind: input, shape index: {}, may-alias: {3,4}]
  %s4 = inlined_call_operand.vmem [shape: bf16[64,128], index: 4, kind: input, shape index: {}, may-alias: {3,4}]
  %s5 = inlined_call_operand.vmem [shape: f32[2,1,384], index: 5, kind: input, shape index: {}]
  %s6 = inlined_call_operand.vmem [shape: bf16[256,384], index: 6, kind: input, shape index: {}]
  %s7 = inlined_call_operand.vmem [shape: bf16[384,256], index: 7, kind: input, shape index: {}]
  %s8 = inlined_call_operand.vmem [shape: f32[1,256], index: 8, kind: input, shape index: {}]
  %s9 = inlined_call_operand.vmem [shape: bf16[6,256,32], index: 9, kind: input, shape index: {}]
  %s10 = inlined_call_operand.vmem [shape: f32[6,1,32], index: 10, kind: input, shape index: {}]
  %s11 = inlined_call_operand.vmem [shape: bf16[128,64], index: 11, kind: input, shape index: {}]
  %s12 = inlined_call_operand.vmem [shape: f32[1,64], index: 12, kind: input, shape index: {}]
  %s13 = inlined_call_operand.vmem [shape: bf16[64,64], index: 13, kind: input, shape index: {}]
  %s14 = inlined_call_operand.vmem [shape: f32[1,64], index: 14, kind: input, shape index: {}]
  %s15 = inlined_call_operand.vmem [shape: bf16[6,64,128], index: 15, kind: input, shape index: {}]
  %s16 = inlined_call_operand.vmem [shape: f32[6,1,128], index: 16, kind: input, shape index: {}]
  %s17 = inlined_call_operand.hbm [shape: bf16[32,32], index: 17, kind: output, shape index: {0}]
  %s18 = inlined_call_operand.vmem [shape: f32[32,256], index: 18, kind: output, shape index: {1}]
  %s19 = inlined_call_operand.vmem [shape: f32[64,128], index: 19, kind: output, shape index: {2}]
  %20 = xla_tuple %s17, %s18, %s19
  %s21 = sld [smem:[#allocation0]]
  $region113: #{deep_prior_deformer.3} parent=0
    _
  %s23 = ssub.s32 1, %s21
  %s24 = scalar_select 0, %s23, %s21
  %s26 = sshll.u32 %s0, 4
  %s27 = int_to_ptr.vmem [resolvable:$true] %s26
  %29 = dma.vmem_to_smem %s27, 16, [#allocation4], [#allocation3]
  %s31 = sshll.u32 %s1, 4
  %s32 = int_to_ptr.vmem [resolvable:$true] %s31
  %34 = dma.vmem_to_smem %s32, 16, [#allocation5], [#allocation3]
  %36 = dma.done [#allocation3], 32
  %37 = sfence
  $region1: #{deep_prior_deformer.3} parent=0
    #allocation6 [shape = 'u8[8192]{0}', space=vmem, size = 0x2000, scoped, tag = 'output window, operand 0']
    #allocation7 [shape = 's32[2]{0}', space=sflag, size = 0x8, scoped, tag = 'scoped memory for deep_prior_deformer.3']
    %38 = vsyncpa [#allocation7], 0
    %s39 = scalar_lea.sflag [#allocation7], 1
    %40 = vsyncpa %s39, 0
    loop: start=0, step=1, limit=4
    $region2: #{deep_prior_deformer.3} parent=1 // loop_pre_header
      _
    $region3: #{deep_prior_deformer.3} parent=1 // loop_header
      %s42 = sphi 0, %s46
      %p43 = scmp.ge.s32.totalorder %s42, 4
      %s49 = sphi 0, %s61
      %s50 = sphi 0, %s57
      %s51 = sphi 0, %s49
      %s52 = sphi 0, %s50
      %s53 = sphi 0, %s51
      %s54 = sphi 0, %s52
      %s68 = sphi 0, %s70
      %s71 = sphi 0, %s68
      %s72 = sphi 0, %s71
      %s88 = sphi 0, %s72
      %s96 = sphi 0, %s98
      %s99 = sphi 0, %s96
      %s100 = sphi 0, %s99
      %s116 = sphi 0, %s100
      %s122 = sphi 0, %s124
      %s125 = sphi 0, %s122
      %s126 = sphi 0, %s125
      %s142 = sphi 0, %s126
      %s150 = sphi 0, %s152
      %s153 = sphi 0, %s150
      %s154 = sphi 0, %s153
      %s170 = sphi 0, %s154
      %s174 = sphi 0, %s174
      %s176 = sphi 0, %s174
      %s177 = sphi 0, %s176
      %s191 = sphi 0, %s177
      %s195 = sphi 0, %s195
      %s197 = sphi 0, %s195
      %s198 = sphi 0, %s197
      %s212 = sphi 0, %s198
      %s216 = sphi 0, %s216
      %s218 = sphi 0, %s216
      %s219 = sphi 0, %s218
      %s233 = sphi 0, %s219
      %s241 = sphi 0, %s243
      %s244 = sphi 0, %s241
      %s245 = sphi 0, %s244
      %s261 = sphi 0, %s245
      %s269 = sphi 0, %s271
      %s272 = sphi 0, %s269
      %s273 = sphi 0, %s272
      %s289 = sphi 0, %s273
      %s293 = sphi 0, %s293
      %s295 = sphi 0, %s293
      %s296 = sphi 0, %s295
      %s310 = sphi 0, %s296
      %s314 = sphi 0, %s314
      %s316 = sphi 0, %s314
      %s317 = sphi 0, %s316
      %s331 = sphi 0, %s317
      %s335 = sphi 0, %s335
      %s337 = sphi 0, %s335
      %s338 = sphi 0, %s337
      %s352 = sphi 0, %s338
      %s356 = sphi 0, %s356
      %s358 = sphi 0, %s356
      %s359 = sphi 0, %s358
      %s373 = sphi 0, %s359
      %s381 = sphi 0, %s383
      %s384 = sphi 0, %s381
      %s385 = sphi 0, %s384
      %s401 = sphi 0, %s385
      %s409 = sphi 0, %s411
      %s412 = sphi 0, %s409
      %s413 = sphi 0, %s412
      %s429 = sphi 0, %s413
      %s437 = sphi 0, %s439
      %s440 = sphi 0, %s437
      %s441 = sphi 0, %s440
      %s457 = sphi 0, %s441
      %s465 = sphi 0, %s467
      %s468 = sphi 0, %s465
      %s469 = sphi 0, %s468
      %s485 = sphi 0, %s469
      %s491 = sphi 0, %s493
      %s494 = sphi 0, %s491
      %s495 = sphi 0, %s494
      %s511 = sphi 0, %s495
    $region4: #{deep_prior_deformer.3} parent=1 // loop_header_branch
      %45 = sbr.rel (%p43) target = $region8
    $region5: #{deep_prior_deformer.3} parent=1 // loop_body
      %s47 = ssub.s32 %s42, 1
      %s48 = ssub.s32 %s42, 2
      %s55 = sadd.s32 1, %s50
      %p56 = scmp.ge.s32.totalorder %s55, 1
      %s57 = scalar_select %p56, 0, %s55
      %s58 = sadd.s32 1, %s49
      %s59 = scalar_select %p56, %s58, %s49
      %p60 = scmp.ge.s32.totalorder %s59, 2
      %s61 = scalar_select %p60, 0, %s59
      %s62 = sld [smem:[#allocation4 + %s49]]
      %s63 = sadd.s32 %s62, %s50
      %s64 = sld [smem:[#allocation4 + %s61]]
      %s65 = sadd.s32 %s64, %s57
      %s66 = ssub.s32 %s63, %s65
      %p67 = scmp.eq.s32.totalorder %s66, 0
      %s69 = sadd.s32 %s68, 1
      %s70 = scalar_select %p67, %s68, %s69
      %p73 = pneg %p67
      %p74 = scmp.eq.s32.totalorder %s42, 1
      %p75 = por %p73, %p74
      %p76 = scmp.ne.s32.totalorder %s68, %s71
      %p77 = scmp.eq.s32.totalorder %s42, 0
      %p78 = por %p76, %p77
      %p79 = scmp.ne.s32.totalorder %s68, %s71
      %p80 = scmp.eq.s32.totalorder %s47, 1
      %p81 = por %p79, %p80
      %p82 = scmp.ne.s32.totalorder %s71, %s72
      %p83 = scmp.eq.s32.totalorder %s47, 0
      %p84 = por %p82, %p83
      %p85 = scmp.ne.s32.totalorder %s71, %s72
      %p86 = scmp.eq.s32.totalorder %s48, 1
      %p87 = por %p85, %p86
      %p89 = scmp.ne.s32.totalorder %s72, %s88
      %p90 = scmp.eq.s32.totalorder %s48, 0
      %p91 = por %p89, %p90
      %s92 = sld [smem:[#allocation4 + %s49]]
      %s93 = sld [smem:[#allocation4 + %s61]]
      %s94 = ssub.s32 %s92, %s93
      %p95 = scmp.eq.s32.totalorder %s94, 0
      %s97 = sadd.s32 %s96, 1
      %s98 = scalar_select %p95, %s96, %s97
      %p101 = pneg %p95
      %p102 = scmp.eq.s32.totalorder %s42, 1
      %p103 = por %p101, %p102
      %p104 = scmp.ne.s32.totalorder %s96, %s99
      %p105 = scmp.eq.s32.totalorder %s42, 0
      %p106 = por %p104, %p105
      %p107 = scmp.ne.s32.totalorder %s96, %s99
      %p108 = scmp.eq.s32.totalorder %s47, 1
      %p109 = por %p107, %p108
      %p110 = scmp.ne.s32.totalorder %s99, %s100
      %p111 = scmp.eq.s32.totalorder %s47, 0
      %p112 = por %p110, %p111
      %p113 = scmp.ne.s32.totalorder %s99, %s100
      %p114 = scmp.eq.s32.totalorder %s48, 1
      %p115 = por %p113, %p114
      %p117 = scmp.ne.s32.totalorder %s100, %s116
      %p118 = scmp.eq.s32.totalorder %s48, 0
      %p119 = por %p117, %p118
      %s120 = ssub.s32 %s49, %s61
      %p121 = scmp.eq.s32.totalorder %s120, 0
      %s123 = sadd.s32 %s122, 1
      %s124 = scalar_select %p121, %s122, %s123
      %p127 = pneg %p121
      %p128 = scmp.eq.s32.totalorder %s42, 1
      %p129 = por %p127, %p128
      %p130 = scmp.ne.s32.totalorder %s122, %s125
      %p131 = scmp.eq.s32.totalorder %s42, 0
      %p132 = por %p130, %p131
      %p133 = scmp.ne.s32.totalorder %s122, %s125
      %p134 = scmp.eq.s32.totalorder %s47, 1
      %p135 = por %p133, %p134
      %p136 = scmp.ne.s32.totalorder %s125, %s126
      %p137 = scmp.eq.s32.totalorder %s47, 0
      %p138 = por %p136, %p137
      %p139 = scmp.ne.s32.totalorder %s125, %s126
      %p140 = scmp.eq.s32.totalorder %s48, 1
      %p141 = por %p139, %p140
      %p143 = scmp.ne.s32.totalorder %s126, %s142
      %p144 = scmp.eq.s32.totalorder %s48, 0
      %p145 = por %p143, %p144
      %s146 = sld [smem:[#allocation4 + %s49]]
      %s147 = sld [smem:[#allocation4 + %s61]]
      %s148 = ssub.s32 %s146, %s147
      %p149 = scmp.eq.s32.totalorder %s148, 0
      %s151 = sadd.s32 %s150, 1
      %s152 = scalar_select %p149, %s150, %s151
      %p155 = pneg %p149
      %p156 = scmp.eq.s32.totalorder %s42, 1
      %p157 = por %p155, %p156
      %p158 = scmp.ne.s32.totalorder %s150, %s153
      %p159 = scmp.eq.s32.totalorder %s42, 0
      %p160 = por %p158, %p159
      %p161 = scmp.ne.s32.totalorder %s150, %s153
      %p162 = scmp.eq.s32.totalorder %s47, 1
      %p163 = por %p161, %p162
      %p164 = scmp.ne.s32.totalorder %s153, %s154
      %p165 = scmp.eq.s32.totalorder %s47, 0
      %p166 = por %p164, %p165
      %p167 = scmp.ne.s32.totalorder %s153, %s154
      %p168 = scmp.eq.s32.totalorder %s48, 1
      %p169 = por %p167, %p168
      %p171 = scmp.ne.s32.totalorder %s154, %s170
      %p172 = scmp.eq.s32.totalorder %s48, 0
      %p173 = por %p171, %p172
      %s175 = sadd.s32 %s174, 1
      %p178 = scmp.eq.s32.totalorder %s42, 1
      %p179 = scmp.ne.s32.totalorder %s174, %s176
      %p180 = scmp.eq.s32.totalorder %s42, 0
      %p181 = por %p179, %p180
      %p182 = scmp.ne.s32.totalorder %s174, %s176
      %p183 = scmp.eq.s32.totalorder %s47, 1
      %p184 = por %p182, %p183
      %p185 = scmp.ne.s32.totalorder %s176, %s177
      %p186 = scmp.eq.s32.totalorder %s47, 0
      %p187 = por %p185, %p186
      %p188 = scmp.ne.s32.totalorder %s176, %s177
      %p189 = scmp.eq.s32.totalorder %s48, 1
      %p190 = por %p188, %p189
      %p192 = scmp.ne.s32.totalorder %s177, %s191
      %p193 = scmp.eq.s32.totalorder %s48, 0
      %p194 = por %p192, %p193
      %s196 = sadd.s32 %s195, 1
      %p199 = scmp.eq.s32.totalorder %s42, 1
      %p200 = scmp.ne.s32.totalorder %s195, %s197
      %p201 = scmp.eq.s32.totalorder %s42, 0
      %p202 = por %p200, %p201
      %p203 = scmp.ne.s32.totalorder %s195, %s197
      %p204 = scmp.eq.s32.totalorder %s47, 1
      %p205 = por %p203, %p204
      %p206 = scmp.ne.s32.totalorder %s197, %s198
      %p207 = scmp.eq.s32.totalorder %s47, 0
      %p208 = por %p206, %p207
      %p209 = scmp.ne.s32.totalorder %s197, %s198
      %p210 = scmp.eq.s32.totalorder %s48, 1
      %p211 = por %p209, %p210
      %p213 = scmp.ne.s32.totalorder %s198, %s212
      %p214 = scmp.eq.s32.totalorder %s48, 0
      %p215 = por %p213, %p214
      %s217 = sadd.s32 %s216, 1
      %p220 = scmp.eq.s32.totalorder %s42, 1
      %p221 = scmp.ne.s32.totalorder %s216, %s218
      %p222 = scmp.eq.s32.totalorder %s42, 0
      %p223 = por %p221, %p222
      %p224 = scmp.ne.s32.totalorder %s216, %s218
      %p225 = scmp.eq.s32.totalorder %s47, 1
      %p226 = por %p224, %p225
      %p227 = scmp.ne.s32.totalorder %s218, %s219
      %p228 = scmp.eq.s32.totalorder %s47, 0
      %p229 = por %p227, %p228
      %p230 = scmp.ne.s32.totalorder %s218, %s219
      %p231 = scmp.eq.s32.totalorder %s48, 1
      %p232 = por %p230, %p231
      %p234 = scmp.ne.s32.totalorder %s219, %s233
      %p235 = scmp.eq.s32.totalorder %s48, 0
      %p236 = por %p234, %p235
      %s237 = sld [smem:[#allocation5 + %s49]]
      %s238 = sld [smem:[#allocation5 + %s61]]
      %s239 = ssub.s32 %s237, %s238
      %p240 = scmp.eq.s32.totalorder %s239, 0
      %s242 = sadd.s32 %s241, 1
      %s243 = scalar_select %p240, %s241, %s242
      %p246 = pneg %p240
      %p247 = scmp.eq.s32.totalorder %s42, 1
      %p248 = por %p246, %p247
      %p249 = scmp.ne.s32.totalorder %s241, %s244
      %p250 = scmp.eq.s32.totalorder %s42, 0
      %p251 = por %p249, %p250
      %p252 = scmp.ne.s32.totalorder %s241, %s244
      %p253 = scmp.eq.s32.totalorder %s47, 1
      %p254 = por %p252, %p253
      %p255 = scmp.ne.s32.totalorder %s244, %s245
      %p256 = scmp.eq.s32.totalorder %s47, 0
      %p257 = por %p255, %p256
      %p258 = scmp.ne.s32.totalorder %s244, %s245
      %p259 = scmp.eq.s32.totalorder %s48, 1
      %p260 = por %p258, %p259
      %p262 = scmp.ne.s32.totalorder %s245, %s261
      %p263 = scmp.eq.s32.totalorder %s48, 0
      %p264 = por %p262, %p263
      %s265 = sld [smem:[#allocation5 + %s49]]
      %s266 = sld [smem:[#allocation5 + %s61]]
      %s267 = ssub.s32 %s265, %s266
      %p268 = scmp.eq.s32.totalorder %s267, 0
      %s270 = sadd.s32 %s269, 1
      %s271 = scalar_select %p268, %s269, %s270
      %p274 = pneg %p268
      %p275 = scmp.eq.s32.totalorder %s42, 1
      %p276 = por %p274, %p275
      %p277 = scmp.ne.s32.totalorder %s269, %s272
      %p278 = scmp.eq.s32.totalorder %s42, 0
      %p279 = por %p277, %p278
      %p280 = scmp.ne.s32.totalorder %s269, %s272
      %p281 = scmp.eq.s32.totalorder %s47, 1
      %p282 = por %p280, %p281
      %p283 = scmp.ne.s32.totalorder %s272, %s273
      %p284 = scmp.eq.s32.totalorder %s47, 0
      %p285 = por %p283, %p284
      %p286 = scmp.ne.s32.totalorder %s272, %s273
      %p287 = scmp.eq.s32.totalorder %s48, 1
      %p288 = por %p286, %p287
      %p290 = scmp.ne.s32.totalorder %s273, %s289
      %p291 = scmp.eq.s32.totalorder %s48, 0
      %p292 = por %p290, %p291
      %s294 = sadd.s32 %s293, 1
      %p297 = scmp.eq.s32.totalorder %s42, 1
      %p298 = scmp.ne.s32.totalorder %s293, %s295
      %p299 = scmp.eq.s32.totalorder %s42, 0
      %p300 = por %p298, %p299
      %p301 = scmp.ne.s32.totalorder %s293, %s295
      %p302 = scmp.eq.s32.totalorder %s47, 1
      %p303 = por %p301, %p302
      %p304 = scmp.ne.s32.totalorder %s295, %s296
      %p305 = scmp.eq.s32.totalorder %s47, 0
      %p306 = por %p304, %p305
      %p307 = scmp.ne.s32.totalorder %s295, %s296
      %p308 = scmp.eq.s32.totalorder %s48, 1
      %p309 = por %p307, %p308
      %p311 = scmp.ne.s32.totalorder %s296, %s310
      %p312 = scmp.eq.s32.totalorder %s48, 0
      %p313 = por %p311, %p312
      %s315 = sadd.s32 %s314, 1
      %p318 = scmp.eq.s32.totalorder %s42, 1
      %p319 = scmp.ne.s32.totalorder %s314, %s316
      %p320 = scmp.eq.s32.totalorder %s42, 0
      %p321 = por %p319, %p320
      %p322 = scmp.ne.s32.totalorder %s314, %s316
      %p323 = scmp.eq.s32.totalorder %s47, 1
      %p324 = por %p322, %p323
      %p325 = scmp.ne.s32.totalorder %s316, %s317
      %p326 = scmp.eq.s32.totalorder %s47, 0
      %p327 = por %p325, %p326
      %p328 = scmp.ne.s32.totalorder %s316, %s317
      %p329 = scmp.eq.s32.totalorder %s48, 1
      %p330 = por %p328, %p329
      %p332 = scmp.ne.s32.totalorder %s317, %s331
      %p333 = scmp.eq.s32.totalorder %s48, 0
      %p334 = por %p332, %p333
      %s336 = sadd.s32 %s335, 1
      %p339 = scmp.eq.s32.totalorder %s42, 1
      %p340 = scmp.ne.s32.totalorder %s335, %s337
      %p341 = scmp.eq.s32.totalorder %s42, 0
      %p342 = por %p340, %p341
      %p343 = scmp.ne.s32.totalorder %s335, %s337
      %p344 = scmp.eq.s32.totalorder %s47, 1
      %p345 = por %p343, %p344
      %p346 = scmp.ne.s32.totalorder %s337, %s338
      %p347 = scmp.eq.s32.totalorder %s47, 0
      %p348 = por %p346, %p347
      %p349 = scmp.ne.s32.totalorder %s337, %s338
      %p350 = scmp.eq.s32.totalorder %s48, 1
      %p351 = por %p349, %p350
      %p353 = scmp.ne.s32.totalorder %s338, %s352
      %p354 = scmp.eq.s32.totalorder %s48, 0
      %p355 = por %p353, %p354
      %s357 = sadd.s32 %s356, 1
      %p360 = scmp.eq.s32.totalorder %s42, 1
      %p361 = scmp.ne.s32.totalorder %s356, %s358
      %p362 = scmp.eq.s32.totalorder %s42, 0
      %p363 = por %p361, %p362
      %p364 = scmp.ne.s32.totalorder %s356, %s358
      %p365 = scmp.eq.s32.totalorder %s47, 1
      %p366 = por %p364, %p365
      %p367 = scmp.ne.s32.totalorder %s358, %s359
      %p368 = scmp.eq.s32.totalorder %s47, 0
      %p369 = por %p367, %p368
      %p370 = scmp.ne.s32.totalorder %s358, %s359
      %p371 = scmp.eq.s32.totalorder %s48, 1
      %p372 = por %p370, %p371
      %p374 = scmp.ne.s32.totalorder %s359, %s373
      %p375 = scmp.eq.s32.totalorder %s48, 0
      %p376 = por %p374, %p375
      %s377 = sld [smem:[#allocation5 + %s49]]
      %s378 = sld [smem:[#allocation5 + %s61]]
      %s379 = ssub.s32 %s377, %s378
      %p380 = scmp.eq.s32.totalorder %s379, 0
      %s382 = sadd.s32 %s381, 1
      %s383 = scalar_select %p380, %s381, %s382
      %p386 = pneg %p380
      %p387 = scmp.eq.s32.totalorder %s42, 1
      %p388 = por %p386, %p387
      %p389 = scmp.ne.s32.totalorder %s381, %s384
      %p390 = scmp.eq.s32.totalorder %s42, 0
      %p391 = por %p389, %p390
      %p392 = scmp.ne.s32.totalorder %s381, %s384
      %p393 = scmp.eq.s32.totalorder %s47, 1
      %p394 = por %p392, %p393
      %p395 = scmp.ne.s32.totalorder %s384, %s385
      %p396 = scmp.eq.s32.totalorder %s47, 0
      %p397 = por %p395, %p396
      %p398 = scmp.ne.s32.totalorder %s384, %s385
      %p399 = scmp.eq.s32.totalorder %s48, 1
      %p400 = por %p398, %p399
      %p402 = scmp.ne.s32.totalorder %s385, %s401
      %p403 = scmp.eq.s32.totalorder %s48, 0
      %p404 = por %p402, %p403
      %s405 = sld [smem:[#allocation5 + %s49]]
      %s406 = sld [smem:[#allocation5 + %s61]]
      %s407 = ssub.s32 %s405, %s406
      %p408 = scmp.eq.s32.totalorder %s407, 0
      %s410 = sadd.s32 %s409, 1
      %s411 = scalar_select %p408, %s409, %s410
      %p414 = pneg %p408
      %p415 = scmp.eq.s32.totalorder %s42, 1
      %p416 = por %p414, %p415
      %p417 = scmp.ne.s32.totalorder %s409, %s412
      %p418 = scmp.eq.s32.totalorder %s42, 0
      %p419 = por %p417, %p418
      %p420 = scmp.ne.s32.totalorder %s409, %s412
      %p421 = scmp.eq.s32.totalorder %s47, 1
      %p422 = por %p420, %p421
      %p423 = scmp.ne.s32.totalorder %s412, %s413
      %p424 = scmp.eq.s32.totalorder %s47, 0
      %p425 = por %p423, %p424
      %p426 = scmp.ne.s32.totalorder %s412, %s413
      %p427 = scmp.eq.s32.totalorder %s48, 1
      %p428 = por %p426, %p427
      %p430 = scmp.ne.s32.totalorder %s413, %s429
      %p431 = scmp.eq.s32.totalorder %s48, 0
      %p432 = por %p430, %p431
      %s433 = sadd.s32 %s49, %s50
      %s434 = sadd.s32 %s61, %s57
      %s435 = ssub.s32 %s433, %s434
      %p436 = scmp.eq.s32.totalorder %s435, 0
      %s438 = sadd.s32 %s437, 1
      %s439 = scalar_select %p436, %s437, %s438
      %p442 = pneg %p436
      %p443 = scmp.eq.s32.totalorder %s42, 1
      %p444 = por %p442, %p443
      %p445 = scmp.ne.s32.totalorder %s437, %s440
      %p446 = scmp.eq.s32.totalorder %s42, 0
      %p447 = por %p445, %p446
      %p448 = scmp.ne.s32.totalorder %s437, %s440
      %p449 = scmp.eq.s32.totalorder %s47, 1
      %p450 = por %p448, %p449
      %p451 = scmp.ne.s32.totalorder %s440, %s441
      %p452 = scmp.eq.s32.totalorder %s47, 0
      %p453 = por %p451, %p452
      %p454 = scmp.ne.s32.totalorder %s440, %s441
      %p455 = scmp.eq.s32.totalorder %s48, 1
      %p456 = por %p454, %p455
      %p458 = scmp.ne.s32.totalorder %s441, %s457
      %p459 = scmp.eq.s32.totalorder %s48, 0
      %p460 = por %p458, %p459
      %s461 = sadd.s32 %s49, %s50
      %s462 = sadd.s32 %s61, %s57
      %s463 = ssub.s32 %s461, %s462
      %p464 = scmp.eq.s32.totalorder %s463, 0
      %s466 = sadd.s32 %s465, 1
      %s467 = scalar_select %p464, %s465, %s466
      %p470 = pneg %p464
      %p471 = scmp.eq.s32.totalorder %s42, 1
      %p472 = por %p470, %p471
      %p473 = scmp.ne.s32.totalorder %s465, %s468
      %p474 = scmp.eq.s32.totalorder %s42, 0
      %p475 = por %p473, %p474
      %p476 = scmp.ne.s32.totalorder %s465, %s468
      %p477 = scmp.eq.s32.totalorder %s47, 1
      %p478 = por %p476, %p477
      %p479 = scmp.ne.s32.totalorder %s468, %s469
      %p480 = scmp.eq.s32.totalorder %s47, 0
      %p481 = por %p479, %p480
      %p482 = scmp.ne.s32.totalorder %s468, %s469
      %p483 = scmp.eq.s32.totalorder %s48, 1
      %p484 = por %p482, %p483
      %p486 = scmp.ne.s32.totalorder %s469, %s485
      %p487 = scmp.eq.s32.totalorder %s48, 0
      %p488 = por %p486, %p487
      %s489 = ssub.s32 %s49, %s61
      %p490 = scmp.eq.s32.totalorder %s489, 0
      %s492 = sadd.s32 %s491, 1
      %s493 = scalar_select %p490, %s491, %s492
      %p496 = pneg %p490
      %p497 = scmp.eq.s32.totalorder %s42, 1
      %p498 = por %p496, %p497
      %p499 = scmp.ne.s32.totalorder %s491, %s494
      %p500 = scmp.eq.s32.totalorder %s42, 0
      %p501 = por %p499, %p500
      %p502 = scmp.ne.s32.totalorder %s491, %s494
      %p503 = scmp.eq.s32.totalorder %s47, 1
      %p504 = por %p502, %p503
      %p505 = scmp.ne.s32.totalorder %s494, %s495
      %p506 = scmp.eq.s32.totalorder %s47, 0
      %p507 = por %p505, %p506
      %p508 = scmp.ne.s32.totalorder %s494, %s495
      %p509 = scmp.eq.s32.totalorder %s48, 1
      %p510 = por %p508, %p509
      %p512 = scmp.ne.s32.totalorder %s495, %s511
      %p513 = scmp.eq.s32.totalorder %s48, 0
      %p514 = por %p512, %p513
      %p515 = scmp.le.s32.totalorder 1, %s42
      %p516 = scmp.lt.s32.totalorder %s42, 3
      %p517 = pnand %p515, %p516
      %p518 = pneg %p517
      // Predicated region
      $region9: #{deep_prior_deformer.3} parent=5 // pred_check
        _
      $region10: #{deep_prior_deformer.3} parent=5 // pred_check_branch
        %520 = sbr.rel (%p517) target = $region12
      $region11: #{deep_prior_deformer.3} parent=5 // pred_region
        %s521 = ssub.s32 %s42, 1
        // Predicated region
        $region13: #{deep_prior_deformer.3} parent=11 // pred_check
          %p522 = pneg %p187
        $region14: #{deep_prior_deformer.3} parent=11 // pred_check_branch
          %524 = sbr.rel (%p522) target = $region16
        $region15: #{deep_prior_deformer.3} parent=11 // pred_region
          _
        $region16: #{deep_prior_deformer.3} parent=11 // pred_fallthru
          _
        // Predicated region
        $region17: #{deep_prior_deformer.3} parent=11 // pred_check
          %p525 = pneg %p208
        $region18: #{deep_prior_deformer.3} parent=11 // pred_check_branch
          %527 = sbr.rel (%p525) target = $region20
        $region19: #{deep_prior_deformer.3} parent=11 // pred_region
          _
        $region20: #{deep_prior_deformer.3} parent=11 // pred_fallthru
          _
        // Predicated region
        $region21: #{deep_prior_deformer.3} parent=11 // pred_check
          %p528 = pneg %p229
        $region22: #{deep_prior_deformer.3} parent=11 // pred_check_branch
          %530 = sbr.rel (%p528) target = $region24
        $region23: #{deep_prior_deformer.3} parent=11 // pred_region
          _
        $region24: #{deep_prior_deformer.3} parent=11 // pred_fallthru
          _
        // Predicated region
        $region25: #{deep_prior_deformer.3} parent=11 // pred_check
          %p531 = pneg %p306
        $region26: #{deep_prior_deformer.3} parent=11 // pred_check_branch
          %533 = sbr.rel (%p531) target = $region28
        $region27: #{deep_prior_deformer.3} parent=11 // pred_region
          _
        $region28: #{deep_prior_deformer.3} parent=11 // pred_fallthru
          _
        // Predicated region
        $region29: #{deep_prior_deformer.3} parent=11 // pred_check
          %p534 = pneg %p327
        $region30: #{deep_prior_deformer.3} parent=11 // pred_check_branch
          %536 = sbr.rel (%p534) target = $region32
        $region31: #{deep_prior_deformer.3} parent=11 // pred_region
          _
        $region32: #{deep_prior_deformer.3} parent=11 // pred_fallthru
          _
        // Predicated region
        $region33: #{deep_prior_deformer.3} parent=11 // pred_check
          %p537 = pneg %p348
        $region34: #{deep_prior_deformer.3} parent=11 // pred_check_branch
          %539 = sbr.rel (%p537) target = $region36
        $region35: #{deep_prior_deformer.3} parent=11 // pred_region
          _
        $region36: #{deep_prior_deformer.3} parent=11 // pred_fallthru
          _
        // Predicated region
        $region37: #{deep_prior_deformer.3} parent=11 // pred_check
          %p540 = pneg %p369
        $region38: #{deep_prior_deformer.3} parent=11 // pred_check_branch
          %542 = sbr.rel (%p540) target = $region40
        $region39: #{deep_prior_deformer.3} parent=11 // pred_region
          _
        $region40: #{deep_prior_deformer.3} parent=11 // pred_fallthru
          _
      $region12: #{deep_prior_deformer.3} parent=5 // pred_fallthru
        _
      %p543 = scmp.lt.s32.totalorder %s42, 2
      // Predicated region
      $region41: #{deep_prior_deformer.3} parent=5 // pred_check
        %p544 = pneg %p543
      $region42: #{deep_prior_deformer.3} parent=5 // pred_check_branch
        %546 = sbr.rel (%p544) target = $region44
      $region43: #{deep_prior_deformer.3} parent=5 // pred_region
        // Predicated region
        $region45: #{deep_prior_deformer.3} parent=43 // pred_check
          %p547 = pneg %p78
        $region46: #{deep_prior_deformer.3} parent=43 // pred_check_branch
          %549 = sbr.rel (%p547) target = $region48
        $region47: #{deep_prior_deformer.3} parent=43 // pred_region
          %s550 = sld [smem:[#allocation4 + %s49]]
          %s551 = sadd.s32 %s550, %s50
          %s552 = smul.u32 2, %s551
          %p553 = scmp.lt.s32.totalorder %s552, 3
          %s554 = scalar_select %p553, %s552, 3
          %s555 = smul.addr %s554, 2
          %s556 = smul.addr %s555, 4
          %s557 = scalar_lea.vmem %s2, %s556
          %s558 = sld [smem:[#allocation4 + %s49]]
          %s559 = sadd.s32 %s558, %s50
          %s560 = smul.u32 2, %s559
        $region48: #{deep_prior_deformer.3} parent=43 // pred_fallthru
          _
        // Predicated region
        $region49: #{deep_prior_deformer.3} parent=43 // pred_check
          %p561 = pneg %p106
        $region50: #{deep_prior_deformer.3} parent=43 // pred_check_branch
          %563 = sbr.rel (%p561) target = $region52
        $region51: #{deep_prior_deformer.3} parent=43 // pred_region
          %s564 = sld [smem:[#allocation4 + %s49]]
          %s565 = smul.u32 4, %s564
          %p566 = scmp.lt.s32.totalorder %s565, 7
          %s567 = scalar_select %p566, %s565, 7
          %s568 = smul.addr %s567, 4
          %s569 = scalar_lea.vmem %s3, %s568
          %s570 = sld [smem:[#allocation4 + %s49]]
          %s571 = smul.u32 4, %s570
        $region52: #{deep_prior_deformer.3} parent=43 // pred_fallthru
          _
        // Predicated region
        $region53: #{deep_prior_deformer.3} parent=43 // pred_check
          %p572 = pneg %p132
        $region54: #{deep_prior_deformer.3} parent=43 // pred_check_branch
          %574 = sbr.rel (%p572) target = $region56
        $region55: #{deep_prior_deformer.3} parent=43 // pred_region
          %s575 = smul.u32 4, %s49
          %p576 = scmp.lt.s32.totalorder %s575, 7
          %s577 = scalar_select %p576, %s575, 7
          %s578 = smul.addr %s577, 4
          %s579 = scalar_lea.vmem %s4, %s578
          %s580 = smul.u32 4, %s49
        $region56: #{deep_prior_deformer.3} parent=43 // pred_fallthru
          _
        // Predicated region
        $region57: #{deep_prior_deformer.3} parent=43 // pred_check
          %p581 = pneg %p160
        $region58: #{deep_prior_deformer.3} parent=43 // pred_check_branch
          %583 = sbr.rel (%p581) target = $region60
        $region59: #{deep_prior_deformer.3} parent=43 // pred_region
          %s584 = sld [smem:[#allocation4 + %s49]]
          %p585 = scmp.lt.s32.totalorder %s584, 1
          %s586 = scalar_select %p585, %s584, 1
          %s587 = smul.addr %s586, 3
          %s588 = scalar_lea.vmem %s5, %s587
          %s589 = sld [smem:[#allocation4 + %s49]]
        $region60: #{deep_prior_deformer.3} parent=43 // pred_fallthru
          _
        // Predicated region
        $region61: #{deep_prior_deformer.3} parent=43 // pred_check
          %p590 = pneg %p251
        $region62: #{deep_prior_deformer.3} parent=43 // pred_check_branch
          %592 = sbr.rel (%p590) target = $region64
        $region63: #{deep_prior_deformer.3} parent=43 // pred_region
          %s593 = sld [smem:[#allocation5 + %s49]]
          %p594 = scmp.lt.s32.totalorder %s593, 5
          %s595 = scalar_select %p594, %s593, 5
          %s596 = smul.addr %s595, 32
          %s597 = smul.addr %s596, 4
          %s598 = scalar_lea.vmem %s9, %s597
          %s599 = sld [smem:[#allocation5 + %s49]]
        $region64: #{deep_prior_deformer.3} parent=43 // pred_fallthru
          _
        // Predicated region
        $region65: #{deep_prior_deformer.3} parent=43 // pred_check
          %p600 = pneg %p279
        $region66: #{deep_prior_deformer.3} parent=43 // pred_check_branch
          %602 = sbr.rel (%p600) target = $region68
        $region67: #{deep_prior_deformer.3} parent=43 // pred_region
          %s603 = sld [smem:[#allocation5 + %s49]]
          %p604 = scmp.lt.s32.totalorder %s603, 5
          %s605 = scalar_select %p604, %s603, 5
          %s606 = scalar_lea.vmem %s10, %s605
          %s607 = sld [smem:[#allocation5 + %s49]]
        $region68: #{deep_prior_deformer.3} parent=43 // pred_fallthru
          _
        // Predicated region
        $region69: #{deep_prior_deformer.3} parent=43 // pred_check
          %p608 = pneg %p391
        $region70: #{deep_prior_deformer.3} parent=43 // pred_check_branch
          %610 = sbr.rel (%p608) target = $region72
        $region71: #{deep_prior_deformer.3} parent=43 // pred_region
          %s611 = sld [smem:[#allocation5 + %s49]]
          %p612 = scmp.lt.s32.totalorder %s611, 5
          %s613 = scalar_select %p612, %s611, 5
          %s614 = smul.addr %s613, 8
          %s615 = smul.addr %s614, 4
          %s616 = scalar_lea.vmem %s15, %s615
          %s617 = sld [smem:[#allocation5 + %s49]]
        $region72: #{deep_prior_deformer.3} parent=43 // pred_fallthru
          _
        // Predicated region
        $region73: #{deep_prior_deformer.3} parent=43 // pred_check
          %p618 = pneg %p419
        $region74: #{deep_prior_deformer.3} parent=43 // pred_check_branch
          %620 = sbr.rel (%p618) target = $region76
        $region75: #{deep_prior_deformer.3} parent=43 // pred_region
          %s621 = sld [smem:[#allocation5 + %s49]]
          %p622 = scmp.lt.s32.totalorder %s621, 5
          %s623 = scalar_select %p622, %s621, 5
          %s624 = scalar_lea.vmem %s16, %s623
          %s625 = sld [smem:[#allocation5 + %s49]]
        $region76: #{deep_prior_deformer.3} parent=43 // pred_fallthru
          _
      $region44: #{deep_prior_deformer.3} parent=5 // pred_fallthru
        _
      %p626 = scmp.le.s32.totalorder 1, %s42
      %p627 = scmp.lt.s32.totalorder %s42, 3
      %p628 = pnand %p626, %p627
      %p629 = pneg %p628
      // Predicated region
      $region77: #{deep_prior_deformer.3} parent=5 // pred_check
        _
      $region78: #{deep_prior_deformer.3} parent=5 // pred_check_branch
        %631 = sbr.rel (%p628) target = $region80
      $region79: #{deep_prior_deformer.3} parent=5 // pred_region
        %s632 = ssub.s32 %s42, 1
        %s633 = sld [smem:[#allocation4 + %s51]]
        %s634 = sadd.s32 %s633, %s52
        %s635 = smul.u32 2, %s634
        %p636 = scmp.lt.s32.totalorder %s635, 3
        %s637 = scalar_select %p636, %s635, 3
        %s638 = smul.addr %s637, 2
        %s639 = smul.addr %s638, 4
        %s640 = scalar_lea.vmem %s2, %s639
        %p641 = pneg %p84
        %p642 = pneg %p81
        %s643 = sld [smem:[#allocation4 + %s51]]
        %s644 = smul.u32 4, %s643
        %p645 = scmp.lt.s32.totalorder %s644, 7
        %s646 = scalar_select %p645, %s644, 7
        %s647 = smul.addr %s646, 4
        %s648 = scalar_lea.vmem %s3, %s647
        %p649 = pneg %p112
        %p650 = pneg %p109
        %s651 = smul.u32 4, %s51
        %p652 = scmp.lt.s32.totalorder %s651, 7
        %s653 = scalar_select %p652, %s651, 7
        %s654 = smul.addr %s653, 4
        %s655 = scalar_lea.vmem %s4, %s654
        %p656 = pneg %p138
        %p657 = pneg %p135
        %s658 = sld [smem:[#allocation4 + %s51]]
        %p659 = scmp.lt.s32.totalorder %s658, 1
        %s660 = scalar_select %p659, %s658, 1
        %s661 = smul.addr %s660, 3
        %s662 = scalar_lea.vmem %s5, %s661
        %p663 = pneg %p166
        %p664 = pneg %p163
        %p665 = pneg %p187
        %p666 = pneg %p184
        %p667 = pneg %p208
        %p668 = pneg %p205
        %p669 = pneg %p229
        %p670 = pneg %p226
        %s671 = sld [smem:[#allocation5 + %s51]]
        %p672 = scmp.lt.s32.totalorder %s671, 5
        %s673 = scalar_select %p672, %s671, 5
        %s674 = smul.addr %s673, 32
        %s675 = smul.addr %s674, 4
        %s676 = scalar_lea.vmem %s9, %s675
        %p677 = pneg %p257
        %p678 = pneg %p254
        %s679 = sld [smem:[#allocation5 + %s51]]
        %p680 = scmp.lt.s32.totalorder %s679, 5
        %s681 = scalar_select %p680, %s679, 5
        %s682 = scalar_lea.vmem %s10, %s681
        %p683 = pneg %p285
        %p684 = pneg %p282
        %p685 = pneg %p306
        %p686 = pneg %p303
        %p687 = pneg %p327
        %p688 = pneg %p324
        %p689 = pneg %p348
        %p690 = pneg %p345
        %p691 = pneg %p369
        %p692 = pneg %p366
        %s693 = sld [smem:[#allocation5 + %s51]]
        %p694 = scmp.lt.s32.totalorder %s693, 5
        %s695 = scalar_select %p694, %s693, 5
        %s696 = smul.addr %s695, 8
        %s697 = smul.addr %s696, 4
        %s698 = scalar_lea.vmem %s15, %s697
        %p699 = pneg %p397
        %p700 = pneg %p394
        %s701 = sld [smem:[#allocation5 + %s51]]
        %p702 = scmp.lt.s32.totalorder %s701, 5
        %s703 = scalar_select %p702, %s701, 5
        %s704 = scalar_lea.vmem %s16, %s703
        %p705 = pneg %p425
        %p706 = pneg %p422
        %p707 = pneg %p453
        %p708 = pneg %p450
        %s709 = sand.u32 %s440, 1
        %s710 = scalar_lea.sflag [#allocation7], %s709
        %s711 = sand.u32 %s440, 1
        %s712 = smul.addr %s711, 8
        %s713 = scalar_lea.vmem [#allocation6], %s712
        %p714 = pneg %p481
        %p715 = pneg %p478
        %s716 = sadd.s32 %s51, %s52
        %s717 = smul.u32 2, %s716
        %p718 = scmp.lt.s32.totalorder %s717, 3
        %s719 = scalar_select %p718, %s717, 3
        %s720 = smul.addr %s719, 2
        %s721 = smul.addr %s720, 8
        %s722 = scalar_lea.vmem %s18, %s721
        %p723 = pneg %p507
        %p724 = pneg %p504
        %s725 = smul.u32 4, %s51
        %p726 = scmp.lt.s32.totalorder %s725, 7
        %s727 = scalar_select %p726, %s725, 7
        %s728 = smul.addr %s727, 8
        %s729 = scalar_lea.vmem %s19, %s728
        %s730 = sld [smem:[#allocation4 + %s51]]
        %s731 = sadd.s32 %s730, %s52
        %s732 = smul.u32 2, %s731
        %p733 = scmp.lt.s32.totalorder %s732, 3
        %s734 = scalar_select %p733, %s732, 3
        %s735 = smul.addr %s734, 2
        %s736 = smul.addr %s735, 4
        %s737 = scalar_lea.vmem %s2, %s736
        %s738 = sld [smem:[#allocation4 + %s51]]
        %s739 = sadd.s32 %s738, %s52
        %s740 = smul.u32 2, %s739
        %s741 = sld [smem:[#allocation4 + %s51]]
        %s742 = smul.u32 4, %s741
        %p743 = scmp.lt.s32.totalorder %s742, 7
        %s744 = scalar_select %p743, %s742, 7
        %s745 = smul.addr %s744, 4
        %s746 = scalar_lea.vmem %s3, %s745
        %s747 = sld [smem:[#allocation4 + %s51]]
        %s748 = smul.u32 4, %s747
        %s749 = smul.u32 4, %s51
        %p750 = scmp.lt.s32.totalorder %s749, 7
        %s751 = scalar_select %p750, %s749, 7
        %s752 = smul.addr %s751, 4
        %s753 = scalar_lea.vmem %s4, %s752
        %s754 = smul.u32 4, %s51
        %s755 = sld [smem:[#allocation4 + %s51]]
        %p756 = scmp.lt.s32.totalorder %s755, 1
        %s757 = scalar_select %p756, %s755, 1
        %s758 = smul.addr %s757, 3
        %s759 = scalar_lea.vmem %s5, %s758
        %s760 = sld [smem:[#allocation4 + %s51]]
        %s761 = sld [smem:[#allocation5 + %s51]]
        %p762 = scmp.lt.s32.totalorder %s761, 5
        %s763 = scalar_select %p762, %s761, 5
        %s764 = smul.addr %s763, 32
        %s765 = smul.addr %s764, 4
        %s766 = scalar_lea.vmem %s9, %s765
        %s767 = sld [smem:[#allocation5 + %s51]]
        %s768 = sld [smem:[#allocation5 + %s51]]
        %p769 = scmp.lt.s32.totalorder %s768, 5
        %s770 = scalar_select %p769, %s768, 5
        %s771 = scalar_lea.vmem %s10, %s770
        %s772 = sld [smem:[#allocation5 + %s51]]
        %s773 = sld [smem:[#allocation5 + %s51]]
        %p774 = scmp.lt.s32.totalorder %s773, 5
        %s775 = scalar_select %p774, %s773, 5
        %s776 = smul.addr %s775, 8
        %s777 = smul.addr %s776, 4
        %s778 = scalar_lea.vmem %s15, %s777
        %s779 = sld [smem:[#allocation5 + %s51]]
        %s780 = sld [smem:[#allocation5 + %s51]]
        %p781 = scmp.lt.s32.totalorder %s780, 5
        %s782 = scalar_select %p781, %s780, 5
        %s783 = scalar_lea.vmem %s16, %s782
        %s784 = sld [smem:[#allocation5 + %s51]]
        %s785 = sadd.s32 %s51, %s52
        %s786 = smul.u32 2, %s785
        %s787 = sadd.s32 %s51, %s52
        %s788 = smul.u32 2, %s787
        %p789 = scmp.lt.s32.totalorder %s788, 3
        %s790 = scalar_select %p789, %s788, 3
        %s791 = smul.addr %s790, 2
        %s792 = smul.addr %s791, 8
        %s793 = scalar_lea.vmem %s18, %s792
        %s794 = sadd.s32 %s51, %s52
        %s795 = smul.u32 2, %s794
        %s796 = smul.u32 4, %s51
        %p797 = scmp.lt.s32.totalorder %s796, 7
        %s798 = scalar_select %p797, %s796, 7
        %s799 = smul.addr %s798, 8
        %s800 = scalar_lea.vmem %s19, %s799
        %s801 = smul.u32 4, %s51
        %p803 = scmp.eq.s32.totalorder %s52, 0
        // Predicated region
        $region81: #{deep_prior_deformer.3} parent=79 // pred_check
          %p804 = pneg %p803
        $region82: #{deep_prior_deformer.3} parent=79 // pred_check_branch
          %806 = sbr.rel (%p804) target = $region84
        $region83: #{deep_prior_deformer.3} parent=79 // pred_region
          %v807 = vld [vmem:[%s746] sm:$0xf]
          %v808 = vld [vmem:[%s746 + $0x4] sm:$0xf]
          %v809 = vld [vmem:[%s746 + $0x8] sm:$0xf]
          %v810 = vld [vmem:[%s746 + $0xc] sm:$0xf]
          %v811 = vld [vmem:[%s11] sm:$0xf]
          %v812 = vld [vmem:[%s11 + $0x4] sm:$0xf]
          %v813 = vld [vmem:[%s11 + $0x8] sm:$0xf]
          %v814 = vld [vmem:[%s11 + $0xc] sm:$0xf]
          %v815 = vld [vmem:[%s11 + $0x10] sm:$0xf]
          %v816 = vld [vmem:[%s11 + $0x14] sm:$0xf]
          %v817 = vld [vmem:[%s11 + $0x18] sm:$0xf]
          %v818 = vld [vmem:[%s11 + $0x1c] sm:$0xf]
          %v819 = vld [vmem:[%s11 + $0x20] sm:$0xf]
          %v820 = vld [vmem:[%s11 + $0x24] sm:$0xf]
          %v821 = vld [vmem:[%s11 + $0x28] sm:$0xf]
          %v822 = vld [vmem:[%s11 + $0x2c] sm:$0xf]
          %v823 = vld [vmem:[%s11 + $0x30] sm:$0xf]
          %v824 = vld [vmem:[%s11 + $0x34] sm:$0xf]
          %v825 = vld [vmem:[%s11 + $0x38] sm:$0xf]
          %v826 = vld [vmem:[%s11 + $0x3c] sm:$0xf]
          %v827 = vld [vmem:[%s12] sm:$0x1]
          %v829 = vperm.slane %v827, 0
          %v835 = vunpack.c.l.b16 %v807
          %v836 = vunpack.c.l.b16 %v808
          %v837 = vunpack.c.l.b16 %v809
          %v838 = vunpack.c.l.b16 %v810
          %v839 = vpack.c.b16 %v836, %v835
          %v840 = vpack.c.b16 %v838, %v837
          %v859 = vunpack.c.l.b16 %v811
          %v860 = vunpack.c.l.b16 %v812
          %v861 = vunpack.c.l.b16 %v813
          %v862 = vunpack.c.l.b16 %v814
          %v863 = vunpack.c.l.b16 %v815
          %v864 = vunpack.c.l.b16 %v816
          %v865 = vunpack.c.l.b16 %v817
          %v866 = vunpack.c.l.b16 %v818
          %v867 = vunpack.c.l.b16 %v819
          %v868 = vunpack.c.l.b16 %v820
          %v869 = vunpack.c.l.b16 %v821
          %v870 = vunpack.c.l.b16 %v822
          %v871 = vunpack.c.l.b16 %v823
          %v872 = vunpack.c.l.b16 %v824
          %v873 = vunpack.c.l.b16 %v825
          %v874 = vunpack.c.l.b16 %v826
          %v875 = vpack.c.b16 %v860, %v859
          %v876 = vpack.c.b16 %v862, %v861
          %v877 = vpack.c.b16 %v864, %v863
          %v878 = vpack.c.b16 %v866, %v865
          %v879 = vpack.c.b16 %v868, %v867
          %v880 = vpack.c.b16 %v870, %v869
          %v881 = vpack.c.b16 %v872, %v871
          %v882 = vpack.c.b16 %v874, %v873
          %891 = vmatpush.bf16.msra.mxu0 %v882
          %892 = vmatpush.bf16.msra.mxu0 %v881
          %893 = vmatpush.bf16.msra.mxu0 %v880
          %894 = vmatpush.bf16.msra.mxu0 %v879
          %895 = vmatpush.bf16.msra.mxu0 %v878
          %896 = vmatpush.bf16.msra.mxu0 %v877
          %897 = vmatpush.bf16.msra.mxu0 %v876
          %898 = vmatpush.bf16.msra.mxu0 %v875
          %899 = vmatmul.bf16.gmra.mxu0 %v839
          %v900 = vpop.f32.mrf.mxu0
          %v901 = vadd.f32 %v829, %v900
          %v902 = vpop.f32.mrf.mxu0
          %v903 = vadd.f32 %v829, %v902
          %904 = vmatmul.bf16.gmra.mxu0 %v840
          %v905 = vpop.f32.mrf.mxu0
          %v906 = vadd.f32 %v829, %v905
          %v907 = vpop.f32.mrf.mxu0
          %v908 = vadd.f32 %v829, %v907
          %909 = vdwg.mxu0
          %v910 = vmax.f32 %v901, 0.0
          %v911 = vmax.f32 %v903, 0.0
          %v912 = vmax.f32 %v906, 0.0
          %v913 = vmax.f32 %v908, 0.0
          %v914 = vpack.c.bf16 %v911, %v910
          %v915 = vpack.c.bf16 %v913, %v912
          %v916 = vld [vmem:[%s13] sm:$0xf]
          %v917 = vld [vmem:[%s13 + $0x4] sm:$0xf]
          %v918 = vld [vmem:[%s13 + $0x8] sm:$0xf]
          %v919 = vld [vmem:[%s13 + $0xc] sm:$0xf]
          %v920 = vld [vmem:[%s13 + $0x10] sm:$0xf]
          %v921 = vld [vmem:[%s13 + $0x14] sm:$0xf]
          %v922 = vld [vmem:[%s13 + $0x18] sm:$0xf]
          %v923 = vld [vmem:[%s13 + $0x1c] sm:$0xf]
          %v924 = vld [vmem:[%s14] sm:$0x1]
          %v926 = vperm.slane %v924, 0
          %v936 = vunpack.c.l.b16 %v916
          %v937 = vunpack.c.l.b16 %v917
          %v938 = vunpack.c.l.b16 %v918
          %v939 = vunpack.c.l.b16 %v919
          %v940 = vunpack.c.l.b16 %v920
          %v941 = vunpack.c.l.b16 %v921
          %v942 = vunpack.c.l.b16 %v922
          %v943 = vunpack.c.l.b16 %v923
          %v944 = vpack.c.b16 %v937, %v936
          %v945 = vpack.c.b16 %v939, %v938
          %v946 = vpack.c.b16 %v941, %v940
          %v947 = vpack.c.b16 %v943, %v942
          %vm952 = vcmask 523264
          %v954 = vsel %vm952, %v914, 0
          %v957 = vsel %vm952, %v915, 0
          %959 = vmatpush.bf16.msra.mxu0 0
          %960 = vmatpush.bf16.msra.mxu0 0
          %961 = vmatpush.bf16.msra.mxu0 0
          %962 = vmatpush.bf16.msra.mxu0 0
          %963 = vmatpush.bf16.msra.mxu0 %v947
          %964 = vmatpush.bf16.msra.mxu0 %v946
          %965 = vmatpush.bf16.msra.mxu0 %v945
          %966 = vmatpush.bf16.msra.mxu0 %v944
          %967 = vmatmul.bf16.gmra.mxu0 %v954
          %v968 = vpop.f32.mrf.mxu0
          %v969 = vadd.f32 %v926, %v968
          %v970 = vpop.f32.mrf.mxu0
          %v971 = vadd.f32 %v926, %v970
          %972 = vmatmul.bf16.gmra.mxu0 %v957
          %v973 = vpop.f32.mrf.mxu0
          %v974 = vadd.f32 %v926, %v973
          %v975 = vpop.f32.mrf.mxu0
          %v976 = vadd.f32 %v926, %v975
          %977 = vdwg.mxu0
          %v978 = vmax.f32 %v969, 0.0
          %v979 = vmax.f32 %v971, 0.0
          %v980 = vmax.f32 %v974, 0.0
          %v981 = vmax.f32 %v976, 0.0
          %v982 = vpack.c.bf16 %v979, %v978
          %v983 = vpack.c.bf16 %v981, %v980
          %v984 = vld [vmem:[%s778] sm:$0xf]
          %v985 = vld [vmem:[%s778 + $0x4] sm:$0xf]
          %v986 = vld [vmem:[%s778 + $0x8] sm:$0xf]
          %v987 = vld [vmem:[%s778 + $0xc] sm:$0xf]
          %v988 = vld [vmem:[%s778 + $0x10] sm:$0xf]
          %v989 = vld [vmem:[%s778 + $0x14] sm:$0xf]
          %v990 = vld [vmem:[%s778 + $0x18] sm:$0xf]
          %v991 = vld [vmem:[%s778 + $0x1c] sm:$0xf]
          %v992 = vld [vmem:[%s783] sm:$0x1]
          %v994 = vperm.slane %v992, 0
          %v1004 = vunpack.c.l.b16 %v984
          %v1005 = vunpack.c.l.b16 %v985
          %v1006 = vunpack.c.l.b16 %v986
          %v1007 = vunpack.c.l.b16 %v987
          %v1008 = vunpack.c.l.b16 %v988
          %v1009 = vunpack.c.l.b16 %v989
          %v1010 = vunpack.c.l.b16 %v990
          %v1011 = vunpack.c.l.b16 %v991
          %v1012 = vpack.c.b16 %v1005, %v1004
          %v1013 = vpack.c.b16 %v1007, %v1006
          %v1014 = vpack.c.b16 %v1009, %v1008
          %v1015 = vpack.c.b16 %v1011, %v1010
          %v1021 = vsel %vm952, %v982, 0
          %v1024 = vsel %vm952, %v983, 0
          %1026 = vmatpush.bf16.msra.mxu0 0
          %1027 = vmatpush.bf16.msra.mxu0 0
          %1028 = vmatpush.bf16.msra.mxu0 0
          %1029 = vmatpush.bf16.msra.mxu0 0
          %1030 = vmatpush.bf16.msra.mxu0 %v1015
          %1031 = vmatpush.bf16.msra.mxu0 %v1014
          %1032 = vmatpush.bf16.msra.mxu0 %v1013
          %1033 = vmatpush.bf16.msra.mxu0 %v1012
          %1034 = vmatmul.bf16.gmra.mxu0 %v1021
          %v1035 = vpop.f32.mrf.mxu0
          %v1036 = vadd.f32 %v994, %v1035
          %v1037 = vpop.f32.mrf.mxu0
          %v1038 = vadd.f32 %v994, %v1037
          %1039 = vmatmul.bf16.gmra.mxu0 %v1024
          %v1040 = vpop.f32.mrf.mxu0
          %v1041 = vadd.f32 %v994, %v1040
          %v1042 = vpop.f32.mrf.mxu0
          %v1043 = vadd.f32 %v994, %v1042
          %1044 = vdwg.mxu0
          %1045 = vst [vmem:[%s800] sm:$0xff] %v1036
          %1046 = vst [vmem:[%s800 + $0x8] sm:$0xff] %v1038
          %1047 = vst [vmem:[%s800 + $0x10] sm:$0xff] %v1041
          %1048 = vst [vmem:[%s800 + $0x18] sm:$0xff] %v1043
          %v1049 = vld [vmem:[%s753] sm:$0xf]
          %v1050 = vld [vmem:[%s753 + $0x4] sm:$0xf]
          %v1051 = vld [vmem:[%s753 + $0x8] sm:$0xf]
          %v1052 = vld [vmem:[%s753 + $0xc] sm:$0xf]
          %1053 = vst [vmem:[#allocation2] sm:$0xf] %v1049
          %1054 = vst [vmem:[#allocation2 + $0x8] sm:$0xf] %v1050
          %1055 = vst [vmem:[#allocation2 + $0x10] sm:$0xf] %v1051
          %1056 = vst [vmem:[#allocation2 + $0x18] sm:$0xf] %v1052
          %v1057 = vpack.c.bf16 %v1036, %v1036
          %v1058 = vpack.c.bf16 %v1038, %v1038
          %v1059 = vpack.c.bf16 %v1041, %v1041
          %v1060 = vpack.c.bf16 %v1043, %v1043
          %1061 = vst [vmem:[#allocation2 + $0x4] sm:$0xf] %v1057
          %1062 = vst [vmem:[#allocation2 + $0xc] sm:$0xf] %v1058
          %1063 = vst [vmem:[#allocation2 + $0x14] sm:$0xf] %v1059
          %1064 = vst [vmem:[#allocation2 + $0x1c] sm:$0xf] %v1060
        $region84: #{deep_prior_deformer.3} parent=79 // pred_fallthru
          _
        %v1065 = vld [vmem:[%s737] sm:$0xff]
        %v1066 = vld [vmem:[%s737 + $0x8] sm:$0xff]
        %v1067 = vld [vmem:[%s6] sm:$0xff]
        %v1068 = vld [vmem:[%s6 + $0x8] sm:$0xf]
        %v1069 = vld [vmem:[%s6 + $0xc] sm:$0xff]
        %v1070 = vld [vmem:[%s6 + $0x14] sm:$0xf]
        %v1071 = vld [vmem:[%s6 + $0x18] sm:$0xff]
        %v1072 = vld [vmem:[%s6 + $0x20] sm:$0xf]
        %v1073 = vld [vmem:[%s6 + $0x24] sm:$0xff]
        %v1074 = vld [vmem:[%s6 + $0x2c] sm:$0xf]
        %v1075 = vld [vmem:[%s6 + $0x30] sm:$0xff]
        %v1076 = vld [vmem:[%s6 + $0x38] sm:$0xf]
        %v1077 = vld [vmem:[%s6 + $0x3c] sm:$0xff]
        %v1078 = vld [vmem:[%s6 + $0x44] sm:$0xf]
        %v1079 = vld [vmem:[%s6 + $0x48] sm:$0xff]
        %v1080 = vld [vmem:[%s6 + $0x50] sm:$0xf]
        %v1081 = vld [vmem:[%s6 + $0x54] sm:$0xff]
        %v1082 = vld [vmem:[%s6 + $0x5c] sm:$0xf]
        %v1083 = vld [vmem:[%s6 + $0x60] sm:$0xff]
        %v1084 = vld [vmem:[%s6 + $0x68] sm:$0xf]
        %v1085 = vld [vmem:[%s6 + $0x6c] sm:$0xff]
        %v1086 = vld [vmem:[%s6 + $0x74] sm:$0xf]
        %v1087 = vld [vmem:[%s6 + $0x78] sm:$0xff]
        %v1088 = vld [vmem:[%s6 + $0x80] sm:$0xf]
        %v1089 = vld [vmem:[%s6 + $0x84] sm:$0xff]
        %v1090 = vld [vmem:[%s6 + $0x8c] sm:$0xf]
        %v1091 = vld [vmem:[%s6 + $0x90] sm:$0xff]
        %v1092 = vld [vmem:[%s6 + $0x98] sm:$0xf]
        %v1093 = vld [vmem:[%s6 + $0x9c] sm:$0xff]
        %v1094 = vld [vmem:[%s6 + $0xa4] sm:$0xf]
        %v1095 = vld [vmem:[%s6 + $0xa8] sm:$0xff]
        %v1096 = vld [vmem:[%s6 + $0xb0] sm:$0xf]
        %v1097 = vld [vmem:[%s6 + $0xb4] sm:$0xff]
        %v1098 = vld [vmem:[%s6 + $0xbc] sm:$0xf]
        %v1099 = vld [vmem:[%s6 + $0xc0] sm:$0xff]
        %v1100 = vld [vmem:[%s6 + $0xc8] sm:$0xf]
        %v1101 = vld [vmem:[%s6 + $0xcc] sm:$0xff]
        %v1102 = vld [vmem:[%s6 + $0xd4] sm:$0xf]
        %v1103 = vld [vmem:[%s6 + $0xd8] sm:$0xff]
        %v1104 = vld [vmem:[%s6 + $0xe0] sm:$0xf]
        %v1105 = vld [vmem:[%s6 + $0xe4] sm:$0xff]
        %v1106 = vld [vmem:[%s6 + $0xec] sm:$0xf]
        %v1107 = vld [vmem:[%s6 + $0xf0] sm:$0xff]
        %v1108 = vld [vmem:[%s6 + $0xf8] sm:$0xf]
        %v1109 = vld [vmem:[%s6 + $0xfc] sm:$0xff]
        %v1110 = vld [vmem:[%s6 + $0x104] sm:$0xf]
        %v1111 = vld [vmem:[%s6 + $0x108] sm:$0xff]
        %v1112 = vld [vmem:[%s6 + $0x110] sm:$0xf]
        %v1113 = vld [vmem:[%s6 + $0x114] sm:$0xff]
        %v1114 = vld [vmem:[%s6 + $0x11c] sm:$0xf]
        %v1115 = vld [vmem:[%s6 + $0x120] sm:$0xff]
        %v1116 = vld [vmem:[%s6 + $0x128] sm:$0xf]
        %v1117 = vld [vmem:[%s6 + $0x12c] sm:$0xff]
        %v1118 = vld [vmem:[%s6 + $0x134] sm:$0xf]
        %v1119 = vld [vmem:[%s6 + $0x138] sm:$0xff]
        %v1120 = vld [vmem:[%s6 + $0x140] sm:$0xf]
        %v1121 = vld [vmem:[%s6 + $0x144] sm:$0xff]
        %v1122 = vld [vmem:[%s6 + $0x14c] sm:$0xf]
        %v1123 = vld [vmem:[%s6 + $0x150] sm:$0xff]
        %v1124 = vld [vmem:[%s6 + $0x158] sm:$0xf]
        %v1125 = vld [vmem:[%s6 + $0x15c] sm:$0xff]
        %v1126 = vld [vmem:[%s6 + $0x164] sm:$0xf]
        %v1127 = vld [vmem:[%s6 + $0x168] sm:$0xff]
        %v1128 = vld [vmem:[%s6 + $0x170] sm:$0xf]
        %v1129 = vld [vmem:[%s6 + $0x174] sm:$0xff]
        %v1130 = vld [vmem:[%s6 + $0x17c] sm:$0xf]
        %v1131 = vld [vmem:[%s759] sm:$0x7]
        %v1133 = vperm.slane %v1131, 0
        %v1134 = vperm.slane %v1131, 1
        %v1135 = vperm.slane %v1131, 2
        %v1141 = vunpack.c.l.b16 %v1065
        %v1142 = vunpack.c.h.b16 %v1065
        %v1143 = vunpack.c.l.b16 %v1066
        %v1144 = vunpack.c.h.b16 %v1066
        %v1145 = vpack.c.b16 %v1143, %v1141
        %v1146 = vpack.c.b16 %v1144, %v1142
        %v1213 = vunpack.c.l.b16 %v1067
        %v1214 = vunpack.c.h.b16 %v1067
        %v1215 = vunpack.c.l.b16 %v1068
        %v1216 = vunpack.c.l.b16 %v1069
        %v1217 = vunpack.c.h.b16 %v1069
        %v1218 = vunpack.c.l.b16 %v1070
        %v1219 = vunpack.c.l.b16 %v1071
        %v1220 = vunpack.c.h.b16 %v1071
        %v1221 = vunpack.c.l.b16 %v1072
        %v1222 = vunpack.c.l.b16 %v1073
        %v1223 = vunpack.c.h.b16 %v1073
        %v1224 = vunpack.c.l.b16 %v1074
        %v1225 = vunpack.c.l.b16 %v1075
        %v1226 = vunpack.c.h.b16 %v1075
        %v1227 = vunpack.c.l.b16 %v1076
        %v1228 = vunpack.c.l.b16 %v1077
        %v1229 = vunpack.c.h.b16 %v1077
        %v1230 = vunpack.c.l.b16 %v1078
        %v1231 = vunpack.c.l.b16 %v1079
        %v1232 = vunpack.c.h.b16 %v1079
        %v1233 = vunpack.c.l.b16 %v1080
        %v1234 = vunpack.c.l.b16 %v1081
        %v1235 = vunpack.c.h.b16 %v1081
        %v1236 = vunpack.c.l.b16 %v1082
        %v1237 = vunpack.c.l.b16 %v1083
        %v1238 = vunpack.c.h.b16 %v1083
        %v1239 = vunpack.c.l.b16 %v1084
        %v1240 = vunpack.c.l.b16 %v1085
        %v1241 = vunpack.c.h.b16 %v1085
        %v1242 = vunpack.c.l.b16 %v1086
        %v1243 = vunpack.c.l.b16 %v1087
        %v1244 = vunpack.c.h.b16 %v1087
        %v1245 = vunpack.c.l.b16 %v1088
        %v1246 = vunpack.c.l.b16 %v1089
        %v1247 = vunpack.c.h.b16 %v1089
        %v1248 = vunpack.c.l.b16 %v1090
        %v1249 = vunpack.c.l.b16 %v1091
        %v1250 = vunpack.c.h.b16 %v1091
        %v1251 = vunpack.c.l.b16 %v1092
        %v1252 = vunpack.c.l.b16 %v1093
        %v1253 = vunpack.c.h.b16 %v1093
        %v1254 = vunpack.c.l.b16 %v1094
        %v1255 = vunpack.c.l.b16 %v1095
        %v1256 = vunpack.c.h.b16 %v1095
        %v1257 = vunpack.c.l.b16 %v1096
        %v1258 = vunpack.c.l.b16 %v1097
        %v1259 = vunpack.c.h.b16 %v1097
        %v1260 = vunpack.c.l.b16 %v1098
        %v1261 = vunpack.c.l.b16 %v1099
        %v1262 = vunpack.c.h.b16 %v1099
        %v1263 = vunpack.c.l.b16 %v1100
        %v1264 = vunpack.c.l.b16 %v1101
        %v1265 = vunpack.c.h.b16 %v1101
        %v1266 = vunpack.c.l.b16 %v1102
        %v1267 = vunpack.c.l.b16 %v1103
        %v1268 = vunpack.c.h.b16 %v1103
        %v1269 = vunpack.c.l.b16 %v1104
        %v1270 = vunpack.c.l.b16 %v1105
        %v1271 = vunpack.c.h.b16 %v1105
        %v1272 = vunpack.c.l.b16 %v1106
        %v1273 = vunpack.c.l.b16 %v1107
        %v1274 = vunpack.c.h.b16 %v1107
        %v1275 = vunpack.c.l.b16 %v1108
        %v1276 = vunpack.c.l.b16 %v1109
        %v1277 = vunpack.c.h.b16 %v1109
        %v1278 = vunpack.c.l.b16 %v1110
        %v1279 = vunpack.c.l.b16 %v1111
        %v1280 = vunpack.c.h.b16 %v1111
        %v1281 = vunpack.c.l.b16 %v1112
        %v1282 = vunpack.c.l.b16 %v1113
        %v1283 = vunpack.c.h.b16 %v1113
        %v1284 = vunpack.c.l.b16 %v1114
        %v1285 = vunpack.c.l.b16 %v1115
        %v1286 = vunpack.c.h.b16 %v1115
        %v1287 = vunpack.c.l.b16 %v1116
        %v1288 = vunpack.c.l.b16 %v1117
        %v1289 = vunpack.c.h.b16 %v1117
        %v1290 = vunpack.c.l.b16 %v1118
        %v1291 = vunpack.c.l.b16 %v1119
        %v1292 = vunpack.c.h.b16 %v1119
        %v1293 = vunpack.c.l.b16 %v1120
        %v1294 = vunpack.c.l.b16 %v1121
        %v1295 = vunpack.c.h.b16 %v1121
        %v1296 = vunpack.c.l.b16 %v1122
        %v1297 = vunpack.c.l.b16 %v1123
        %v1298 = vunpack.c.h.b16 %v1123
        %v1299 = vunpack.c.l.b16 %v1124
        %v1300 = vunpack.c.l.b16 %v1125
        %v1301 = vunpack.c.h.b16 %v1125
        %v1302 = vunpack.c.l.b16 %v1126
        %v1303 = vunpack.c.l.b16 %v1127
        %v1304 = vunpack.c.h.b16 %v1127
        %v1305 = vunpack.c.l.b16 %v1128
        %v1306 = vunpack.c.l.b16 %v1129
        %v1307 = vunpack.c.h.b16 %v1129
        %v1308 = vunpack.c.l.b16 %v1130
        %v1309 = vpack.c.b16 %v1216, %v1213
        %v1310 = vpack.c.b16 %v1217, %v1214
        %v1311 = vpack.c.b16 %v1218, %v1215
        %v1312 = vpack.c.b16 %v1222, %v1219
        %v1313 = vpack.c.b16 %v1223, %v1220
        %v1314 = vpack.c.b16 %v1224, %v1221
        %v1315 = vpack.c.b16 %v1228, %v1225
        %v1316 = vpack.c.b16 %v1229, %v1226
        %v1317 = vpack.c.b16 %v1230, %v1227
        %v1318 = vpack.c.b16 %v1234, %v1231
        %v1319 = vpack.c.b16 %v1235, %v1232
        %v1320 = vpack.c.b16 %v1236, %v1233
        %v1321 = vpack.c.b16 %v1240, %v1237
        %v1322 = vpack.c.b16 %v1241, %v1238
        %v1323 = vpack.c.b16 %v1242, %v1239
        %v1324 = vpack.c.b16 %v1246, %v1243
        %v1325 = vpack.c.b16 %v1247, %v1244
        %v1326 = vpack.c.b16 %v1248, %v1245
        %v1327 = vpack.c.b16 %v1252, %v1249
        %v1328 = vpack.c.b16 %v1253, %v1250
        %v1329 = vpack.c.b16 %v1254, %v1251
        %v1330 = vpack.c.b16 %v1258, %v1255
        %v1331 = vpack.c.b16 %v1259, %v1256
        %v1332 = vpack.c.b16 %v1260, %v1257
        %v1333 = vpack.c.b16 %v1264, %v1261
        %v1334 = vpack.c.b16 %v1265, %v1262
        %v1335 = vpack.c.b16 %v1266, %v1263
        %v1336 = vpack.c.b16 %v1270, %v1267
        %v1337 = vpack.c.b16 %v1271, %v1268
        %v1338 = vpack.c.b16 %v1272, %v1269
        %v1339 = vpack.c.b16 %v1276, %v1273
        %v1340 = vpack.c.b16 %v1277, %v1274
        %v1341 = vpack.c.b16 %v1278, %v1275
        %v1342 = vpack.c.b16 %v1282, %v1279
        %v1343 = vpack.c.b16 %v1283, %v1280
        %v1344 = vpack.c.b16 %v1284, %v1281
        %v1345 = vpack.c.b16 %v1288, %v1285
        %v1346 = vpack.c.b16 %v1289, %v1286
        %v1347 = vpack.c.b16 %v1290, %v1287
        %v1348 = vpack.c.b16 %v1294, %v1291
        %v1349 = vpack.c.b16 %v1295, %v1292
        %v1350 = vpack.c.b16 %v1296, %v1293
        %v1351 = vpack.c.b16 %v1300, %v1297
        %v1352 = vpack.c.b16 %v1301, %v1298
        %v1353 = vpack.c.b16 %v1302, %v1299
        %v1354 = vpack.c.b16 %v1306, %v1303
        %v1355 = vpack.c.b16 %v1307, %v1304
        %v1356 = vpack.c.b16 %v1308, %v1305
        %1405 = vmatpush.bf16.msra.mxu0 %v1330
        %1406 = vmatpush.bf16.msra.mxu0 %v1327
        %1407 = vmatpush.bf16.msra.mxu0 %v1324
        %1408 = vmatpush.bf16.msra.mxu0 %v1321
        %1409 = vmatpush.bf16.msra.mxu0 %v1318
        %1410 = vmatpush.bf16.msra.mxu0 %v1315
        %1411 = vmatpush.bf16.msra.mxu0 %v1312
        %1412 = vmatpush.bf16.msra.mxu0 %v1309
        %1413 = vmatmul.bf16.gmra.mxu0 %v1145
        %v1414 = vpop.f32.mrf.mxu0
        %v1415 = vadd.f32 %v1133, %v1414
        %v1416 = vpop.f32.mrf.mxu0
        %v1417 = vadd.f32 %v1133, %v1416
        %1418 = vdwg.mxu0
        %1419 = vmatpush.bf16.msra.mxu0 %v1354
        %1420 = vmatpush.bf16.msra.mxu0 %v1351
        %1421 = vmatpush.bf16.msra.mxu0 %v1348
        %1422 = vmatpush.bf16.msra.mxu0 %v1345
        %1423 = vmatpush.bf16.msra.mxu0 %v1342
        %1424 = vmatpush.bf16.msra.mxu0 %v1339
        %1425 = vmatpush.bf16.msra.mxu0 %v1336
        %1426 = vmatpush.bf16.msra.mxu0 %v1333
        %1427 = vmatmul.bf16.gmra.mxu0 %v1146
        %v1428 = vpop.f32.mrf.mxu0
        %v1429 = vadd.f32 %v1415, %v1428
        %v1430 = vpop.f32.mrf.mxu0
        %v1431 = vadd.f32 %v1417, %v1430
        %1432 = vdwg.mxu0
        %1433 = vmatpush.bf16.msra.mxu0 %v1331
        %1434 = vmatpush.bf16.msra.mxu0 %v1328
        %1435 = vmatpush.bf16.msra.mxu0 %v1325
        %1436 = vmatpush.bf16.msra.mxu0 %v1322
        %1437 = vmatpush.bf16.msra.mxu0 %v1319
        %1438 = vmatpush.bf16.msra.mxu0 %v1316
        %1439 = vmatpush.bf16.msra.mxu0 %v1313
        %1440 = vmatpush.bf16.msra.mxu0 %v1310
        %1441 = vmatmul.bf16.gmra.mxu0 %v1145
        %v1442 = vpop.f32.mrf.mxu0
        %v1443 = vadd.f32 %v1134, %v1442
        %v1444 = vpop.f32.mrf.mxu0
        %v1445 = vadd.f32 %v1134, %v1444
        %1446 = vdwg.mxu0
        %1447 = vmatpush.bf16.msra.mxu0 %v1355
        %1448 = vmatpush.bf16.msra.mxu0 %v1352
        %1449 = vmatpush.bf16.msra.mxu0 %v1349
        %1450 = vmatpush.bf16.msra.mxu0 %v1346
        %1451 = vmatpush.bf16.msra.mxu0 %v1343
        %1452 = vmatpush.bf16.msra.mxu0 %v1340
        %1453 = vmatpush.bf16.msra.mxu0 %v1337
        %1454 = vmatpush.bf16.msra.mxu0 %v1334
        %1455 = vmatmul.bf16.gmra.mxu0 %v1146
        %v1456 = vpop.f32.mrf.mxu0
        %v1457 = vadd.f32 %v1443, %v1456
        %v1458 = vpop.f32.mrf.mxu0
        %v1459 = vadd.f32 %v1445, %v1458
        %1460 = vdwg.mxu0
        %1461 = vmatpush.bf16.msra.mxu0 %v1332
        %1462 = vmatpush.bf16.msra.mxu0 %v1329
        %1463 = vmatpush.bf16.msra.mxu0 %v1326
        %1464 = vmatpush.bf16.msra.mxu0 %v1323
        %1465 = vmatpush.bf16.msra.mxu0 %v1320
        %1466 = vmatpush.bf16.msra.mxu0 %v1317
        %1467 = vmatpush.bf16.msra.mxu0 %v1314
        %1468 = vmatpush.bf16.msra.mxu0 %v1311
        %1469 = vmatmul.bf16.gmra.mxu0 %v1145
        %v1470 = vpop.f32.mrf.mxu0
        %v1471 = vadd.f32 %v1135, %v1470
        %v1472 = vpop.f32.mrf.mxu0
        %v1473 = vadd.f32 %v1135, %v1472
        %1474 = vdwg.mxu0
        %1475 = vmatpush.bf16.msra.mxu0 %v1356
        %1476 = vmatpush.bf16.msra.mxu0 %v1353
        %1477 = vmatpush.bf16.msra.mxu0 %v1350
        %1478 = vmatpush.bf16.msra.mxu0 %v1347
        %1479 = vmatpush.bf16.msra.mxu0 %v1344
        %1480 = vmatpush.bf16.msra.mxu0 %v1341
        %1481 = vmatpush.bf16.msra.mxu0 %v1338
        %1482 = vmatpush.bf16.msra.mxu0 %v1335
        %1483 = vmatmul.bf16.gmra.mxu0 %v1146
        %v1484 = vpop.f32.mrf.mxu0
        %v1485 = vadd.f32 %v1471, %v1484
        %v1486 = vpop.f32.mrf.mxu0
        %v1487 = vadd.f32 %v1473, %v1486
        %1488 = vdwg.mxu0
        %v1489 = vmax.f32 %v1429, 0.0
        %v1490 = vmax.f32 %v1457, 0.0
        %v1491 = vmax.f32 %v1485, 0.0
        %v1492 = vmax.f32 %v1431, 0.0
        %v1493 = vmax.f32 %v1459, 0.0
        %v1494 = vmax.f32 %v1487, 0.0
        %v1495 = vpack.c.bf16 %v1492, %v1489
        %v1496 = vpack.c.bf16 %v1493, %v1490
        %v1497 = vpack.c.bf16 %v1494, %v1491
        %v1498 = vld [vmem:[%s7] sm:$0xff]
        %v1499 = vld [vmem:[%s7 + $0x8] sm:$0xff]
        %v1500 = vld [vmem:[%s7 + $0x10] sm:$0xff]
        %v1501 = vld [vmem:[%s7 + $0x18] sm:$0xff]
        %v1502 = vld [vmem:[%s7 + $0x20] sm:$0xff]
        %v1503 = vld [vmem:[%s7 + $0x28] sm:$0xff]
        %v1504 = vld [vmem:[%s7 + $0x30] sm:$0xff]
        %v1505 = vld [vmem:[%s7 + $0x38] sm:$0xff]
        %v1506 = vld [vmem:[%s7 + $0x40] sm:$0xff]
        %v1507 = vld [vmem:[%s7 + $0x48] sm:$0xff]
        %v1508 = vld [vmem:[%s7 + $0x50] sm:$0xff]
        %v1509 = vld [vmem:[%s7 + $0x58] sm:$0xff]
        %v1510 = vld [vmem:[%s7 + $0x60] sm:$0xff]
        %v1511 = vld [vmem:[%s7 + $0x68] sm:$0xff]
        %v1512 = vld [vmem:[%s7 + $0x70] sm:$0xff]
        %v1513 = vld [vmem:[%s7 + $0x78] sm:$0xff]
        %v1514 = vld [vmem:[%s7 + $0x80] sm:$0xff]
        %v1515 = vld [vmem:[%s7 + $0x88] sm:$0xff]
        %v1516 = vld [vmem:[%s7 + $0x90] sm:$0xff]
        %v1517 = vld [vmem:[%s7 + $0x98] sm:$0xff]
        %v1518 = vld [vmem:[%s7 + $0xa0] sm:$0xff]
        %v1519 = vld [vmem:[%s7 + $0xa8] sm:$0xff]
        %v1520 = vld [vmem:[%s7 + $0xb0] sm:$0xff]
        %v1521 = vld [vmem:[%s7 + $0xb8] sm:$0xff]
        %v1522 = vld [vmem:[%s7 + $0xc0] sm:$0xff]
        %v1523 = vld [vmem:[%s7 + $0xc8] sm:$0xff]
        %v1524 = vld [vmem:[%s7 + $0xd0] sm:$0xff]
        %v1525 = vld [vmem:[%s7 + $0xd8] sm:$0xff]
        %v1526 = vld [vmem:[%s7 + $0xe0] sm:$0xff]
        %v1527 = vld [vmem:[%s7 + $0xe8] sm:$0xff]
        %v1528 = vld [vmem:[%s7 + $0xf0] sm:$0xff]
        %v1529 = vld [vmem:[%s7 + $0xf8] sm:$0xff]
        %v1530 = vld [vmem:[%s7 + $0x100] sm:$0xff]
        %v1531 = vld [vmem:[%s7 + $0x108] sm:$0xff]
        %v1532 = vld [vmem:[%s7 + $0x110] sm:$0xff]
        %v1533 = vld [vmem:[%s7 + $0x118] sm:$0xff]
        %v1534 = vld [vmem:[%s7 + $0x120] sm:$0xff]
        %v1535 = vld [vmem:[%s7 + $0x128] sm:$0xff]
        %v1536 = vld [vmem:[%s7 + $0x130] sm:$0xff]
        %v1537 = vld [vmem:[%s7 + $0x138] sm:$0xff]
        %v1538 = vld [vmem:[%s7 + $0x140] sm:$0xff]
        %v1539 = vld [vmem:[%s7 + $0x148] sm:$0xff]
        %v1540 = vld [vmem:[%s7 + $0x150] sm:$0xff]
        %v1541 = vld [vmem:[%s7 + $0x158] sm:$0xff]
        %v1542 = vld [vmem:[%s7 + $0x160] sm:$0xff]
        %v1543 = vld [vmem:[%s7 + $0x168] sm:$0xff]
        %v1544 = vld [vmem:[%s7 + $0x170] sm:$0xff]
        %v1545 = vld [vmem:[%s7 + $0x178] sm:$0xff]
        %v1546 = vld [vmem:[%s8] sm:$0x3]
        %v1548 = vperm.slane %v1546, 0
        %v1549 = vperm.slane %v1546, 1
        %v1600 = vunpack.c.l.b16 %v1498
        %v1601 = vunpack.c.h.b16 %v1498
        %v1602 = vunpack.c.l.b16 %v1499
        %v1603 = vunpack.c.h.b16 %v1499
        %v1604 = vunpack.c.l.b16 %v1500
        %v1605 = vunpack.c.h.b16 %v1500
        %v1606 = vunpack.c.l.b16 %v1501
        %v1607 = vunpack.c.h.b16 %v1501
        %v1608 = vunpack.c.l.b16 %v1502
        %v1609 = vunpack.c.h.b16 %v1502
        %v1610 = vunpack.c.l.b16 %v1503
        %v1611 = vunpack.c.h.b16 %v1503
        %v1612 = vunpack.c.l.b16 %v1504
        %v1613 = vunpack.c.h.b16 %v1504
        %v1614 = vunpack.c.l.b16 %v1505
        %v1615 = vunpack.c.h.b16 %v1505
        %v1616 = vunpack.c.l.b16 %v1506
        %v1617 = vunpack.c.h.b16 %v1506
        %v1618 = vunpack.c.l.b16 %v1507
        %v1619 = vunpack.c.h.b16 %v1507
        %v1620 = vunpack.c.l.b16 %v1508
        %v1621 = vunpack.c.h.b16 %v1508
        %v1622 = vunpack.c.l.b16 %v1509
        %v1623 = vunpack.c.h.b16 %v1509
        %v1624 = vunpack.c.l.b16 %v1510
        %v1625 = vunpack.c.h.b16 %v1510
        %v1626 = vunpack.c.l.b16 %v1511
        %v1627 = vunpack.c.h.b16 %v1511
        %v1628 = vunpack.c.l.b16 %v1512
        %v1629 = vunpack.c.h.b16 %v1512
        %v1630 = vunpack.c.l.b16 %v1513
        %v1631 = vunpack.c.h.b16 %v1513
        %v1632 = vunpack.c.l.b16 %v1514
        %v1633 = vunpack.c.h.b16 %v1514
        %v1634 = vunpack.c.l.b16 %v1515
        %v1635 = vunpack.c.h.b16 %v1515
        %v1636 = vunpack.c.l.b16 %v1516
        %v1637 = vunpack.c.h.b16 %v1516
        %v1638 = vunpack.c.l.b16 %v1517
        %v1639 = vunpack.c.h.b16 %v1517
        %v1640 = vunpack.c.l.b16 %v1518
        %v1641 = vunpack.c.h.b16 %v1518
        %v1642 = vunpack.c.l.b16 %v1519
        %v1643 = vunpack.c.h.b16 %v1519
        %v1644 = vunpack.c.l.b16 %v1520
        %v1645 = vunpack.c.h.b16 %v1520
        %v1646 = vunpack.c.l.b16 %v1521
        %v1647 = vunpack.c.h.b16 %v1521
        %v1648 = vunpack.c.l.b16 %v1522
        %v1649 = vunpack.c.h.b16 %v1522
        %v1650 = vunpack.c.l.b16 %v1523
        %v1651 = vunpack.c.h.b16 %v1523
        %v1652 = vunpack.c.l.b16 %v1524
        %v1653 = vunpack.c.h.b16 %v1524
        %v1654 = vunpack.c.l.b16 %v1525
        %v1655 = vunpack.c.h.b16 %v1525
        %v1656 = vunpack.c.l.b16 %v1526
        %v1657 = vunpack.c.h.b16 %v1526
        %v1658 = vunpack.c.l.b16 %v1527
        %v1659 = vunpack.c.h.b16 %v1527
        %v1660 = vunpack.c.l.b16 %v1528
        %v1661 = vunpack.c.h.b16 %v1528
        %v1662 = vunpack.c.l.b16 %v1529
        %v1663 = vunpack.c.h.b16 %v1529
        %v1664 = vunpack.c.l.b16 %v1530
        %v1665 = vunpack.c.h.b16 %v1530
        %v1666 = vunpack.c.l.b16 %v1531
        %v1667 = vunpack.c.h.b16 %v1531
        %v1668 = vunpack.c.l.b16 %v1532
        %v1669 = vunpack.c.h.b16 %v1532
        %v1670 = vunpack.c.l.b16 %v1533
        %v1671 = vunpack.c.h.b16 %v1533
        %v1672 = vunpack.c.l.b16 %v1534
        %v1673 = vunpack.c.h.b16 %v1534
        %v1674 = vunpack.c.l.b16 %v1535
        %v1675 = vunpack.c.h.b16 %v1535
        %v1676 = vunpack.c.l.b16 %v1536
        %v1677 = vunpack.c.h.b16 %v1536
        %v1678 = vunpack.c.l.b16 %v1537
        %v1679 = vunpack.c.h.b16 %v1537
        %v1680 = vunpack.c.l.b16 %v1538
        %v1681 = vunpack.c.h.b16 %v1538
        %v1682 = vunpack.c.l.b16 %v1539
        %v1683 = vunpack.c.h.b16 %v1539
        %v1684 = vunpack.c.l.b16 %v1540
        %v1685 = vunpack.c.h.b16 %v1540
        %v1686 = vunpack.c.l.b16 %v1541
        %v1687 = vunpack.c.h.b16 %v1541
        %v1688 = vunpack.c.l.b16 %v1542
        %v1689 = vunpack.c.h.b16 %v1542
        %v1690 = vunpack.c.l.b16 %v1543
        %v1691 = vunpack.c.h.b16 %v1543
        %v1692 = vunpack.c.l.b16 %v1544
        %v1693 = vunpack.c.h.b16 %v1544
        %v1694 = vunpack.c.l.b16 %v1545
        %v1695 = vunpack.c.h.b16 %v1545
        %v1696 = vpack.c.b16 %v1602, %v1600
        %v1697 = vpack.c.b16 %v1603, %v1601
        %v1698 = vpack.c.b16 %v1606, %v1604
        %v1699 = vpack.c.b16 %v1607, %v1605
        %v1700 = vpack.c.b16 %v1610, %v1608
        %v1701 = vpack.c.b16 %v1611, %v1609
        %v1702 = vpack.c.b16 %v1614, %v1612
        %v1703 = vpack.c.b16 %v1615, %v1613
        %v1704 = vpack.c.b16 %v1618, %v1616
        %v1705 = vpack.c.b16 %v1619, %v1617
        %v1706 = vpack.c.b16 %v1622, %v1620
        %v1707 = vpack.c.b16 %v1623, %v1621
        %v1708 = vpack.c.b16 %v1626, %v1624
        %v1709 = vpack.c.b16 %v1627, %v1625
        %v1710 = vpack.c.b16 %v1630, %v1628
        %v1711 = vpack.c.b16 %v1631, %v1629
        %v1712 = vpack.c.b16 %v1634, %v1632
        %v1713 = vpack.c.b16 %v1635, %v1633
        %v1714 = vpack.c.b16 %v1638, %v1636
        %v1715 = vpack.c.b16 %v1639, %v1637
        %v1716 = vpack.c.b16 %v1642, %v1640
        %v1717 = vpack.c.b16 %v1643, %v1641
        %v1718 = vpack.c.b16 %v1646, %v1644
        %v1719 = vpack.c.b16 %v1647, %v1645
        %v1720 = vpack.c.b16 %v1650, %v1648
        %v1721 = vpack.c.b16 %v1651, %v1649
        %v1722 = vpack.c.b16 %v1654, %v1652
        %v1723 = vpack.c.b16 %v1655, %v1653
        %v1724 = vpack.c.b16 %v1658, %v1656
        %v1725 = vpack.c.b16 %v1659, %v1657
        %v1726 = vpack.c.b16 %v1662, %v1660
        %v1727 = vpack.c.b16 %v1663, %v1661
        %v1728 = vpack.c.b16 %v1666, %v1664
        %v1729 = vpack.c.b16 %v1667, %v1665
        %v1730 = vpack.c.b16 %v1670, %v1668
        %v1731 = vpack.c.b16 %v1671, %v1669
        %v1732 = vpack.c.b16 %v1674, %v1672
        %v1733 = vpack.c.b16 %v1675, %v1673
        %v1734 = vpack.c.b16 %v1678, %v1676
        %v1735 = vpack.c.b16 %v1679, %v1677
        %v1736 = vpack.c.b16 %v1682, %v1680
        %v1737 = vpack.c.b16 %v1683, %v1681
        %v1738 = vpack.c.b16 %v1686, %v1684
        %v1739 = vpack.c.b16 %v1687, %v1685
        %v1740 = vpack.c.b16 %v1690, %v1688
        %v1741 = vpack.c.b16 %v1691, %v1689
        %v1742 = vpack.c.b16 %v1694, %v1692
        %v1743 = vpack.c.b16 %v1695, %v1693
        %1792 = vmatpush.bf16.msra.mxu0 %v1710
        %1793 = vmatpush.bf16.msra.mxu0 %v1708
        %1794 = vmatpush.bf16.msra.mxu0 %v1706
        %1795 = vmatpush.bf16.msra.mxu0 %v1704
        %1796 = vmatpush.bf16.msra.mxu0 %v1702
        %1797 = vmatpush.bf16.msra.mxu0 %v1700
        %1798 = vmatpush.bf16.msra.mxu0 %v1698
        %1799 = vmatpush.bf16.msra.mxu0 %v1696
        %1800 = vmatmul.bf16.gmra.mxu0 %v1495
        %v1801 = vpop.f32.mrf.mxu0
        %v1802 = vadd.f32 %v1548, %v1801
        %v1803 = vpop.f32.mrf.mxu0
        %v1804 = vadd.f32 %v1548, %v1803
        %1805 = vdwg.mxu0
        %1806 = vmatpush.bf16.msra.mxu0 %v1726
        %1807 = vmatpush.bf16.msra.mxu0 %v1724
        %1808 = vmatpush.bf16.msra.mxu0 %v1722
        %1809 = vmatpush.bf16.msra.mxu0 %v1720
        %1810 = vmatpush.bf16.msra.mxu0 %v1718
        %1811 = vmatpush.bf16.msra.mxu0 %v1716
        %1812 = vmatpush.bf16.msra.mxu0 %v1714
        %1813 = vmatpush.bf16.msra.mxu0 %v1712
        %1814 = vmatmul.bf16.gmra.mxu0 %v1496
        %v1815 = vpop.f32.mrf.mxu0
        %v1816 = vadd.f32 %v1802, %v1815
        %v1817 = vpop.f32.mrf.mxu0
        %v1818 = vadd.f32 %v1804, %v1817
        %1819 = vdwg.mxu0
        %1820 = vmatpush.bf16.msra.mxu0 %v1742
        %1821 = vmatpush.bf16.msra.mxu0 %v1740
        %1822 = vmatpush.bf16.msra.mxu0 %v1738
        %1823 = vmatpush.bf16.msra.mxu0 %v1736
        %1824 = vmatpush.bf16.msra.mxu0 %v1734
        %1825 = vmatpush.bf16.msra.mxu0 %v1732
        %1826 = vmatpush.bf16.msra.mxu0 %v1730
        %1827 = vmatpush.bf16.msra.mxu0 %v1728
        %1828 = vmatmul.bf16.gmra.mxu0 %v1497
        %v1829 = vpop.f32.mrf.mxu0
        %v1830 = vadd.f32 %v1816, %v1829
        %v1831 = vpop.f32.mrf.mxu0
        %v1832 = vadd.f32 %v1818, %v1831
        %1833 = vdwg.mxu0
        %1834 = vmatpush.bf16.msra.mxu0 %v1711
        %1835 = vmatpush.bf16.msra.mxu0 %v1709
        %1836 = vmatpush.bf16.msra.mxu0 %v1707
        %1837 = vmatpush.bf16.msra.mxu0 %v1705
        %1838 = vmatpush.bf16.msra.mxu0 %v1703
        %1839 = vmatpush.bf16.msra.mxu0 %v1701
        %1840 = vmatpush.bf16.msra.mxu0 %v1699
        %1841 = vmatpush.bf16.msra.mxu0 %v1697
        %1842 = vmatmul.bf16.gmra.mxu0 %v1495
        %v1843 = vpop.f32.mrf.mxu0
        %v1844 = vadd.f32 %v1549, %v1843
        %v1845 = vpop.f32.mrf.mxu0
        %v1846 = vadd.f32 %v1549, %v1845
        %1847 = vdwg.mxu0
        %1848 = vmatpush.bf16.msra.mxu0 %v1727
        %1849 = vmatpush.bf16.msra.mxu0 %v1725
        %1850 = vmatpush.bf16.msra.mxu0 %v1723
        %1851 = vmatpush.bf16.msra.mxu0 %v1721
        %1852 = vmatpush.bf16.msra.mxu0 %v1719
        %1853 = vmatpush.bf16.msra.mxu0 %v1717
        %1854 = vmatpush.bf16.msra.mxu0 %v1715
        %1855 = vmatpush.bf16.msra.mxu0 %v1713
        %1856 = vmatmul.bf16.gmra.mxu0 %v1496
        %v1857 = vpop.f32.mrf.mxu0
        %v1858 = vadd.f32 %v1844, %v1857
        %v1859 = vpop.f32.mrf.mxu0
        %v1860 = vadd.f32 %v1846, %v1859
        %1861 = vdwg.mxu0
        %1862 = vmatpush.bf16.msra.mxu0 %v1743
        %1863 = vmatpush.bf16.msra.mxu0 %v1741
        %1864 = vmatpush.bf16.msra.mxu0 %v1739
        %1865 = vmatpush.bf16.msra.mxu0 %v1737
        %1866 = vmatpush.bf16.msra.mxu0 %v1735
        %1867 = vmatpush.bf16.msra.mxu0 %v1733
        %1868 = vmatpush.bf16.msra.mxu0 %v1731
        %1869 = vmatpush.bf16.msra.mxu0 %v1729
        %1870 = vmatmul.bf16.gmra.mxu0 %v1497
        %v1871 = vpop.f32.mrf.mxu0
        %v1872 = vadd.f32 %v1858, %v1871
        %v1873 = vpop.f32.mrf.mxu0
        %v1874 = vadd.f32 %v1860, %v1873
        %1875 = vdwg.mxu0
        %v1876 = vmax.f32 %v1830, 0.0
        %v1877 = vmax.f32 %v1872, 0.0
        %v1878 = vmax.f32 %v1832, 0.0
        %v1879 = vmax.f32 %v1874, 0.0
        %v1880 = vpack.c.bf16 %v1878, %v1876
        %v1881 = vpack.c.bf16 %v1879, %v1877
        %v1882 = vld [vmem:[%s766] sm:$0xf]
        %v1883 = vld [vmem:[%s766 + $0x4] sm:$0xf]
        %v1884 = vld [vmem:[%s766 + $0x8] sm:$0xf]
        %v1885 = vld [vmem:[%s766 + $0xc] sm:$0xf]
        %v1886 = vld [vmem:[%s766 + $0x10] sm:$0xf]
        %v1887 = vld [vmem:[%s766 + $0x14] sm:$0xf]
        %v1888 = vld [vmem:[%s766 + $0x18] sm:$0xf]
        %v1889 = vld [vmem:[%s766 + $0x1c] sm:$0xf]
        %v1890 = vld [vmem:[%s766 + $0x20] sm:$0xf]
        %v1891 = vld [vmem:[%s766 + $0x24] sm:$0xf]
        %v1892 = vld [vmem:[%s766 + $0x28] sm:$0xf]
        %v1893 = vld [vmem:[%s766 + $0x2c] sm:$0xf]
        %v1894 = vld [vmem:[%s766 + $0x30] sm:$0xf]
        %v1895 = vld [vmem:[%s766 + $0x34] sm:$0xf]
        %v1896 = vld [vmem:[%s766 + $0x38] sm:$0xf]
        %v1897 = vld [vmem:[%s766 + $0x3c] sm:$0xf]
        %v1898 = vld [vmem:[%s766 + $0x40] sm:$0xf]
        %v1899 = vld [vmem:[%s766 + $0x44] sm:$0xf]
        %v1900 = vld [vmem:[%s766 + $0x48] sm:$0xf]
        %v1901 = vld [vmem:[%s766 + $0x4c] sm:$0xf]
        %v1902 = vld [vmem:[%s766 + $0x50] sm:$0xf]
        %v1903 = vld [vmem:[%s766 + $0x54] sm:$0xf]
        %v1904 = vld [vmem:[%s766 + $0x58] sm:$0xf]
        %v1905 = vld [vmem:[%s766 + $0x5c] sm:$0xf]
        %v1906 = vld [vmem:[%s766 + $0x60] sm:$0xf]
        %v1907 = vld [vmem:[%s766 + $0x64] sm:$0xf]
        %v1908 = vld [vmem:[%s766 + $0x68] sm:$0xf]
        %v1909 = vld [vmem:[%s766 + $0x6c] sm:$0xf]
        %v1910 = vld [vmem:[%s766 + $0x70] sm:$0xf]
        %v1911 = vld [vmem:[%s766 + $0x74] sm:$0xf]
        %v1912 = vld [vmem:[%s766 + $0x78] sm:$0xf]
        %v1913 = vld [vmem:[%s766 + $0x7c] sm:$0xf]
        %v1914 = vld [vmem:[%s771] sm:$0x1]
        %v1916 = vperm.slane %v1914, 0
        %v1950 = vunpack.c.l.b16 %v1882
        %v1951 = vunpack.c.l.b16 %v1883
        %v1952 = vunpack.c.l.b16 %v1884
        %v1953 = vunpack.c.l.b16 %v1885
        %v1954 = vunpack.c.l.b16 %v1886
        %v1955 = vunpack.c.l.b16 %v1887
        %v1956 = vunpack.c.l.b16 %v1888
        %v1957 = vunpack.c.l.b16 %v1889
        %v1958 = vunpack.c.l.b16 %v1890
        %v1959 = vunpack.c.l.b16 %v1891
        %v1960 = vunpack.c.l.b16 %v1892
        %v1961 = vunpack.c.l.b16 %v1893
        %v1962 = vunpack.c.l.b16 %v1894
        %v1963 = vunpack.c.l.b16 %v1895
        %v1964 = vunpack.c.l.b16 %v1896
        %v1965 = vunpack.c.l.b16 %v1897
        %v1966 = vunpack.c.l.b16 %v1898
        %v1967 = vunpack.c.l.b16 %v1899
        %v1968 = vunpack.c.l.b16 %v1900
        %v1969 = vunpack.c.l.b16 %v1901
        %v1970 = vunpack.c.l.b16 %v1902
        %v1971 = vunpack.c.l.b16 %v1903
        %v1972 = vunpack.c.l.b16 %v1904
        %v1973 = vunpack.c.l.b16 %v1905
        %v1974 = vunpack.c.l.b16 %v1906
        %v1975 = vunpack.c.l.b16 %v1907
        %v1976 = vunpack.c.l.b16 %v1908
        %v1977 = vunpack.c.l.b16 %v1909
        %v1978 = vunpack.c.l.b16 %v1910
        %v1979 = vunpack.c.l.b16 %v1911
        %v1980 = vunpack.c.l.b16 %v1912
        %v1981 = vunpack.c.l.b16 %v1913
        %v1982 = vpack.c.b16 %v1951, %v1950
        %v1983 = vpack.c.b16 %v1953, %v1952
        %v1984 = vpack.c.b16 %v1955, %v1954
        %v1985 = vpack.c.b16 %v1957, %v1956
        %v1986 = vpack.c.b16 %v1959, %v1958
        %v1987 = vpack.c.b16 %v1961, %v1960
        %v1988 = vpack.c.b16 %v1963, %v1962
        %v1989 = vpack.c.b16 %v1965, %v1964
        %v1990 = vpack.c.b16 %v1967, %v1966
        %v1991 = vpack.c.b16 %v1969, %v1968
        %v1992 = vpack.c.b16 %v1971, %v1970
        %v1993 = vpack.c.b16 %v1973, %v1972
        %v1994 = vpack.c.b16 %v1975, %v1974
        %v1995 = vpack.c.b16 %v1977, %v1976
        %v1996 = vpack.c.b16 %v1979, %v1978
        %v1997 = vpack.c.b16 %v1981, %v1980
        %2014 = vmatpush.bf16.msra.mxu0 %v1989
        %2015 = vmatpush.bf16.msra.mxu0 %v1988
        %2016 = vmatpush.bf16.msra.mxu0 %v1987
        %2017 = vmatpush.bf16.msra.mxu0 %v1986
        %2018 = vmatpush.bf16.msra.mxu0 %v1985
        %2019 = vmatpush.bf16.msra.mxu0 %v1984
        %2020 = vmatpush.bf16.msra.mxu0 %v1983
        %2021 = vmatpush.bf16.msra.mxu0 %v1982
        %2022 = vmatmul.bf16.gmra.mxu0 %v1880
        %v2023 = vpop.f32.mrf.mxu0
        %v2024 = vadd.f32 %v1916, %v2023
        %v2025 = vpop.f32.mrf.mxu0
        %v2026 = vadd.f32 %v1916, %v2025
        %2027 = vdwg.mxu0
        %2028 = vmatpush.bf16.msra.mxu0 %v1997
        %2029 = vmatpush.bf16.msra.mxu0 %v1996
        %2030 = vmatpush.bf16.msra.mxu0 %v1995
        %2031 = vmatpush.bf16.msra.mxu0 %v1994
        %2032 = vmatpush.bf16.msra.mxu0 %v1993
        %2033 = vmatpush.bf16.msra.mxu0 %v1992
        %2034 = vmatpush.bf16.msra.mxu0 %v1991
        %2035 = vmatpush.bf16.msra.mxu0 %v1990
        %2036 = vmatmul.bf16.gmra.mxu0 %v1881
        %v2037 = vpop.f32.mrf.mxu0
        %v2038 = vadd.f32 %v2024, %v2037
        %v2039 = vpop.f32.mrf.mxu0
        %v2040 = vadd.f32 %v2026, %v2039
        %2041 = vdwg.mxu0
        %v2042 = vpack.c.bf16 %v2038, %v2038
        %v2043 = vpack.c.bf16 %v2040, %v2040
        %vm2044 = vcmask 257024
        %2045 = vst.msk [vmem:[%s713] sm:$0xf] %vm2044, %v2042
        %2046 = vst.msk [vmem:[%s713 + $0x4] sm:$0xf] %vm2044, %v2043
        %vm2047 = vcmask 261120
        %v2048 = vsel %vm2047, %v2038, -inf
        %2049 = vmax.xlane.f32.xlu0 %v2048
        %v2050 = vpop.xlane.xlu0 %2049
        %v2051 = vsel %vm2047, %v2040, -inf
        %2052 = vmax.xlane.f32.xlu0 %v2051
        %v2053 = vpop.xlane.xlu0 %2052
        %v2054 = vsub.f32 %v2038, %v2050
        %v2055 = vsub.f32 %v2040, %v2053
        %v2056 = vmul.f32 %v2054, 1.442695
        %v2057 = vpow.pop %v2056
        %v2058 = vmul.f32 %v2055, 1.442695
        %v2059 = vpow.pop %v2058
        %v2060 = vsel %vm2047, %v2057, 0.0
        %2061 = vadd.xlane.f32.xlu0 %v2060
        %v2062 = vpop.xlane.xlu0 %2061
        %v2063 = vsel %vm2047, %v2059, 0.0
        %2064 = vadd.xlane.f32.xlu0 %v2063
        %v2065 = vpop.xlane.xlu0 %2064
        %v2066 = vrcp.pop %v2062
        %v2067 = vrcp.pop %v2065
        %v2068 = vmul.f32 %v2057, %v2066
        %v2069 = vmul.f32 %v2059, %v2067
        %v2070 = vpack.c.bf16 %v2069, %v2068
        %v2071 = vld [vmem:[#allocation2] sm:$0xff]
        %v2072 = vld [vmem:[#allocation2 + $0x8] sm:$0xff]
        %v2073 = vld [vmem:[#allocation2 + $0x10] sm:$0xff]
        %v2074 = vld [vmem:[#allocation2 + $0x18] sm:$0xff]
        %v2079 = vunpack.c.l.b16 %v2071
        %v2080 = vunpack.c.h.b16 %v2071
        %v2081 = vunpack.c.l.b16 %v2072
        %v2082 = vunpack.c.h.b16 %v2072
        %v2083 = vunpack.c.l.b16 %v2073
        %v2084 = vunpack.c.h.b16 %v2073
        %v2085 = vunpack.c.l.b16 %v2074
        %v2086 = vunpack.c.h.b16 %v2074
        %v2087 = vpack.c.b16 %v2081, %v2079
        %v2088 = vpack.c.b16 %v2082, %v2080
        %v2089 = vpack.c.b16 %v2085, %v2083
        %v2090 = vpack.c.b16 %v2086, %v2084
        %v2096 = vsel %vm2047, %v2070, 0
        %2098 = vmatpush.bf16.msra.mxu0 0
        %2099 = vmatpush.bf16.msra.mxu0 0
        %2100 = vmatpush.bf16.msra.mxu0 0
        %2101 = vmatpush.bf16.msra.mxu0 0
        %2102 = vmatpush.bf16.msra.mxu0 0
        %2103 = vmatpush.bf16.msra.mxu0 0
        %2104 = vmatpush.bf16.msra.mxu0 %v2089
        %2105 = vmatpush.bf16.msra.mxu0 %v2087
        %2106 = vmatmul.bf16.gmra.mxu0 %v2096
        %v2107 = vpop.f32.mrf.mxu0
        %v2108 = vadd.f32 0.0, %v2107
        %v2109 = vpop.f32.mrf.mxu0
        %v2110 = vadd.f32 0.0, %v2109
        %2111 = vdwg.mxu0
        %2112 = vmatpush.bf16.msra.mxu0 0
        %2113 = vmatpush.bf16.msra.mxu0 0
        %2114 = vmatpush.bf16.msra.mxu0 0
        %2115 = vmatpush.bf16.msra.mxu0 0
        %2116 = vmatpush.bf16.msra.mxu0 0
        %2117 = vmatpush.bf16.msra.mxu0 0
        %2118 = vmatpush.bf16.msra.mxu0 %v2090
        %2119 = vmatpush.bf16.msra.mxu0 %v2088
        %2120 = vmatmul.bf16.gmra.mxu0 %v2096
        %v2121 = vpop.f32.mrf.mxu0
        %v2122 = vadd.f32 0.0, %v2121
        %v2123 = vpop.f32.mrf.mxu0
        %v2124 = vadd.f32 0.0, %v2123
        %2125 = vdwg.mxu0
        %2126 = vst [vmem:[%s793] sm:$0xff] %v2108
        %2127 = vst [vmem:[%s793 + $0x8] sm:$0xff] %v2122
        %2128 = vst [vmem:[%s793 + $0x10] sm:$0xff] %v2110
        %2129 = vst [vmem:[%s793 + $0x18] sm:$0xff] %v2124
        %s2130 = sand.u32 %s440, 1
        %s2131 = scalar_lea.sflag [#allocation7], %s2130
        %s2132 = sand.u32 %s440, 1
        %s2133 = smul.addr %s2132, 8
        %s2134 = scalar_lea.vmem [#allocation6], %s2133
        %s2135 = sadd.s32 %s51, %s52
        %s2136 = smul.u32 2, %s2135
        %p2137 = scmp.lt.s32.totalorder %s2136, 3
        %s2138 = scalar_select %p2137, %s2136, 3
        %s2139 = smul.addr %s2138, 2
        %s2140 = smul.addr %s2139, 8
        %s2141 = scalar_lea.vmem %s18, %s2140
        %s2142 = smul.u32 4, %s51
        %p2143 = scmp.lt.s32.totalorder %s2142, 7
        %s2144 = scalar_select %p2143, %s2142, 7
        %s2145 = smul.addr %s2144, 8
        %s2146 = scalar_lea.vmem %s19, %s2145
        // Predicated region
        $region85: #{deep_prior_deformer.3} parent=79 // pred_check
          %p2147 = pneg %p450
        $region86: #{deep_prior_deformer.3} parent=79 // pred_check_branch
          %2149 = sbr.rel (%p2147) target = $region88
        $region87: #{deep_prior_deformer.3} parent=79 // pred_region
          %s2150 = sadd.s32 %s51, %s52
          %s2151 = smul.u32 2, %s2150
          %2153 = vsyncadd %s2131, 0
          %s2154 = smul.addr %s2151, 4
          %s2155 = scalar_lea.hbm %s17, %s2154
          %s2156 = sshll.u32 %s2134, 4
          %s2157 = int_to_ptr.vmem [resolvable:$true] %s2156
          %s2158 = sshll.u32 %s2155, 4
          %s2159 = int_to_ptr.hbm [resolvable:$true] %s2158
          %2164 = dma.vmem_to_hbm [thread:$0]  %s2157, 128, %s2159, %s2131, 64, 64, 4
        $region88: #{deep_prior_deformer.3} parent=79 // pred_fallthru
          _
        // Predicated region
        $region89: #{deep_prior_deformer.3} parent=79 // pred_check
          %p2165 = pneg %p478
        $region90: #{deep_prior_deformer.3} parent=79 // pred_check_branch
          %2167 = sbr.rel (%p2165) target = $region92
        $region91: #{deep_prior_deformer.3} parent=79 // pred_region
          %s2168 = sadd.s32 %s51, %s52
          %s2169 = smul.u32 2, %s2168
        $region92: #{deep_prior_deformer.3} parent=79 // pred_fallthru
          _
        // Predicated region
        $region93: #{deep_prior_deformer.3} parent=79 // pred_check
          %p2170 = pneg %p504
        $region94: #{deep_prior_deformer.3} parent=79 // pred_check_branch
          %2172 = sbr.rel (%p2170) target = $region96
        $region95: #{deep_prior_deformer.3} parent=79 // pred_region
          %s2173 = smul.u32 4, %s51
        $region96: #{deep_prior_deformer.3} parent=79 // pred_fallthru
          _
      $region80: #{deep_prior_deformer.3} parent=5 // pred_fallthru
        _
      %p2174 = scmp.le.s32.totalorder 2, %s42
      // Predicated region
      $region97: #{deep_prior_deformer.3} parent=5 // pred_check
        %p2175 = pneg %p2174
      $region98: #{deep_prior_deformer.3} parent=5 // pred_check_branch
        %2177 = sbr.rel (%p2175) target = $region100
      $region99: #{deep_prior_deformer.3} parent=5 // pred_region
        %s2178 = ssub.s32 %s42, 2
        // Predicated region
        $region101: #{deep_prior_deformer.3} parent=99 // pred_check
          %p2179 = pneg %p456
        $region102: #{deep_prior_deformer.3} parent=99 // pred_check_branch
          %2181 = sbr.rel (%p2179) target = $region104
        $region103: #{deep_prior_deformer.3} parent=99 // pred_region
          %s2182 = sand.u32 %s441, 1
          %s2183 = scalar_lea.sflag [#allocation7], %s2182
          %s2184 = sand.u32 %s441, 1
          %s2185 = smul.addr %s2184, 8
          %s2186 = scalar_lea.vmem [#allocation6], %s2185
          %2188 = dma.done %s2183, 128
        $region104: #{deep_prior_deformer.3} parent=99 // pred_fallthru
          _
        // Predicated region
        $region105: #{deep_prior_deformer.3} parent=99 // pred_check
          %p2189 = pneg %p484
        $region106: #{deep_prior_deformer.3} parent=99 // pred_check_branch
          %2191 = sbr.rel (%p2189) target = $region108
        $region107: #{deep_prior_deformer.3} parent=99 // pred_region
          %s2192 = sadd.s32 %s53, %s54
          %s2193 = smul.u32 2, %s2192
          %p2194 = scmp.lt.s32.totalorder %s2193, 3
          %s2195 = scalar_select %p2194, %s2193, 3
          %s2196 = smul.addr %s2195, 2
          %s2197 = smul.addr %s2196, 8
          %s2198 = scalar_lea.vmem %s18, %s2197
        $region108: #{deep_prior_deformer.3} parent=99 // pred_fallthru
          _
        // Predicated region
        $region109: #{deep_prior_deformer.3} parent=99 // pred_check
          %p2199 = pneg %p510
        $region110: #{deep_prior_deformer.3} parent=99 // pred_check_branch
          %2201 = sbr.rel (%p2199) target = $region112
        $region111: #{deep_prior_deformer.3} parent=99 // pred_region
          %s2202 = smul.u32 4, %s53
          %p2203 = scmp.lt.s32.totalorder %s2202, 7
          %s2204 = scalar_select %p2203, %s2202, 7
          %s2205 = smul.addr %s2204, 8
          %s2206 = scalar_lea.vmem %s19, %s2205
        $region112: #{deep_prior_deformer.3} parent=99 // pred_fallthru
          _
      $region100: #{deep_prior_deformer.3} parent=5 // pred_fallthru
        _
    $region6: #{deep_prior_deformer.3} parent=1 // loop_footer
      %s46 = sadd.s32 1, %s42
    $region7: #{deep_prior_deformer.3} parent=1 // loop_footer_branch
      %41 = sbr.rel target = $region3
    $region8: #{deep_prior_deformer.3} parent=1 // loop_exit
      _
    %2207 = vsyncpa [#allocation7], 1
    %s2208 = scalar_lea.sflag [#allocation7], 1
    %2209 = vsyncpa %s2208, 1

</llo_original>
